<compile_context>
chip_gen: v6e
topology: v6e:2x2x1
jax: 0.10.0
libtpu: 0.0.40
codegen_flags: <defaults>
</compile_context>

<pallas_src>
import functools

import jax
import jax.numpy as jnp
from jax import lax
from jax.experimental import pallas as pl
from jax.experimental.pallas import tpu as pltpu

# ----------------------- small, structure-consistent config -----------------------
B = 2              # batch
T = 8              # description sequence length
H_BERT = 32        # module's hiddenSize (BERT hidden size)
FEAT = 64          # name_liner out_features (stands in for 1024)
LSTM_H = 32        # LSTM hidden per direction (2*LSTM_H == FEAT, as 2*512 == 1024)
NUM_CLASSES = 16   # CLASS_NUM
NUM_HEAD = 2
HEAD_DIM = FEAT // NUM_HEAD
TAU = 16.0
SCALE = TAU / NUM_HEAD      # MultiHead.scale
GAMMA = 0.03125             # MultiHead.norm_scale

_VMEM = pl.BlockSpec(memory_space=pltpu.MemorySpace.VMEM)
_SMEM = pl.BlockSpec(memory_space=pltpu.MemorySpace.SMEM)


# --------------------------- fused ServeNet forward kernel -------------------------
def _servenet_kernel(name_ref, seq_ref, lin_w_ref, lin_b_ref,
                     wih_cat_ref, whh_f_ref, whh_b_ref, b_cat_ref,
                     w12_ref, cls_w_ref, o_ref, z_ref,
                     *, num_head, head_dim, scale, gamma):
    n_b = seq_ref.shape[0]          # batch
    n_t = seq_ref.shape[1]          # time steps
    hh = whh_f_ref.shape[0]         # LSTM hidden per direction

    # -------- name branch: Linear -> ReLU (-> Dropout == identity at eval) --------
    name_feat = jnp.maximum(
        jnp.dot(name_ref[...], lin_w_ref[...], preferred_element_type=jnp.float32)
        + lin_b_ref[...], 0.0)                                         # [B, FEAT]

    # -------- description branch: bidirectional LSTM, final cell states -----------
    # Hoisted input projection for BOTH directions (bias folded in), stored
    # time-major so the recurrence only does the small h @ Whh matmuls:
    #   z[t, b, :] = seq[b, t, :] @ [Wih_f.T | Wih_b.T] + (bih_f+bhh_f | bih_b+bhh_b)
    gates_w = wih_cat_ref[...]                                         # [H, 8*hh]
    b_cat = b_cat_ref[...]                                             # [1, 8*hh]
    for b in range(n_b):                                               # static batch loop
        z_ref[:, b, :] = (jnp.dot(seq_ref[b], gates_w,
                                  preferred_element_type=jnp.float32) + b_cat)

    whh_f = whh_f_ref[...]                                             # [hh, 4*hh]
    whh_b = whh_b_ref[...]                                             # [hh, 4*hh]

    def step(t, carry):
        h_f, c_f, h_b, c_b = carry
        # Forward direction consumes timestep t, backward consumes n_t-1-t;
        # both independent recurrences are interleaved in one iteration.
        z_t = z_ref[t]                                                 # [B, 8*hh]
        z_r = z_ref[n_t - 1 - t]                                       # [B, 8*hh]
        z_f = z_t[:, 0:4 * hh] + jnp.dot(h_f, whh_f,
                                         preferred_element_type=jnp.float32)
        z_b = z_r[:, 4 * hh:8 * hh] + jnp.dot(h_b, whh_b,
                                              preferred_element_type=jnp.float32)

        def cell(z, c):
            sig = jax.nn.sigmoid(z)          # one full-width EUP push
            tnh = jnp.tanh(z)                # one full-width EUP push
            i_g = sig[:, 0 * hh:1 * hh]      # PyTorch gate order: i, f, g, o
            f_g = sig[:, 1 * hh:2 * hh]
            g_g = tnh[:, 2 * hh:3 * hh]
            o_g = sig[:, 3 * hh:4 * hh]
            c_new = f_g * c + i_g * g_g
            h_new = o_g * jnp.tanh(c_new)
            return h_new, c_new

        h_f, c_f = cell(z_f, c_f)
        h_b, c_b = cell(z_b, c_b)
        return (h_f, c_f, h_b, c_b)

    zeros = jnp.zeros((n_b, hh), jnp.float32)
    _, c_fwd, _, c_bwd = lax.fori_loop(0, n_t, step,
                                       (zeros, zeros, zeros, zeros),
                                       unroll=True)
    # hidden = cat((cell[0], cell[1]), dim=1)
    hidden = jnp.concatenate([c_fwd, c_bwd], axis=1)                   # [B, 2*hh] == [B, FEAT]

    # ------------- WeightedSum + MultiHead classifier (single matmul) -------------
    x = name_feat * w12_ref[0] + hidden * w12_ref[1]                   # [B, FEAT]
    w_cls = cls_w_ref[...]                                             # [C, FEAT]

    def headwise_normalize(v, add):
        parts = []
        for hd in range(num_head):                                     # static unroll
            vh = v[:, hd * head_dim:(hd + 1) * head_dim]
            nrm = jnp.sqrt(jnp.sum(vh * vh, axis=-1, keepdims=True))
            parts.append(vh / (nrm + add))
        return jnp.concatenate(parts, axis=1)

    xn = headwise_normalize(x, 1e-8) * scale                           # l2_norm, scale folded in
    wn = headwise_normalize(w_cls, gamma)                              # causal_norm
    # TODO(synk): at real sizes pad NUM_CLASSES up to a multiple of 128 for a
    # lane-dense output store / better MXU N utilization, and slice outside.
    o_ref[...] = lax.dot_general(xn, wn, (((1,), (1,)), ((), ())),
                                 preferred_element_type=jnp.float32)


def servenet_pallas(name_pooled, desc_seq, kp):
    n_b, n_t, _ = desc_seq.shape
    n_cls = kp["mh_weight"].shape[0]
    gate_width = kp["lstm_wih_cat_t"].shape[1]       # 8 * LSTM_H (both directions)
    kernel = functools.partial(_servenet_kernel, num_head=NUM_HEAD,
                               head_dim=HEAD_DIM, scale=SCALE, gamma=GAMMA)
    # TODO(synk): at real ServeNet sizes (T up to 512 BERT tokens, H=768, larger
    # batch) tile the sequence / hoisted projection over T with a grid+BlockSpec
    # (and set CompilerParams(vmem_limit_bytes=...)) — v7x has only 64 MiB VMEM —
    # and add a leading "parallel" batch grid axis to use v7x's two TensorCores.
    return pl.pallas_call(
        kernel,
        out_shape=jax.ShapeDtypeStruct((n_b, n_cls), jnp.float32),
        in_specs=[_VMEM, _VMEM, _VMEM, _VMEM, _VMEM, _VMEM, _VMEM, _VMEM,
                  _SMEM, _VMEM],
        out_specs=_VMEM,
        scratch_shapes=[pltpu.VMEM((n_t, n_b, gate_width), jnp.float32)],
    )(name_pooled, desc_seq,
      kp["lin_w_t"], kp["lin_b_row"],
      kp["lstm_wih_cat_t"], kp["lstm_whh_f_t"], kp["lstm_whh_b_t"],
      kp["lstm_b_cat"], kp["ws_w12"], kp["mh_weight"])


@jax.jit
def servenet_forward(name_pooled, desc_seq, kernel_params):
    # Single fused kernel; all layout prep lives in prepare_kernel_params (one-time).
    return servenet_pallas(name_pooled, desc_seq, kernel_params)


# ----------------------------------- parameters ------------------------------------
def init_raw_params(key):
    """Parameters in the PyTorch layout (used by the pure-JAX reference)."""
    ks = jax.random.split(key, 9)
    p = {}
    # name_liner: nn.Linear(H_BERT -> FEAT): weight [FEAT, H_BERT], bias [FEAT]
    p["lin_w"] = 0.05 * jax.random.normal(ks[0], (FEAT, H_BERT), jnp.float32)
    p["lin_b"] = 0.05 * jax.random.normal(ks[1], (FEAT,), jnp.float32)
    # LSTM (1 layer, bidirectional): per direction weight_ih [4H, H_BERT],
    # weight_hh [4H, H], bias_ih [4H], bias_hh [4H]
    for d, (kw, kr, kb) in zip(("f", "b"),
                               ((ks[2], ks[3], ks[4]), (ks[5], ks[6], ks[7]))):
        p[f"lstm_wih_{d}"] = 0.1 * jax.random.normal(kw, (4 * LSTM_H, H_BERT), jnp.float32)
        p[f"lstm_whh_{d}"] = 0.1 * jax.random.normal(kr, (4 * LSTM_H, LSTM_H), jnp.float32)
        p[f"lstm_bih_{d}"] = 0.1 * jax.random.normal(kb, (4 * LSTM_H,), jnp.float32)
        p[f"lstm_bhh_{d}"] = jnp.zeros((4 * LSTM_H,), jnp.float32)
    # WeightedSum (deterministic init of the two scalar parameters)
    p["ws_w12"] = jnp.array([0.7, 0.3], jnp.float32)
    # MultiHead weight: normal(0, 0.01), shape [CLASS_NUM, FEAT]
    p["mh_weight"] = 0.01 * jax.random.normal(ks[8], (NUM_CLASSES, FEAT), jnp.float32)
    return p


def prepare_kernel_params(p):
    """One-time layout prep (outside jit): pre-transposed / pre-combined weights so
    the per-call jitted wrapper does zero XLA-side layout work."""
    return {
        "lin_w_t": jnp.asarray(p["lin_w"].T),                          # [H, FEAT]
        "lin_b_row": p["lin_b"][None, :],                              # [1, FEAT]
        # concat of both directions' input projections: [H, 8*LSTM_H]
        "lstm_wih_cat_t": jnp.concatenate(
            [p["lstm_wih_f"].T, p["lstm_wih_b"].T], axis=1),
        "lstm_whh_f_t": jnp.asarray(p["lstm_whh_f"].T),                # [LSTM_H, 4*LSTM_H]
        "lstm_whh_b_t": jnp.asarray(p["lstm_whh_b"].T),
        # combined bih+bhh for both directions: [1, 8*LSTM_H]
        "lstm_b_cat": jnp.concatenate(
            [p["lstm_bih_f"] + p["lstm_bhh_f"],
             p["lstm_bih_b"] + p["lstm_bhh_b"]])[None, :],
        "ws_w12": p["ws_w12"],                                         # [2] (SMEM scalars)
        "mh_weight": p["mh_weight"],                                   # [C, FEAT]
    }


# ------------------------------ pure-JAX reference ---------------------------------
def reference_forward(name_pooled, desc_seq, p):
    name_feat = jnp.maximum(name_pooled @ p["lin_w"].T + p["lin_b"], 0.0)

    def run_dir(wih, whh, bias, reverse):
        h = jnp.zeros((B, LSTM_H), jnp.float32)
        c = jnp.zeros((B, LSTM_H), jnp.float32)
        ts = range(T - 1, -1, -1) if reverse else range(T)
        for t in ts:
            z = desc_seq[:, t, :] @ wih.T + h @ whh.T + bias
            i = jax.nn.sigmoid(z[:, 0 * LSTM_H:1 * LSTM_H])
            f = jax.nn.sigmoid(z[:, 1 * LSTM_H:2 * LSTM_H])
            g = jnp.tanh(z[:, 2 * LSTM_H:3 * LSTM_H])
            o = jax.nn.sigmoid(z[:, 3 * LSTM_H:4 * LSTM_H])
            c = f * c + i * g
            h = o * jnp.tanh(c)
        return c

    c_f = run_dir(p["lstm_wih_f"], p["lstm_whh_f"], p["lstm_bih_f"] + p["lstm_bhh_f"], False)
    c_b = run_dir(p["lstm_wih_b"], p["lstm_whh_b"], p["lstm_bih_b"] + p["lstm_bhh_b"], True)
    hidden = jnp.concatenate([c_f, c_b], axis=1)

    x = name_feat * p["ws_w12"][0] + hidden * p["ws_w12"][1]
    acc = jnp.zeros((B, NUM_CLASSES), jnp.float32)
    for h in range(NUM_HEAD):
        lo, hi = h * HEAD_DIM, (h + 1) * HEAD_DIM
        xh, wh = x[:, lo:hi], p["mh_weight"][:, lo:hi]
        xn = xh / (jnp.linalg.norm(xh, axis=1, keepdims=True) + 1e-8)
        wn = wh / (jnp.linalg.norm(wh, axis=1, keepdims=True) + GAMMA)
        acc = acc + (xn * SCALE) @ wn.T
    return acc


if __name__ == "__main__":
    key = jax.random.PRNGKey(0)
    k_name, k_desc, k_params = jax.random.split(key, 3)
    name_pooled = jax.random.normal(k_name, (B, H_BERT), jnp.float32)   # BERT pooled output
    desc_seq = jax.random.normal(k_desc, (B, T, H_BERT), jnp.float32)   # BERT sequence output
    raw_params = init_raw_params(k_params)
    kernel_params = prepare_kernel_params(raw_params)                   # one-time, outside jit

    out = servenet_forward(name_pooled, desc_seq, kernel_params)
    out = jax.block_until_ready(out)
    assert out.shape == (B, NUM_CLASSES), out.shape

    ref = reference_forward(name_pooled, desc_seq, raw_params)
    max_err = float(jnp.max(jnp.abs(out - ref)))
    # NOTE: the bound is dominated by possible f32 matmul default-precision
    # differences between the in-kernel (Mosaic/MXU) dots and the XLA reference
    # dots on TPU, not by the kernel math itself (restructuring contributes ~1e-6).
    assert max_err < 1e-2, f"mismatch vs pure-JAX reference: {max_err}"
    print("KERNEL_OK")
</pallas_src>

<mosaic_0001>
module attributes {stable_mosaic.version = 11 : i64} {
  func.func @_servenet_kernel(%arg0: memref<2x32xf32, #tpu.memory_space<vmem>>, %arg1: memref<2x8x32xf32, #tpu.memory_space<vmem>>, %arg2: memref<32x64xf32, #tpu.memory_space<vmem>>, %arg3: memref<1x64xf32, #tpu.memory_space<vmem>>, %arg4: memref<32x256xf32, #tpu.memory_space<vmem>>, %arg5: memref<32x128xf32, #tpu.memory_space<vmem>>, %arg6: memref<32x128xf32, #tpu.memory_space<vmem>>, %arg7: memref<1x256xf32, #tpu.memory_space<vmem>>, %arg8: memref<2xf32, #tpu.memory_space<smem>>, %arg9: memref<16x64xf32, #tpu.memory_space<vmem>>, %arg10: memref<2x16xf32, #tpu.memory_space<vmem>>, %arg11: memref<8x2x256xf32, #tpu.memory_space<vmem>>) attributes {dimension_semantics = [], scalar_prefetch = 0 : i64, scratch_operands = 1 : i64, tpu.core_type = #tpu.core_type<tc>} {
    %c0 = arith.constant 0 : index
    %c0_0 = arith.constant 0 : index
    %0 = vector.load %arg0[%c0, %c0_0] : memref<2x32xf32, #tpu.memory_space<vmem>>, vector<2x32xf32>
    %c0_1 = arith.constant 0 : index
    %c0_2 = arith.constant 0 : index
    %1 = vector.load %arg2[%c0_1, %c0_2] : memref<32x64xf32, #tpu.memory_space<vmem>>, vector<32x64xf32>
    %cst = arith.constant dense<0.000000e+00> : vector<2x64xf32>
    %2 = tpu.matmul %0, %1, %cst {dimension_numbers = #tpu.dot_dimension_numbers<[1], [0], [0], [1], [0, 0, 1, 1], [], []>} : vector<2x32xf32>, vector<32x64xf32>, vector<2x64xf32> -> vector<2x64xf32>
    %c0_3 = arith.constant 0 : index
    %c0_4 = arith.constant 0 : index
    %3 = vector.load %arg3[%c0_3, %c0_4] : memref<1x64xf32, #tpu.memory_space<vmem>>, vector<1x64xf32>
    %4 = vector.broadcast %3 : vector<1x64xf32> to vector<2x64xf32>
    %5 = arith.addf %2, %4 : vector<2x64xf32>
    %cst_5 = arith.constant 0.000000e+00 : f32
    %6 = vector.broadcast %cst_5 : f32 to vector<2x64xf32>
    %7 = arith.maximumf %5, %6 : vector<2x64xf32>
    %c0_6 = arith.constant 0 : index
    %c0_7 = arith.constant 0 : index
    %8 = vector.load %arg4[%c0_6, %c0_7] : memref<32x256xf32, #tpu.memory_space<vmem>>, vector<32x256xf32>
    %c0_8 = arith.constant 0 : index
    %c0_9 = arith.constant 0 : index
    %9 = vector.load %arg7[%c0_8, %c0_9] : memref<1x256xf32, #tpu.memory_space<vmem>>, vector<1x256xf32>
    %c0_10 = arith.constant 0 : index
    %c0_11 = arith.constant 0 : index
    %c0_12 = arith.constant 0 : index
    %10 = vector.load %arg1[%c0_10, %c0_11, %c0_12] : memref<2x8x32xf32, #tpu.memory_space<vmem>>, vector<1x8x32xf32>
    %11 = vector.shape_cast %10 : vector<1x8x32xf32> to vector<8x32xf32>
    %cst_13 = arith.constant dense<0.000000e+00> : vector<8x256xf32>
    %12 = tpu.matmul %11, %8, %cst_13 {dimension_numbers = #tpu.dot_dimension_numbers<[1], [0], [0], [1], [0, 0, 1, 1], [], []>} : vector<8x32xf32>, vector<32x256xf32>, vector<8x256xf32> -> vector<8x256xf32>
    %13 = vector.broadcast %9 : vector<1x256xf32> to vector<8x256xf32>
    %14 = arith.addf %12, %13 : vector<8x256xf32>
    %c0_14 = arith.constant 0 : index
    %c0_15 = arith.constant 0 : index
    %c0_16 = arith.constant 0 : index
    %15 = vector.load %arg11[%c0_14, %c0_15, %c0_16] : memref<8x2x256xf32, #tpu.memory_space<vmem>>, vector<8x1x256xf32>
    %16 = vector.shape_cast %15 : vector<8x1x256xf32> to vector<8x256xf32>
    %17 = vector.shape_cast %14 : vector<8x256xf32> to vector<8x1x256xf32>
    tpu.vector_store %arg11[%c0_14, %c0_15, %c0_16], %17 {strides = array<i32>} : memref<8x2x256xf32, #tpu.memory_space<vmem>>, vector<8x1x256xf32>,
    %c1 = arith.constant 1 : index
    %c0_17 = arith.constant 0 : index
    %c0_18 = arith.constant 0 : index
    %18 = vector.load %arg1[%c1, %c0_17, %c0_18] : memref<2x8x32xf32, #tpu.memory_space<vmem>>, vector<1x8x32xf32>
    %19 = vector.shape_cast %18 : vector<1x8x32xf32> to vector<8x32xf32>
    %cst_19 = arith.constant dense<0.000000e+00> : vector<8x256xf32>
    %20 = tpu.matmul %19, %8, %cst_19 {dimension_numbers = #tpu.dot_dimension_numbers<[1], [0], [0], [1], [0, 0, 1, 1], [], []>} : vector<8x32xf32>, vector<32x256xf32>, vector<8x256xf32> -> vector<8x256xf32>
    %21 = vector.broadcast %9 : vector<1x256xf32> to vector<8x256xf32>
    %22 = arith.addf %20, %21 : vector<8x256xf32>
    %c0_20 = arith.constant 0 : index
    %c1_21 = arith.constant 1 : index
    %c0_22 = arith.constant 0 : index
    %23 = vector.load %arg11[%c0_20, %c1_21, %c0_22] : memref<8x2x256xf32, #tpu.memory_space<vmem>>, vector<8x1x256xf32>
    %24 = vector.shape_cast %23 : vector<8x1x256xf32> to vector<8x256xf32>
    %25 = vector.shape_cast %22 : vector<8x256xf32> to vector<8x1x256xf32>
    tpu.vector_store %arg11[%c0_20, %c1_21, %c0_22], %25 {strides = array<i32>} : memref<8x2x256xf32, #tpu.memory_space<vmem>>, vector<8x1x256xf32>,
    %c0_23 = arith.constant 0 : index
    %c0_24 = arith.constant 0 : index
    %26 = vector.load %arg5[%c0_23, %c0_24] : memref<32x128xf32, #tpu.memory_space<vmem>>, vector<32x128xf32>
    %c0_25 = arith.constant 0 : index
    %c0_26 = arith.constant 0 : index
    %27 = vector.load %arg6[%c0_25, %c0_26] : memref<32x128xf32, #tpu.memory_space<vmem>>, vector<32x128xf32>
    %cst_27 = arith.constant 0.000000e+00 : f32
    %28 = vector.broadcast %cst_27 : f32 to vector<2x32xf32>
    %c0_i32 = arith.constant 0 : i32
    %29 = arith.index_cast %c0_i32 : i32 to index
    %c0_28 = arith.constant 0 : index
    %c0_29 = arith.constant 0 : index
    %30 = vector.load %arg11[%29, %c0_28, %c0_29] : memref<8x2x256xf32, #tpu.memory_space<vmem>>, vector<1x2x256xf32>
    %31 = vector.shape_cast %30 : vector<1x2x256xf32> to vector<2x256xf32>
    %c7_i32 = arith.constant 7 : i32
    %32 = arith.subi %c7_i32, %c0_i32 : i32
    %33 = arith.index_cast %32 : i32 to index
    %c0_30 = arith.constant 0 : index
    %c0_31 = arith.constant 0 : index
    %34 = vector.load %arg11[%33, %c0_30, %c0_31] : memref<8x2x256xf32, #tpu.memory_space<vmem>>, vector<1x2x256xf32>
    %35 = vector.shape_cast %34 : vector<1x2x256xf32> to vector<2x256xf32>
    %36 = vector.extract_strided_slice %31 {offsets = [0, 0], sizes = [2, 128], strides = [1, 1]} : vector<2x256xf32> to vector<2x128xf32>
    %cst_32 = arith.constant dense<0.000000e+00> : vector<2x128xf32>
    %37 = tpu.matmul %28, %26, %cst_32 {dimension_numbers = #tpu.dot_dimension_numbers<[1], [0], [0], [1], [0, 0, 1, 1], [], []>} : vector<2x32xf32>, vector<32x128xf32>, vector<2x128xf32> -> vector<2x128xf32>
    %38 = arith.addf %36, %37 : vector<2x128xf32>
    %39 = vector.extract_strided_slice %35 {offsets = [0, 128], sizes = [2, 128], strides = [1, 1]} : vector<2x256xf32> to vector<2x128xf32>
    %cst_33 = arith.constant dense<0.000000e+00> : vector<2x128xf32>
    %40 = tpu.matmul %28, %27, %cst_33 {dimension_numbers = #tpu.dot_dimension_numbers<[1], [0], [0], [1], [0, 0, 1, 1], [], []>} : vector<2x32xf32>, vector<32x128xf32>, vector<2x128xf32> -> vector<2x128xf32>
    %41 = arith.addf %39, %40 : vector<2x128xf32>
    %42 = arith.negf %38 : vector<2x128xf32>
    %43 = math.exp %42 : vector<2x128xf32>
    %cst_34 = arith.constant 1.000000e+00 : f32
    %44 = vector.broadcast %cst_34 : f32 to vector<2x128xf32>
    %45 = arith.addf %44, %43 : vector<2x128xf32>
    %46 = arith.divf %44, %45 : vector<2x128xf32>
    %47 = math.tanh %38 : vector<2x128xf32>
    %48 = vector.extract_strided_slice %46 {offsets = [0, 0], sizes = [2, 32], strides = [1, 1]} : vector<2x128xf32> to vector<2x32xf32>
    %49 = vector.extract_strided_slice %46 {offsets = [0, 32], sizes = [2, 32], strides = [1, 1]} : vector<2x128xf32> to vector<2x32xf32>
    %50 = vector.extract_strided_slice %47 {offsets = [0, 64], sizes = [2, 32], strides = [1, 1]} : vector<2x128xf32> to vector<2x32xf32>
    %51 = vector.extract_strided_slice %46 {offsets = [0, 96], sizes = [2, 32], strides = [1, 1]} : vector<2x128xf32> to vector<2x32xf32>
    %52 = arith.mulf %49, %28 : vector<2x32xf32>
    %53 = arith.mulf %48, %50 : vector<2x32xf32>
    %54 = arith.addf %52, %53 : vector<2x32xf32>
    %55 = math.tanh %54 : vector<2x32xf32>
    %56 = arith.mulf %51, %55 : vector<2x32xf32>
    %57 = arith.negf %41 : vector<2x128xf32>
    %58 = math.exp %57 : vector<2x128xf32>
    %cst_35 = arith.constant 1.000000e+00 : f32
    %59 = vector.broadcast %cst_35 : f32 to vector<2x128xf32>
    %60 = arith.addf %59, %58 : vector<2x128xf32>
    %61 = arith.divf %59, %60 : vector<2x128xf32>
    %62 = math.tanh %41 : vector<2x128xf32>
    %63 = vector.extract_strided_slice %61 {offsets = [0, 0], sizes = [2, 32], strides = [1, 1]} : vector<2x128xf32> to vector<2x32xf32>
    %64 = vector.extract_strided_slice %61 {offsets = [0, 32], sizes = [2, 32], strides = [1, 1]} : vector<2x128xf32> to vector<2x32xf32>
    %65 = vector.extract_strided_slice %62 {offsets = [0, 64], sizes = [2, 32], strides = [1, 1]} : vector<2x128xf32> to vector<2x32xf32>
    %66 = vector.extract_strided_slice %61 {offsets = [0, 96], sizes = [2, 32], strides = [1, 1]} : vector<2x128xf32> to vector<2x32xf32>
    %67 = arith.mulf %64, %28 : vector<2x32xf32>
    %68 = arith.mulf %63, %65 : vector<2x32xf32>
    %69 = arith.addf %67, %68 : vector<2x32xf32>
    %70 = math.tanh %69 : vector<2x32xf32>
    %71 = arith.mulf %66, %70 : vector<2x32xf32>
    %c1_i32 = arith.constant 1 : i32
    %72 = arith.index_cast %c1_i32 : i32 to index
    %c0_36 = arith.constant 0 : index
    %c0_37 = arith.constant 0 : index
    %73 = vector.load %arg11[%72, %c0_36, %c0_37] : memref<8x2x256xf32, #tpu.memory_space<vmem>>, vector<1x2x256xf32>
    %74 = vector.shape_cast %73 : vector<1x2x256xf32> to vector<2x256xf32>
    %c7_i32_38 = arith.constant 7 : i32
    %75 = arith.subi %c7_i32_38, %c1_i32 : i32
    %76 = arith.index_cast %75 : i32 to index
    %c0_39 = arith.constant 0 : index
    %c0_40 = arith.constant 0 : index
    %77 = vector.load %arg11[%76, %c0_39, %c0_40] : memref<8x2x256xf32, #tpu.memory_space<vmem>>, vector<1x2x256xf32>
    %78 = vector.shape_cast %77 : vector<1x2x256xf32> to vector<2x256xf32>
    %79 = vector.extract_strided_slice %74 {offsets = [0, 0], sizes = [2, 128], strides = [1, 1]} : vector<2x256xf32> to vector<2x128xf32>
    %cst_41 = arith.constant dense<0.000000e+00> : vector<2x128xf32>
    %80 = tpu.matmul %56, %26, %cst_41 {dimension_numbers = #tpu.dot_dimension_numbers<[1], [0], [0], [1], [0, 0, 1, 1], [], []>} : vector<2x32xf32>, vector<32x128xf32>, vector<2x128xf32> -> vector<2x128xf32>
    %81 = arith.addf %79, %80 : vector<2x128xf32>
    %82 = vector.extract_strided_slice %78 {offsets = [0, 128], sizes = [2, 128], strides = [1, 1]} : vector<2x256xf32> to vector<2x128xf32>
    %cst_42 = arith.constant dense<0.000000e+00> : vector<2x128xf32>
    %83 = tpu.matmul %71, %27, %cst_42 {dimension_numbers = #tpu.dot_dimension_numbers<[1], [0], [0], [1], [0, 0, 1, 1], [], []>} : vector<2x32xf32>, vector<32x128xf32>, vector<2x128xf32> -> vector<2x128xf32>
    %84 = arith.addf %82, %83 : vector<2x128xf32>
    %85 = arith.negf %81 : vector<2x128xf32>
    %86 = math.exp %85 : vector<2x128xf32>
    %cst_43 = arith.constant 1.000000e+00 : f32
    %87 = vector.broadcast %cst_43 : f32 to vector<2x128xf32>
    %88 = arith.addf %87, %86 : vector<2x128xf32>
    %89 = arith.divf %87, %88 : vector<2x128xf32>
    %90 = math.tanh %81 : vector<2x128xf32>
    %91 = vector.extract_strided_slice %89 {offsets = [0, 0], sizes = [2, 32], strides = [1, 1]} : vector<2x128xf32> to vector<2x32xf32>
    %92 = vector.extract_strided_slice %89 {offsets = [0, 32], sizes = [2, 32], strides = [1, 1]} : vector<2x128xf32> to vector<2x32xf32>
    %93 = vector.extract_strided_slice %90 {offsets = [0, 64], sizes = [2, 32], strides = [1, 1]} : vector<2x128xf32> to vector<2x32xf32>
    %94 = vector.extract_strided_slice %89 {offsets = [0, 96], sizes = [2, 32], strides = [1, 1]} : vector<2x128xf32> to vector<2x32xf32>
    %95 = arith.mulf %92, %54 : vector<2x32xf32>
    %96 = arith.mulf %91, %93 : vector<2x32xf32>
    %97 = arith.addf %95, %96 : vector<2x32xf32>
    %98 = math.tanh %97 : vector<2x32xf32>
    %99 = arith.mulf %94, %98 : vector<2x32xf32>
    %100 = arith.negf %84 : vector<2x128xf32>
    %101 = math.exp %100 : vector<2x128xf32>
    %cst_44 = arith.constant 1.000000e+00 : f32
    %102 = vector.broadcast %cst_44 : f32 to vector<2x128xf32>
    %103 = arith.addf %102, %101 : vector<2x128xf32>
    %104 = arith.divf %102, %103 : vector<2x128xf32>
    %105 = math.tanh %84 : vector<2x128xf32>
    %106 = vector.extract_strided_slice %104 {offsets = [0, 0], sizes = [2, 32], strides = [1, 1]} : vector<2x128xf32> to vector<2x32xf32>
    %107 = vector.extract_strided_slice %104 {offsets = [0, 32], sizes = [2, 32], strides = [1, 1]} : vector<2x128xf32> to vector<2x32xf32>
    %108 = vector.extract_strided_slice %105 {offsets = [0, 64], sizes = [2, 32], strides = [1, 1]} : vector<2x128xf32> to vector<2x32xf32>
    %109 = vector.extract_strided_slice %104 {offsets = [0, 96], sizes = [2, 32], strides = [1, 1]} : vector<2x128xf32> to vector<2x32xf32>
    %110 = arith.mulf %107, %69 : vector<2x32xf32>
    %111 = arith.mulf %106, %108 : vector<2x32xf32>
    %112 = arith.addf %110, %111 : vector<2x32xf32>
    %113 = math.tanh %112 : vector<2x32xf32>
    %114 = arith.mulf %109, %113 : vector<2x32xf32>
    %c2_i32 = arith.constant 2 : i32
    %115 = arith.index_cast %c2_i32 : i32 to index
    %c0_45 = arith.constant 0 : index
    %c0_46 = arith.constant 0 : index
    %116 = vector.load %arg11[%115, %c0_45, %c0_46] : memref<8x2x256xf32, #tpu.memory_space<vmem>>, vector<1x2x256xf32>
    %117 = vector.shape_cast %116 : vector<1x2x256xf32> to vector<2x256xf32>
    %c7_i32_47 = arith.constant 7 : i32
    %118 = arith.subi %c7_i32_47, %c2_i32 : i32
    %119 = arith.index_cast %118 : i32 to index
    %c0_48 = arith.constant 0 : index
    %c0_49 = arith.constant 0 : index
    %120 = vector.load %arg11[%119, %c0_48, %c0_49] : memref<8x2x256xf32, #tpu.memory_space<vmem>>, vector<1x2x256xf32>
    %121 = vector.shape_cast %120 : vector<1x2x256xf32> to vector<2x256xf32>
    %122 = vector.extract_strided_slice %117 {offsets = [0, 0], sizes = [2, 128], strides = [1, 1]} : vector<2x256xf32> to vector<2x128xf32>
    %cst_50 = arith.constant dense<0.000000e+00> : vector<2x128xf32>
    %123 = tpu.matmul %99, %26, %cst_50 {dimension_numbers = #tpu.dot_dimension_numbers<[1], [0], [0], [1], [0, 0, 1, 1], [], []>} : vector<2x32xf32>, vector<32x128xf32>, vector<2x128xf32> -> vector<2x128xf32>
    %124 = arith.addf %122, %123 : vector<2x128xf32>
    %125 = vector.extract_strided_slice %121 {offsets = [0, 128], sizes = [2, 128], strides = [1, 1]} : vector<2x256xf32> to vector<2x128xf32>
    %cst_51 = arith.constant dense<0.000000e+00> : vector<2x128xf32>
    %126 = tpu.matmul %114, %27, %cst_51 {dimension_numbers = #tpu.dot_dimension_numbers<[1], [0], [0], [1], [0, 0, 1, 1], [], []>} : vector<2x32xf32>, vector<32x128xf32>, vector<2x128xf32> -> vector<2x128xf32>
    %127 = arith.addf %125, %126 : vector<2x128xf32>
    %128 = arith.negf %124 : vector<2x128xf32>
    %129 = math.exp %128 : vector<2x128xf32>
    %cst_52 = arith.constant 1.000000e+00 : f32
    %130 = vector.broadcast %cst_52 : f32 to vector<2x128xf32>
    %131 = arith.addf %130, %129 : vector<2x128xf32>
    %132 = arith.divf %130, %131 : vector<2x128xf32>
    %133 = math.tanh %124 : vector<2x128xf32>
    %134 = vector.extract_strided_slice %132 {offsets = [0, 0], sizes = [2, 32], strides = [1, 1]} : vector<2x128xf32> to vector<2x32xf32>
    %135 = vector.extract_strided_slice %132 {offsets = [0, 32], sizes = [2, 32], strides = [1, 1]} : vector<2x128xf32> to vector<2x32xf32>
    %136 = vector.extract_strided_slice %133 {offsets = [0, 64], sizes = [2, 32], strides = [1, 1]} : vector<2x128xf32> to vector<2x32xf32>
    %137 = vector.extract_strided_slice %132 {offsets = [0, 96], sizes = [2, 32], strides = [1, 1]} : vector<2x128xf32> to vector<2x32xf32>
    %138 = arith.mulf %135, %97 : vector<2x32xf32>
    %139 = arith.mulf %134, %136 : vector<2x32xf32>
    %140 = arith.addf %138, %139 : vector<2x32xf32>
    %141 = math.tanh %140 : vector<2x32xf32>
    %142 = arith.mulf %137, %141 : vector<2x32xf32>
    %143 = arith.negf %127 : vector<2x128xf32>
    %144 = math.exp %143 : vector<2x128xf32>
    %cst_53 = arith.constant 1.000000e+00 : f32
    %145 = vector.broadcast %cst_53 : f32 to vector<2x128xf32>
    %146 = arith.addf %145, %144 : vector<2x128xf32>
    %147 = arith.divf %145, %146 : vector<2x128xf32>
    %148 = math.tanh %127 : vector<2x128xf32>
    %149 = vector.extract_strided_slice %147 {offsets = [0, 0], sizes = [2, 32], strides = [1, 1]} : vector<2x128xf32> to vector<2x32xf32>
    %150 = vector.extract_strided_slice %147 {offsets = [0, 32], sizes = [2, 32], strides = [1, 1]} : vector<2x128xf32> to vector<2x32xf32>
    %151 = vector.extract_strided_slice %148 {offsets = [0, 64], sizes = [2, 32], strides = [1, 1]} : vector<2x128xf32> to vector<2x32xf32>
    %152 = vector.extract_strided_slice %147 {offsets = [0, 96], sizes = [2, 32], strides = [1, 1]} : vector<2x128xf32> to vector<2x32xf32>
    %153 = arith.mulf %150, %112 : vector<2x32xf32>
    %154 = arith.mulf %149, %151 : vector<2x32xf32>
    %155 = arith.addf %153, %154 : vector<2x32xf32>
    %156 = math.tanh %155 : vector<2x32xf32>
    %157 = arith.mulf %152, %156 : vector<2x32xf32>
    %c3_i32 = arith.constant 3 : i32
    %158 = arith.index_cast %c3_i32 : i32 to index
    %c0_54 = arith.constant 0 : index
    %c0_55 = arith.constant 0 : index
    %159 = vector.load %arg11[%158, %c0_54, %c0_55] : memref<8x2x256xf32, #tpu.memory_space<vmem>>, vector<1x2x256xf32>
    %160 = vector.shape_cast %159 : vector<1x2x256xf32> to vector<2x256xf32>
    %c7_i32_56 = arith.constant 7 : i32
    %161 = arith.subi %c7_i32_56, %c3_i32 : i32
    %162 = arith.index_cast %161 : i32 to index
    %c0_57 = arith.constant 0 : index
    %c0_58 = arith.constant 0 : index
    %163 = vector.load %arg11[%162, %c0_57, %c0_58] : memref<8x2x256xf32, #tpu.memory_space<vmem>>, vector<1x2x256xf32>
    %164 = vector.shape_cast %163 : vector<1x2x256xf32> to vector<2x256xf32>
    %165 = vector.extract_strided_slice %160 {offsets = [0, 0], sizes = [2, 128], strides = [1, 1]} : vector<2x256xf32> to vector<2x128xf32>
    %cst_59 = arith.constant dense<0.000000e+00> : vector<2x128xf32>
    %166 = tpu.matmul %142, %26, %cst_59 {dimension_numbers = #tpu.dot_dimension_numbers<[1], [0], [0], [1], [0, 0, 1, 1], [], []>} : vector<2x32xf32>, vector<32x128xf32>, vector<2x128xf32> -> vector<2x128xf32>
    %167 = arith.addf %165, %166 : vector<2x128xf32>
    %168 = vector.extract_strided_slice %164 {offsets = [0, 128], sizes = [2, 128], strides = [1, 1]} : vector<2x256xf32> to vector<2x128xf32>
    %cst_60 = arith.constant dense<0.000000e+00> : vector<2x128xf32>
    %169 = tpu.matmul %157, %27, %cst_60 {dimension_numbers = #tpu.dot_dimension_numbers<[1], [0], [0], [1], [0, 0, 1, 1], [], []>} : vector<2x32xf32>, vector<32x128xf32>, vector<2x128xf32> -> vector<2x128xf32>
    %170 = arith.addf %168, %169 : vector<2x128xf32>
    %171 = arith.negf %167 : vector<2x128xf32>
    %172 = math.exp %171 : vector<2x128xf32>
    %cst_61 = arith.constant 1.000000e+00 : f32
    %173 = vector.broadcast %cst_61 : f32 to vector<2x128xf32>
    %174 = arith.addf %173, %172 : vector<2x128xf32>
    %175 = arith.divf %173, %174 : vector<2x128xf32>
    %176 = math.tanh %167 : vector<2x128xf32>
    %177 = vector.extract_strided_slice %175 {offsets = [0, 0], sizes = [2, 32], strides = [1, 1]} : vector<2x128xf32> to vector<2x32xf32>
    %178 = vector.extract_strided_slice %175 {offsets = [0, 32], sizes = [2, 32], strides = [1, 1]} : vector<2x128xf32> to vector<2x32xf32>
    %179 = vector.extract_strided_slice %176 {offsets = [0, 64], sizes = [2, 32], strides = [1, 1]} : vector<2x128xf32> to vector<2x32xf32>
    %180 = vector.extract_strided_slice %175 {offsets = [0, 96], sizes = [2, 32], strides = [1, 1]} : vector<2x128xf32> to vector<2x32xf32>
    %181 = arith.mulf %178, %140 : vector<2x32xf32>
    %182 = arith.mulf %177, %179 : vector<2x32xf32>
    %183 = arith.addf %181, %182 : vector<2x32xf32>
    %184 = math.tanh %183 : vector<2x32xf32>
    %185 = arith.mulf %180, %184 : vector<2x32xf32>
    %186 = arith.negf %170 : vector<2x128xf32>
    %187 = math.exp %186 : vector<2x128xf32>
    %cst_62 = arith.constant 1.000000e+00 : f32
    %188 = vector.broadcast %cst_62 : f32 to vector<2x128xf32>
    %189 = arith.addf %188, %187 : vector<2x128xf32>
    %190 = arith.divf %188, %189 : vector<2x128xf32>
    %191 = math.tanh %170 : vector<2x128xf32>
    %192 = vector.extract_strided_slice %190 {offsets = [0, 0], sizes = [2, 32], strides = [1, 1]} : vector<2x128xf32> to vector<2x32xf32>
    %193 = vector.extract_strided_slice %190 {offsets = [0, 32], sizes = [2, 32], strides = [1, 1]} : vector<2x128xf32> to vector<2x32xf32>
    %194 = vector.extract_strided_slice %191 {offsets = [0, 64], sizes = [2, 32], strides = [1, 1]} : vector<2x128xf32> to vector<2x32xf32>
    %195 = vector.extract_strided_slice %190 {offsets = [0, 96], sizes = [2, 32], strides = [1, 1]} : vector<2x128xf32> to vector<2x32xf32>
    %196 = arith.mulf %193, %155 : vector<2x32xf32>
    %197 = arith.mulf %192, %194 : vector<2x32xf32>
    %198 = arith.addf %196, %197 : vector<2x32xf32>
    %199 = math.tanh %198 : vector<2x32xf32>
    %200 = arith.mulf %195, %199 : vector<2x32xf32>
    %c4_i32 = arith.constant 4 : i32
    %201 = arith.index_cast %c4_i32 : i32 to index
    %c0_63 = arith.constant 0 : index
    %c0_64 = arith.constant 0 : index
    %202 = vector.load %arg11[%201, %c0_63, %c0_64] : memref<8x2x256xf32, #tpu.memory_space<vmem>>, vector<1x2x256xf32>
    %203 = vector.shape_cast %202 : vector<1x2x256xf32> to vector<2x256xf32>
    %c7_i32_65 = arith.constant 7 : i32
    %204 = arith.subi %c7_i32_65, %c4_i32 : i32
    %205 = arith.index_cast %204 : i32 to index
    %c0_66 = arith.constant 0 : index
    %c0_67 = arith.constant 0 : index
    %206 = vector.load %arg11[%205, %c0_66, %c0_67] : memref<8x2x256xf32, #tpu.memory_space<vmem>>, vector<1x2x256xf32>
    %207 = vector.shape_cast %206 : vector<1x2x256xf32> to vector<2x256xf32>
    %208 = vector.extract_strided_slice %203 {offsets = [0, 0], sizes = [2, 128], strides = [1, 1]} : vector<2x256xf32> to vector<2x128xf32>
    %cst_68 = arith.constant dense<0.000000e+00> : vector<2x128xf32>
    %209 = tpu.matmul %185, %26, %cst_68 {dimension_numbers = #tpu.dot_dimension_numbers<[1], [0], [0], [1], [0, 0, 1, 1], [], []>} : vector<2x32xf32>, vector<32x128xf32>, vector<2x128xf32> -> vector<2x128xf32>
    %210 = arith.addf %208, %209 : vector<2x128xf32>
    %211 = vector.extract_strided_slice %207 {offsets = [0, 128], sizes = [2, 128], strides = [1, 1]} : vector<2x256xf32> to vector<2x128xf32>
    %cst_69 = arith.constant dense<0.000000e+00> : vector<2x128xf32>
    %212 = tpu.matmul %200, %27, %cst_69 {dimension_numbers = #tpu.dot_dimension_numbers<[1], [0], [0], [1], [0, 0, 1, 1], [], []>} : vector<2x32xf32>, vector<32x128xf32>, vector<2x128xf32> -> vector<2x128xf32>
    %213 = arith.addf %211, %212 : vector<2x128xf32>
    %214 = arith.negf %210 : vector<2x128xf32>
    %215 = math.exp %214 : vector<2x128xf32>
    %cst_70 = arith.constant 1.000000e+00 : f32
    %216 = vector.broadcast %cst_70 : f32 to vector<2x128xf32>
    %217 = arith.addf %216, %215 : vector<2x128xf32>
    %218 = arith.divf %216, %217 : vector<2x128xf32>
    %219 = math.tanh %210 : vector<2x128xf32>
    %220 = vector.extract_strided_slice %218 {offsets = [0, 0], sizes = [2, 32], strides = [1, 1]} : vector<2x128xf32> to vector<2x32xf32>
    %221 = vector.extract_strided_slice %218 {offsets = [0, 32], sizes = [2, 32], strides = [1, 1]} : vector<2x128xf32> to vector<2x32xf32>
    %222 = vector.extract_strided_slice %219 {offsets = [0, 64], sizes = [2, 32], strides = [1, 1]} : vector<2x128xf32> to vector<2x32xf32>
    %223 = vector.extract_strided_slice %218 {offsets = [0, 96], sizes = [2, 32], strides = [1, 1]} : vector<2x128xf32> to vector<2x32xf32>
    %224 = arith.mulf %221, %183 : vector<2x32xf32>
    %225 = arith.mulf %220, %222 : vector<2x32xf32>
    %226 = arith.addf %224, %225 : vector<2x32xf32>
    %227 = math.tanh %226 : vector<2x32xf32>
    %228 = arith.mulf %223, %227 : vector<2x32xf32>
    %229 = arith.negf %213 : vector<2x128xf32>
    %230 = math.exp %229 : vector<2x128xf32>
    %cst_71 = arith.constant 1.000000e+00 : f32
    %231 = vector.broadcast %cst_71 : f32 to vector<2x128xf32>
    %232 = arith.addf %231, %230 : vector<2x128xf32>
    %233 = arith.divf %231, %232 : vector<2x128xf32>
    %234 = math.tanh %213 : vector<2x128xf32>
    %235 = vector.extract_strided_slice %233 {offsets = [0, 0], sizes = [2, 32], strides = [1, 1]} : vector<2x128xf32> to vector<2x32xf32>
    %236 = vector.extract_strided_slice %233 {offsets = [0, 32], sizes = [2, 32], strides = [1, 1]} : vector<2x128xf32> to vector<2x32xf32>
    %237 = vector.extract_strided_slice %234 {offsets = [0, 64], sizes = [2, 32], strides = [1, 1]} : vector<2x128xf32> to vector<2x32xf32>
    %238 = vector.extract_strided_slice %233 {offsets = [0, 96], sizes = [2, 32], strides = [1, 1]} : vector<2x128xf32> to vector<2x32xf32>
    %239 = arith.mulf %236, %198 : vector<2x32xf32>
    %240 = arith.mulf %235, %237 : vector<2x32xf32>
    %241 = arith.addf %239, %240 : vector<2x32xf32>
    %242 = math.tanh %241 : vector<2x32xf32>
    %243 = arith.mulf %238, %242 : vector<2x32xf32>
    %c5_i32 = arith.constant 5 : i32
    %244 = arith.index_cast %c5_i32 : i32 to index
    %c0_72 = arith.constant 0 : index
    %c0_73 = arith.constant 0 : index
    %245 = vector.load %arg11[%244, %c0_72, %c0_73] : memref<8x2x256xf32, #tpu.memory_space<vmem>>, vector<1x2x256xf32>
    %246 = vector.shape_cast %245 : vector<1x2x256xf32> to vector<2x256xf32>
    %c7_i32_74 = arith.constant 7 : i32
    %247 = arith.subi %c7_i32_74, %c5_i32 : i32
    %248 = arith.index_cast %247 : i32 to index
    %c0_75 = arith.constant 0 : index
    %c0_76 = arith.constant 0 : index
    %249 = vector.load %arg11[%248, %c0_75, %c0_76] : memref<8x2x256xf32, #tpu.memory_space<vmem>>, vector<1x2x256xf32>
    %250 = vector.shape_cast %249 : vector<1x2x256xf32> to vector<2x256xf32>
    %251 = vector.extract_strided_slice %246 {offsets = [0, 0], sizes = [2, 128], strides = [1, 1]} : vector<2x256xf32> to vector<2x128xf32>
    %cst_77 = arith.constant dense<0.000000e+00> : vector<2x128xf32>
    %252 = tpu.matmul %228, %26, %cst_77 {dimension_numbers = #tpu.dot_dimension_numbers<[1], [0], [0], [1], [0, 0, 1, 1], [], []>} : vector<2x32xf32>, vector<32x128xf32>, vector<2x128xf32> -> vector<2x128xf32>
    %253 = arith.addf %251, %252 : vector<2x128xf32>
    %254 = vector.extract_strided_slice %250 {offsets = [0, 128], sizes = [2, 128], strides = [1, 1]} : vector<2x256xf32> to vector<2x128xf32>
    %cst_78 = arith.constant dense<0.000000e+00> : vector<2x128xf32>
    %255 = tpu.matmul %243, %27, %cst_78 {dimension_numbers = #tpu.dot_dimension_numbers<[1], [0], [0], [1], [0, 0, 1, 1], [], []>} : vector<2x32xf32>, vector<32x128xf32>, vector<2x128xf32> -> vector<2x128xf32>
    %256 = arith.addf %254, %255 : vector<2x128xf32>
    %257 = arith.negf %253 : vector<2x128xf32>
    %258 = math.exp %257 : vector<2x128xf32>
    %cst_79 = arith.constant 1.000000e+00 : f32
    %259 = vector.broadcast %cst_79 : f32 to vector<2x128xf32>
    %260 = arith.addf %259, %258 : vector<2x128xf32>
    %261 = arith.divf %259, %260 : vector<2x128xf32>
    %262 = math.tanh %253 : vector<2x128xf32>
    %263 = vector.extract_strided_slice %261 {offsets = [0, 0], sizes = [2, 32], strides = [1, 1]} : vector<2x128xf32> to vector<2x32xf32>
    %264 = vector.extract_strided_slice %261 {offsets = [0, 32], sizes = [2, 32], strides = [1, 1]} : vector<2x128xf32> to vector<2x32xf32>
    %265 = vector.extract_strided_slice %262 {offsets = [0, 64], sizes = [2, 32], strides = [1, 1]} : vector<2x128xf32> to vector<2x32xf32>
    %266 = vector.extract_strided_slice %261 {offsets = [0, 96], sizes = [2, 32], strides = [1, 1]} : vector<2x128xf32> to vector<2x32xf32>
    %267 = arith.mulf %264, %226 : vector<2x32xf32>
    %268 = arith.mulf %263, %265 : vector<2x32xf32>
    %269 = arith.addf %267, %268 : vector<2x32xf32>
    %270 = math.tanh %269 : vector<2x32xf32>
    %271 = arith.mulf %266, %270 : vector<2x32xf32>
    %272 = arith.negf %256 : vector<2x128xf32>
    %273 = math.exp %272 : vector<2x128xf32>
    %cst_80 = arith.constant 1.000000e+00 : f32
    %274 = vector.broadcast %cst_80 : f32 to vector<2x128xf32>
    %275 = arith.addf %274, %273 : vector<2x128xf32>
    %276 = arith.divf %274, %275 : vector<2x128xf32>
    %277 = math.tanh %256 : vector<2x128xf32>
    %278 = vector.extract_strided_slice %276 {offsets = [0, 0], sizes = [2, 32], strides = [1, 1]} : vector<2x128xf32> to vector<2x32xf32>
    %279 = vector.extract_strided_slice %276 {offsets = [0, 32], sizes = [2, 32], strides = [1, 1]} : vector<2x128xf32> to vector<2x32xf32>
    %280 = vector.extract_strided_slice %277 {offsets = [0, 64], sizes = [2, 32], strides = [1, 1]} : vector<2x128xf32> to vector<2x32xf32>
    %281 = vector.extract_strided_slice %276 {offsets = [0, 96], sizes = [2, 32], strides = [1, 1]} : vector<2x128xf32> to vector<2x32xf32>
    %282 = arith.mulf %279, %241 : vector<2x32xf32>
    %283 = arith.mulf %278, %280 : vector<2x32xf32>
    %284 = arith.addf %282, %283 : vector<2x32xf32>
    %285 = math.tanh %284 : vector<2x32xf32>
    %286 = arith.mulf %281, %285 : vector<2x32xf32>
    %c6_i32 = arith.constant 6 : i32
    %287 = arith.index_cast %c6_i32 : i32 to index
    %c0_81 = arith.constant 0 : index
    %c0_82 = arith.constant 0 : index
    %288 = vector.load %arg11[%287, %c0_81, %c0_82] : memref<8x2x256xf32, #tpu.memory_space<vmem>>, vector<1x2x256xf32>
    %289 = vector.shape_cast %288 : vector<1x2x256xf32> to vector<2x256xf32>
    %c7_i32_83 = arith.constant 7 : i32
    %290 = arith.subi %c7_i32_83, %c6_i32 : i32
    %291 = arith.index_cast %290 : i32 to index
    %c0_84 = arith.constant 0 : index
    %c0_85 = arith.constant 0 : index
    %292 = vector.load %arg11[%291, %c0_84, %c0_85] : memref<8x2x256xf32, #tpu.memory_space<vmem>>, vector<1x2x256xf32>
    %293 = vector.shape_cast %292 : vector<1x2x256xf32> to vector<2x256xf32>
    %294 = vector.extract_strided_slice %289 {offsets = [0, 0], sizes = [2, 128], strides = [1, 1]} : vector<2x256xf32> to vector<2x128xf32>
    %cst_86 = arith.constant dense<0.000000e+00> : vector<2x128xf32>
    %295 = tpu.matmul %271, %26, %cst_86 {dimension_numbers = #tpu.dot_dimension_numbers<[1], [0], [0], [1], [0, 0, 1, 1], [], []>} : vector<2x32xf32>, vector<32x128xf32>, vector<2x128xf32> -> vector<2x128xf32>
    %296 = arith.addf %294, %295 : vector<2x128xf32>
    %297 = vector.extract_strided_slice %293 {offsets = [0, 128], sizes = [2, 128], strides = [1, 1]} : vector<2x256xf32> to vector<2x128xf32>
    %cst_87 = arith.constant dense<0.000000e+00> : vector<2x128xf32>
    %298 = tpu.matmul %286, %27, %cst_87 {dimension_numbers = #tpu.dot_dimension_numbers<[1], [0], [0], [1], [0, 0, 1, 1], [], []>} : vector<2x32xf32>, vector<32x128xf32>, vector<2x128xf32> -> vector<2x128xf32>
    %299 = arith.addf %297, %298 : vector<2x128xf32>
    %300 = arith.negf %296 : vector<2x128xf32>
    %301 = math.exp %300 : vector<2x128xf32>
    %cst_88 = arith.constant 1.000000e+00 : f32
    %302 = vector.broadcast %cst_88 : f32 to vector<2x128xf32>
    %303 = arith.addf %302, %301 : vector<2x128xf32>
    %304 = arith.divf %302, %303 : vector<2x128xf32>
    %305 = math.tanh %296 : vector<2x128xf32>
    %306 = vector.extract_strided_slice %304 {offsets = [0, 0], sizes = [2, 32], strides = [1, 1]} : vector<2x128xf32> to vector<2x32xf32>
    %307 = vector.extract_strided_slice %304 {offsets = [0, 32], sizes = [2, 32], strides = [1, 1]} : vector<2x128xf32> to vector<2x32xf32>
    %308 = vector.extract_strided_slice %305 {offsets = [0, 64], sizes = [2, 32], strides = [1, 1]} : vector<2x128xf32> to vector<2x32xf32>
    %309 = vector.extract_strided_slice %304 {offsets = [0, 96], sizes = [2, 32], strides = [1, 1]} : vector<2x128xf32> to vector<2x32xf32>
    %310 = arith.mulf %307, %269 : vector<2x32xf32>
    %311 = arith.mulf %306, %308 : vector<2x32xf32>
    %312 = arith.addf %310, %311 : vector<2x32xf32>
    %313 = math.tanh %312 : vector<2x32xf32>
    %314 = arith.mulf %309, %313 : vector<2x32xf32>
    %315 = arith.negf %299 : vector<2x128xf32>
    %316 = math.exp %315 : vector<2x128xf32>
    %cst_89 = arith.constant 1.000000e+00 : f32
    %317 = vector.broadcast %cst_89 : f32 to vector<2x128xf32>
    %318 = arith.addf %317, %316 : vector<2x128xf32>
    %319 = arith.divf %317, %318 : vector<2x128xf32>
    %320 = math.tanh %299 : vector<2x128xf32>
    %321 = vector.extract_strided_slice %319 {offsets = [0, 0], sizes = [2, 32], strides = [1, 1]} : vector<2x128xf32> to vector<2x32xf32>
    %322 = vector.extract_strided_slice %319 {offsets = [0, 32], sizes = [2, 32], strides = [1, 1]} : vector<2x128xf32> to vector<2x32xf32>
    %323 = vector.extract_strided_slice %320 {offsets = [0, 64], sizes = [2, 32], strides = [1, 1]} : vector<2x128xf32> to vector<2x32xf32>
    %324 = vector.extract_strided_slice %319 {offsets = [0, 96], sizes = [2, 32], strides = [1, 1]} : vector<2x128xf32> to vector<2x32xf32>
    %325 = arith.mulf %322, %284 : vector<2x32xf32>
    %326 = arith.mulf %321, %323 : vector<2x32xf32>
    %327 = arith.addf %325, %326 : vector<2x32xf32>
    %328 = math.tanh %327 : vector<2x32xf32>
    %329 = arith.mulf %324, %328 : vector<2x32xf32>
    %c7_i32_90 = arith.constant 7 : i32
    %330 = arith.index_cast %c7_i32_90 : i32 to index
    %c0_91 = arith.constant 0 : index
    %c0_92 = arith.constant 0 : index
    %331 = vector.load %arg11[%330, %c0_91, %c0_92] : memref<8x2x256xf32, #tpu.memory_space<vmem>>, vector<1x2x256xf32>
    %332 = vector.shape_cast %331 : vector<1x2x256xf32> to vector<2x256xf32>
    %c7_i32_93 = arith.constant 7 : i32
    %333 = arith.subi %c7_i32_93, %c7_i32_90 : i32
    %334 = arith.index_cast %333 : i32 to index
    %c0_94 = arith.constant 0 : index
    %c0_95 = arith.constant 0 : index
    %335 = vector.load %arg11[%334, %c0_94, %c0_95] : memref<8x2x256xf32, #tpu.memory_space<vmem>>, vector<1x2x256xf32>
    %336 = vector.shape_cast %335 : vector<1x2x256xf32> to vector<2x256xf32>
    %337 = vector.extract_strided_slice %332 {offsets = [0, 0], sizes = [2, 128], strides = [1, 1]} : vector<2x256xf32> to vector<2x128xf32>
    %cst_96 = arith.constant dense<0.000000e+00> : vector<2x128xf32>
    %338 = tpu.matmul %314, %26, %cst_96 {dimension_numbers = #tpu.dot_dimension_numbers<[1], [0], [0], [1], [0, 0, 1, 1], [], []>} : vector<2x32xf32>, vector<32x128xf32>, vector<2x128xf32> -> vector<2x128xf32>
    %339 = arith.addf %337, %338 : vector<2x128xf32>
    %340 = vector.extract_strided_slice %336 {offsets = [0, 128], sizes = [2, 128], strides = [1, 1]} : vector<2x256xf32> to vector<2x128xf32>
    %cst_97 = arith.constant dense<0.000000e+00> : vector<2x128xf32>
    %341 = tpu.matmul %329, %27, %cst_97 {dimension_numbers = #tpu.dot_dimension_numbers<[1], [0], [0], [1], [0, 0, 1, 1], [], []>} : vector<2x32xf32>, vector<32x128xf32>, vector<2x128xf32> -> vector<2x128xf32>
    %342 = arith.addf %340, %341 : vector<2x128xf32>
    %343 = arith.negf %339 : vector<2x128xf32>
    %344 = math.exp %343 : vector<2x128xf32>
    %cst_98 = arith.constant 1.000000e+00 : f32
    %345 = vector.broadcast %cst_98 : f32 to vector<2x128xf32>
    %346 = arith.addf %345, %344 : vector<2x128xf32>
    %347 = arith.divf %345, %346 : vector<2x128xf32>
    %348 = math.tanh %339 : vector<2x128xf32>
    %349 = vector.extract_strided_slice %347 {offsets = [0, 0], sizes = [2, 32], strides = [1, 1]} : vector<2x128xf32> to vector<2x32xf32>
    %350 = vector.extract_strided_slice %347 {offsets = [0, 32], sizes = [2, 32], strides = [1, 1]} : vector<2x128xf32> to vector<2x32xf32>
    %351 = vector.extract_strided_slice %348 {offsets = [0, 64], sizes = [2, 32], strides = [1, 1]} : vector<2x128xf32> to vector<2x32xf32>
    %352 = vector.extract_strided_slice %347 {offsets = [0, 96], sizes = [2, 32], strides = [1, 1]} : vector<2x128xf32> to vector<2x32xf32>
    %353 = arith.mulf %350, %312 : vector<2x32xf32>
    %354 = arith.mulf %349, %351 : vector<2x32xf32>
    %355 = arith.addf %353, %354 : vector<2x32xf32>
    %356 = math.tanh %355 : vector<2x32xf32>
    %357 = arith.mulf %352, %356 : vector<2x32xf32>
    %358 = arith.negf %342 : vector<2x128xf32>
    %359 = math.exp %358 : vector<2x128xf32>
    %cst_99 = arith.constant 1.000000e+00 : f32
    %360 = vector.broadcast %cst_99 : f32 to vector<2x128xf32>
    %361 = arith.addf %360, %359 : vector<2x128xf32>
    %362 = arith.divf %360, %361 : vector<2x128xf32>
    %363 = math.tanh %342 : vector<2x128xf32>
    %364 = vector.extract_strided_slice %362 {offsets = [0, 0], sizes = [2, 32], strides = [1, 1]} : vector<2x128xf32> to vector<2x32xf32>
    %365 = vector.extract_strided_slice %362 {offsets = [0, 32], sizes = [2, 32], strides = [1, 1]} : vector<2x128xf32> to vector<2x32xf32>
    %366 = vector.extract_strided_slice %363 {offsets = [0, 64], sizes = [2, 32], strides = [1, 1]} : vector<2x128xf32> to vector<2x32xf32>
    %367 = vector.extract_strided_slice %362 {offsets = [0, 96], sizes = [2, 32], strides = [1, 1]} : vector<2x128xf32> to vector<2x32xf32>
    %368 = arith.mulf %365, %327 : vector<2x32xf32>
    %369 = arith.mulf %364, %366 : vector<2x32xf32>
    %370 = arith.addf %368, %369 : vector<2x32xf32>
    %371 = math.tanh %370 : vector<2x32xf32>
    %372 = arith.mulf %367, %371 : vector<2x32xf32>
    %c8_i32 = arith.constant 8 : i32
    %373 = tpu.concatenate %355, %370 in 1 : vector<2x32xf32>, vector<2x32xf32> -> vector<2x64xf32>
    %c0_100 = arith.constant 0 : index
    %374 = memref.load %arg8[%c0_100] : memref<2xf32, #tpu.memory_space<smem>>
    %375 = vector.broadcast %374 : f32 to vector<2x64xf32>
    %376 = arith.mulf %7, %375 : vector<2x64xf32>
    %c1_101 = arith.constant 1 : index
    %377 = memref.load %arg8[%c1_101] : memref<2xf32, #tpu.memory_space<smem>>
    %378 = vector.broadcast %377 : f32 to vector<2x64xf32>
    %379 = arith.mulf %373, %378 : vector<2x64xf32>
    %380 = arith.addf %376, %379 : vector<2x64xf32>
    %c0_102 = arith.constant 0 : index
    %c0_103 = arith.constant 0 : index
    %381 = vector.load %arg9[%c0_102, %c0_103] : memref<16x64xf32, #tpu.memory_space<vmem>>, vector<16x64xf32>
    %382 = vector.extract_strided_slice %380 {offsets = [0, 0], sizes = [2, 32], strides = [1, 1]} : vector<2x64xf32> to vector<2x32xf32>
    %383 = arith.mulf %382, %382 : vector<2x32xf32>
    %cst_104 = arith.constant dense<0.000000e+00> : vector<2xf32>
    %384 = vector.multi_reduction <add>, %383, %cst_104 [1] : vector<2x32xf32> to vector<2xf32>
    %385 = vector.shape_cast %384 : vector<2xf32> to vector<2x1xf32>
    %386 = math.sqrt %385 : vector<2x1xf32>
    %cst_105 = arith.constant 9.99999993E-9 : f32
    %387 = vector.broadcast %cst_105 : f32 to vector<2x1xf32>
    %388 = arith.addf %386, %387 : vector<2x1xf32>
    %389 = vector.broadcast %388 : vector<2x1xf32> to vector<2x32xf32>
    %390 = arith.divf %382, %389 : vector<2x32xf32>
    %391 = vector.extract_strided_slice %380 {offsets = [0, 32], sizes = [2, 32], strides = [1, 1]} : vector<2x64xf32> to vector<2x32xf32>
    %392 = arith.mulf %391, %391 : vector<2x32xf32>
    %cst_106 = arith.constant dense<0.000000e+00> : vector<2xf32>
    %393 = vector.multi_reduction <add>, %392, %cst_106 [1] : vector<2x32xf32> to vector<2xf32>
    %394 = vector.shape_cast %393 : vector<2xf32> to vector<2x1xf32>
    %395 = math.sqrt %394 : vector<2x1xf32>
    %cst_107 = arith.constant 9.99999993E-9 : f32
    %396 = vector.broadcast %cst_107 : f32 to vector<2x1xf32>
    %397 = arith.addf %395, %396 : vector<2x1xf32>
    %398 = vector.broadcast %397 : vector<2x1xf32> to vector<2x32xf32>
    %399 = arith.divf %391, %398 : vector<2x32xf32>
    %400 = tpu.concatenate %390, %399 in 1 : vector<2x32xf32>, vector<2x32xf32> -> vector<2x64xf32>
    %cst_108 = arith.constant 8.000000e+00 : f32
    %401 = vector.broadcast %cst_108 : f32 to vector<2x64xf32>
    %402 = arith.mulf %400, %401 : vector<2x64xf32>
    %403 = vector.extract_strided_slice %381 {offsets = [0, 0], sizes = [16, 32], strides = [1, 1]} : vector<16x64xf32> to vector<16x32xf32>
    %404 = arith.mulf %403, %403 : vector<16x32xf32>
    %cst_109 = arith.constant dense<0.000000e+00> : vector<16xf32>
    %405 = vector.multi_reduction <add>, %404, %cst_109 [1] : vector<16x32xf32> to vector<16xf32>
    %406 = vector.shape_cast %405 : vector<16xf32> to vector<16x1xf32>
    %407 = math.sqrt %406 : vector<16x1xf32>
    %cst_110 = arith.constant 3.125000e-02 : f32
    %408 = vector.broadcast %cst_110 : f32 to vector<16x1xf32>
    %409 = arith.addf %407, %408 : vector<16x1xf32>
    %410 = vector.broadcast %409 : vector<16x1xf32> to vector<16x32xf32>
    %411 = arith.divf %403, %410 : vector<16x32xf32>
    %412 = vector.extract_strided_slice %381 {offsets = [0, 32], sizes = [16, 32], strides = [1, 1]} : vector<16x64xf32> to vector<16x32xf32>
    %413 = arith.mulf %412, %412 : vector<16x32xf32>
    %cst_111 = arith.constant dense<0.000000e+00> : vector<16xf32>
    %414 = vector.multi_reduction <add>, %413, %cst_111 [1] : vector<16x32xf32> to vector<16xf32>
    %415 = vector.shape_cast %414 : vector<16xf32> to vector<16x1xf32>
    %416 = math.sqrt %415 : vector<16x1xf32>
    %cst_112 = arith.constant 3.125000e-02 : f32
    %417 = vector.broadcast %cst_112 : f32 to vector<16x1xf32>
    %418 = arith.addf %416, %417 : vector<16x1xf32>
    %419 = vector.broadcast %418 : vector<16x1xf32> to vector<16x32xf32>
    %420 = arith.divf %412, %419 : vector<16x32xf32>
    %421 = tpu.concatenate %411, %420 in 1 : vector<16x32xf32>, vector<16x32xf32> -> vector<16x64xf32>
    %cst_113 = arith.constant dense<0.000000e+00> : vector<2x16xf32>
    %422 = tpu.matmul %402, %421, %cst_113 {dimension_numbers = #tpu.dot_dimension_numbers<[1], [1], [0], [0], [0, 0, 1, 0], [], []>} : vector<2x64xf32>, vector<16x64xf32>, vector<2x16xf32> -> vector<2x16xf32>
    %c0_114 = arith.constant 0 : index
    %c0_115 = arith.constant 0 : index
    %423 = vector.load %arg10[%c0_114, %c0_115] : memref<2x16xf32, #tpu.memory_space<vmem>>, vector<2x16xf32>
    tpu.vector_store %arg10[%c0_114, %c0_115], %422 {strides = array<i32>} : memref<2x16xf32, #tpu.memory_space<vmem>>, vector<2x16xf32>,
    return
  }
}

</mosaic_0001>

<llo_original>
// kernel: servenet_forward.1
$region0: #{servenet_forward.1}
  #allocation0 [shape = 'u32[]', space=smem, size = 0x4, offset = 0x4, fixed_abs, tag = 'smem constant byte address 0x4 - core index']
  #allocation1 [shape = 'u32[144,128]{1,0:T(1,128)}', space=vmem, size = 0x12000, scoped, tag = 'internal scratch']
  #allocation2 [shape = 'f32[8,2,256]{2,1,0:T(2,128)}', space=vmem, size = 0x4000, scoped, tag = 'scratch operand']
  %s0 = inlined_call_operand.hbm [shape: f32[2,32], index: 0, kind: input, shape index: {}]
  %s1 = inlined_call_operand.hbm [shape: f32[2,8,32], index: 1, kind: input, shape index: {}]
  %s2 = inlined_call_operand.hbm [shape: f32[32,64], index: 2, kind: input, shape index: {}]
  %s3 = inlined_call_operand.vmem [shape: f32[1,64], index: 3, kind: input, shape index: {}]
  %s4 = inlined_call_operand.hbm [shape: f32[32,256], index: 4, kind: input, shape index: {}]
  %s5 = inlined_call_operand.hbm [shape: f32[32,128], index: 5, kind: input, shape index: {}]
  %s6 = inlined_call_operand.hbm [shape: f32[32,128], index: 6, kind: input, shape index: {}]
  %s7 = inlined_call_operand.vmem [shape: f32[1,256], index: 7, kind: input, shape index: {}]
  %s8 = inlined_call_operand.vmem [shape: f32[2], index: 8, kind: input, shape index: {}]
  %s9 = inlined_call_operand.hbm [shape: f32[16,64], index: 9, kind: input, shape index: {}]
  %s10 = inlined_call_operand.hbm [shape: f32[2,16], index: 10, kind: output, shape index: {}]
  %s11 = sld [smem:[#allocation0]]
  $region82: #{servenet_forward.1} parent=0
    _
  %s13 = ssub.s32 1, %s11
  %s14 = scalar_select 0, %s13, %s11
  $region1: #{servenet_forward.1} parent=0
    #allocation3 [shape = 'u8[1024]{0}', space=vmem, size = 0x400, scoped, tag = 'input window, operand 0, single buffered']
    #allocation4 [shape = 's32[1]{0}', space=sflag, size = 0x4, scoped, tag = 'scoped memory for servenet_forward.1']
    #allocation5 [shape = 's32[1]{0}', space=sflag, size = 0x4, scoped, tag = 'scoped memory for servenet_forward.1']
    #allocation6 [shape = 's32[1]{0}', space=sflag, size = 0x4, scoped, tag = 'scoped memory for servenet_forward.1']
    #allocation7 [shape = 'u8[8192]{0}', space=vmem, size = 0x2000, scoped, tag = 'input window, operand 1, single buffered']
    #allocation8 [shape = 's32[1]{0}', space=sflag, size = 0x4, scoped, tag = 'scoped memory for servenet_forward.1']
    #allocation9 [shape = 'u8[16384]{0}', space=vmem, size = 0x4000, scoped, tag = 'input window, operand 2, single buffered']
    #allocation10 [shape = 'u8[32768]{0}', space=vmem, size = 0x8000, scoped, tag = 'input window, operand 4, single buffered']
    #allocation11 [shape = 's32[1]{0}', space=sflag, size = 0x4, scoped, tag = 'scoped memory for servenet_forward.1']
    #allocation12 [shape = 'u8[16384]{0}', space=vmem, size = 0x4000, scoped, tag = 'input window, operand 5, single buffered']
    #allocation13 [shape = 'u8[16384]{0}', space=vmem, size = 0x4000, scoped, tag = 'input window, operand 6, single buffered']
    #allocation14 [shape = 's32[1]{0}', space=sflag, size = 0x4, scoped, tag = 'scoped memory for servenet_forward.1']
    #allocation15 [shape = 'u8[512]{0}', space=smem, size = 0x200, scoped, tag = 'input window, operand 8, single buffered']
    #allocation16 [shape = 'u8[8192]{0}', space=vmem, size = 0x2000, scoped, tag = 'input window, operand 9, single buffered']
    #allocation17 [shape = 'u8[1024]{0}', space=vmem, size = 0x400, scoped, tag = 'output window, operand 0, single buffered']
    %15 = vsyncpa [#allocation4], 0
    %16 = vsyncpa [#allocation8], 0
    %17 = vsyncpa [#allocation11], 0
    %18 = vsyncpa [#allocation14], 0
    %19 = vsyncpa [#allocation6], 0
    %20 = vsyncpa [#allocation5], 0
    // Predicated region
    $region2: #{servenet_forward.1} parent=1 // pred_check
      _
    $region3: #{servenet_forward.1} parent=1 // pred_check_branch
      %22 = sbr.rel (0) target = $region5
    $region4: #{servenet_forward.1} parent=1 // pred_region
      %s24 = ssub.s32 32, 32
      %25 = vsyncadd [#allocation4], %s24
      %s27 = sshll.u32 [#allocation3], 4
      %s28 = int_to_ptr.vmem [resolvable:$true] %s27
      %30 = dma.hbm_to_vmem [thread:$0]  %s0, 32, %s28, [#allocation4]
    $region5: #{servenet_forward.1} parent=1 // pred_fallthru
      _
    // Predicated region
    $region6: #{servenet_forward.1} parent=1 // pred_check
      _
    $region7: #{servenet_forward.1} parent=1 // pred_check_branch
      %32 = sbr.rel (0) target = $region9
    $region8: #{servenet_forward.1} parent=1 // pred_region
      %s34 = ssub.s32 256, 256
      %35 = vsyncadd [#allocation8], %s34
      %s36 = sshll.u32 [#allocation7], 4
      %s37 = int_to_ptr.vmem [resolvable:$true] %s36
      %42 = dma.hbm_to_vmem [thread:$0]  %s1, 256, %s37, [#allocation8], 128, 128, 8
    $region9: #{servenet_forward.1} parent=1 // pred_fallthru
      _
    // Predicated region
    $region10: #{servenet_forward.1} parent=1 // pred_check
      _
    $region11: #{servenet_forward.1} parent=1 // pred_check_branch
      %44 = sbr.rel (0) target = $region13
    $region12: #{servenet_forward.1} parent=1 // pred_region
      %s46 = ssub.s32 512, 512
      %47 = vsyncadd [#allocation8], %s46
      %s48 = sshll.u32 [#allocation9], 4
      %s49 = int_to_ptr.vmem [resolvable:$true] %s48
      %54 = dma.hbm_to_vmem [thread:$0]  %s2, 512, %s49, [#allocation8], 128, 128, 8
    $region13: #{servenet_forward.1} parent=1 // pred_fallthru
      _
    // Predicated region
    $region14: #{servenet_forward.1} parent=1 // pred_check
      _
    $region15: #{servenet_forward.1} parent=1 // pred_check_branch
      %56 = sbr.rel (0) target = $region17
    $region16: #{servenet_forward.1} parent=1 // pred_region
      _
    $region17: #{servenet_forward.1} parent=1 // pred_fallthru
      _
    // Predicated region
    $region18: #{servenet_forward.1} parent=1 // pred_check
      _
    $region19: #{servenet_forward.1} parent=1 // pred_check_branch
      %58 = sbr.rel (0) target = $region21
    $region20: #{servenet_forward.1} parent=1 // pred_region
      %s60 = ssub.s32 1024, 1024
      %61 = vsyncadd [#allocation11], %s60
      %s62 = sshll.u32 [#allocation10], 4
      %s63 = int_to_ptr.vmem [resolvable:$true] %s62
      %68 = dma.hbm_to_vmem [thread:$0]  %s4, 1024, %s63, [#allocation11], 256, 256, 16
    $region21: #{servenet_forward.1} parent=1 // pred_fallthru
      _
    // Predicated region
    $region22: #{servenet_forward.1} parent=1 // pred_check
      _
    $region23: #{servenet_forward.1} parent=1 // pred_check_branch
      %70 = sbr.rel (0) target = $region25
    $region24: #{servenet_forward.1} parent=1 // pred_region
      %s72 = ssub.s32 512, 512
      %73 = vsyncadd [#allocation11], %s72
      %s74 = sshll.u32 [#allocation12], 4
      %s75 = int_to_ptr.vmem [resolvable:$true] %s74
      %80 = dma.hbm_to_vmem [thread:$0]  %s5, 512, %s75, [#allocation11], 128, 128, 8
    $region25: #{servenet_forward.1} parent=1 // pred_fallthru
      _
    // Predicated region
    $region26: #{servenet_forward.1} parent=1 // pred_check
      _
    $region27: #{servenet_forward.1} parent=1 // pred_check_branch
      %82 = sbr.rel (0) target = $region29
    $region28: #{servenet_forward.1} parent=1 // pred_region
      %s84 = ssub.s32 512, 512
      %85 = vsyncadd [#allocation14], %s84
      %s86 = sshll.u32 [#allocation13], 4
      %s87 = int_to_ptr.vmem [resolvable:$true] %s86
      %92 = dma.hbm_to_vmem [thread:$0]  %s6, 512, %s87, [#allocation14], 128, 128, 8
    $region29: #{servenet_forward.1} parent=1 // pred_fallthru
      _
    // Predicated region
    $region30: #{servenet_forward.1} parent=1 // pred_check
      _
    $region31: #{servenet_forward.1} parent=1 // pred_check_branch
      %94 = sbr.rel (0) target = $region33
    $region32: #{servenet_forward.1} parent=1 // pred_region
      _
    $region33: #{servenet_forward.1} parent=1 // pred_fallthru
      _
    // Predicated region
    $region34: #{servenet_forward.1} parent=1 // pred_check
      _
    $region35: #{servenet_forward.1} parent=1 // pred_check_branch
      %96 = sbr.rel (0) target = $region37
    $region36: #{servenet_forward.1} parent=1 // pred_region
      %s98 = ssub.s32 16, 16
      %99 = vsyncadd [#allocation6], %s98
      %s101 = sshll.u32 %s8, 4
      %s102 = int_to_ptr.vmem [resolvable:$true] %s101
      %104 = dma.vmem_to_smem %s102, 16, [#allocation15], [#allocation6]
    $region37: #{servenet_forward.1} parent=1 // pred_fallthru
      _
    // Predicated region
    $region38: #{servenet_forward.1} parent=1 // pred_check
      _
    $region39: #{servenet_forward.1} parent=1 // pred_check_branch
      %106 = sbr.rel (0) target = $region41
    $region40: #{servenet_forward.1} parent=1 // pred_region
      %s108 = ssub.s32 256, 256
      %109 = vsyncadd [#allocation14], %s108
      %s110 = sshll.u32 [#allocation16], 4
      %s111 = int_to_ptr.vmem [resolvable:$true] %s110
      %116 = dma.hbm_to_vmem [thread:$0]  %s9, 256, %s111, [#allocation14], 128, 128, 8
    $region41: #{servenet_forward.1} parent=1 // pred_fallthru
      _
    // Predicated region
    $region42: #{servenet_forward.1} parent=1 // pred_check
      _
    $region43: #{servenet_forward.1} parent=1 // pred_check_branch
      %118 = sbr.rel (0) target = $region45
    $region44: #{servenet_forward.1} parent=1 // pred_region
      %119 = dma.done [#allocation4], 32
    $region45: #{servenet_forward.1} parent=1 // pred_fallthru
      _
    // Predicated region
    $region46: #{servenet_forward.1} parent=1 // pred_check
      _
    $region47: #{servenet_forward.1} parent=1 // pred_check_branch
      %121 = sbr.rel (0) target = $region49
    $region48: #{servenet_forward.1} parent=1 // pred_region
      %122 = dma.done [#allocation8], 256
    $region49: #{servenet_forward.1} parent=1 // pred_fallthru
      _
    // Predicated region
    $region50: #{servenet_forward.1} parent=1 // pred_check
      _
    $region51: #{servenet_forward.1} parent=1 // pred_check_branch
      %124 = sbr.rel (0) target = $region53
    $region52: #{servenet_forward.1} parent=1 // pred_region
      %125 = dma.done [#allocation8], 512
    $region53: #{servenet_forward.1} parent=1 // pred_fallthru
      _
    // Predicated region
    $region54: #{servenet_forward.1} parent=1 // pred_check
      _
    $region55: #{servenet_forward.1} parent=1 // pred_check_branch
      %127 = sbr.rel (0) target = $region57
    $region56: #{servenet_forward.1} parent=1 // pred_region
      %128 = dma.done [#allocation11], 1024
    $region57: #{servenet_forward.1} parent=1 // pred_fallthru
      _
    // Predicated region
    $region58: #{servenet_forward.1} parent=1 // pred_check
      _
    $region59: #{servenet_forward.1} parent=1 // pred_check_branch
      %130 = sbr.rel (0) target = $region61
    $region60: #{servenet_forward.1} parent=1 // pred_region
      %131 = dma.done [#allocation11], 512
    $region61: #{servenet_forward.1} parent=1 // pred_fallthru
      _
    // Predicated region
    $region62: #{servenet_forward.1} parent=1 // pred_check
      _
    $region63: #{servenet_forward.1} parent=1 // pred_check_branch
      %133 = sbr.rel (0) target = $region65
    $region64: #{servenet_forward.1} parent=1 // pred_region
      %134 = dma.done [#allocation14], 512
    $region65: #{servenet_forward.1} parent=1 // pred_fallthru
      _
    // Predicated region
    $region66: #{servenet_forward.1} parent=1 // pred_check
      _
    $region67: #{servenet_forward.1} parent=1 // pred_check_branch
      %136 = sbr.rel (0) target = $region69
    $region68: #{servenet_forward.1} parent=1 // pred_region
      %137 = dma.done [#allocation6], 16
    $region69: #{servenet_forward.1} parent=1 // pred_fallthru
      _
    // Predicated region
    $region70: #{servenet_forward.1} parent=1 // pred_check
      _
    $region71: #{servenet_forward.1} parent=1 // pred_check_branch
      %139 = sbr.rel (0) target = $region73
    $region72: #{servenet_forward.1} parent=1 // pred_region
      %140 = dma.done [#allocation14], 256
    $region73: #{servenet_forward.1} parent=1 // pred_fallthru
      _
    %141 = sfence
    %v142 = vld [vmem:[#allocation3] sm:$0x3]
    %v143 = vld [vmem:[#allocation9] sm:$0xff]
    %v144 = vld [vmem:[#allocation9 + $0x8] sm:$0xff]
    %v145 = vld [vmem:[#allocation9 + $0x10] sm:$0xff]
    %v146 = vld [vmem:[#allocation9 + $0x18] sm:$0xff]
    %v147 = vld [vmem:[%s3] sm:$0x1]
    %v149 = vlaneseq
    %v150 = vshrl.u32 %v149, 7
    %v151 = vsub.s32 0, %v150
    %v152 = vrot.slane %v147, %v151
    %vm154 = vcmask 261120
    %v156 = vsel %vm154, %v142, 0
    %158 = vmatprep.subr.mxu0 0.0
    %159 = vmatpush1.msra.mxu0 0.0
    %160 = vmatprep.subr.mxu0 0.0
    %161 = vmatpush1.msra.mxu0 0.0
    %162 = vmatprep.subr.mxu0 0.0
    %163 = vmatpush1.msra.mxu0 0.0
    %164 = vmatprep.subr.mxu0 0.0
    %165 = vmatpush1.msra.mxu0 0.0
    %166 = vmatprep.subr.mxu0 0.0
    %167 = vmatpush1.msra.mxu0 0.0
    %168 = vmatprep.subr.mxu0 0.0
    %169 = vmatpush1.msra.mxu0 0.0
    %170 = vmatprep.subr.mxu0 0.0
    %171 = vmatpush1.msra.mxu0 0.0
    %172 = vmatprep.subr.mxu0 0.0
    %173 = vmatpush1.msra.mxu0 0.0
    %174 = vmatprep.subr.mxu0 0.0
    %175 = vmatpush1.msra.mxu0 0.0
    %176 = vmatprep.subr.mxu0 0.0
    %177 = vmatpush1.msra.mxu0 0.0
    %178 = vmatprep.subr.mxu0 0.0
    %179 = vmatpush1.msra.mxu0 0.0
    %180 = vmatprep.subr.mxu0 0.0
    %181 = vmatpush1.msra.mxu0 0.0
    %182 = vmatprep.subr.mxu0 0.0
    %183 = vmatpush1.msra.mxu0 %v146
    %184 = vmatprep.subr.mxu0 0.0
    %185 = vmatpush1.msra.mxu0 %v145
    %186 = vmatprep.subr.mxu0 0.0
    %187 = vmatpush1.msra.mxu0 %v144
    %188 = vmatprep.subr.mxu0 0.0
    %189 = vmatpush1.msra.mxu0 %v143
    %190 = vmatprep.subr.mxu0 0.0
    %191 = vmatpush2.msra.mxu0 0.0
    %192 = vmatprep.subr.mxu0 0.0
    %193 = vmatpush2.msra.mxu0 0.0
    %194 = vmatprep.subr.mxu0 0.0
    %195 = vmatpush2.msra.mxu0 0.0
    %196 = vmatprep.subr.mxu0 0.0
    %197 = vmatpush2.msra.mxu0 0.0
    %198 = vmatprep.subr.mxu0 0.0
    %199 = vmatpush2.msra.mxu0 0.0
    %200 = vmatprep.subr.mxu0 0.0
    %201 = vmatpush2.msra.mxu0 0.0
    %202 = vmatprep.subr.mxu0 0.0
    %203 = vmatpush2.msra.mxu0 0.0
    %204 = vmatprep.subr.mxu0 0.0
    %205 = vmatpush2.msra.mxu0 0.0
    %206 = vmatprep.subr.mxu0 0.0
    %207 = vmatpush2.msra.mxu0 0.0
    %208 = vmatprep.subr.mxu0 0.0
    %209 = vmatpush2.msra.mxu0 0.0
    %210 = vmatprep.subr.mxu0 0.0
    %211 = vmatpush2.msra.mxu0 0.0
    %212 = vmatprep.subr.mxu0 0.0
    %213 = vmatpush2.msra.mxu0 0.0
    %214 = vmatprep.subr.mxu0 0.0
    %215 = vmatpush2.msra.mxu0 0.0
    %216 = vmatprep.subr.mxu0 0.0
    %217 = vmatpush2.msra.mxu0 0.0
    %218 = vmatprep.subr.mxu0 0.0
    %219 = vmatpush2.msra.mxu0 0.0
    %220 = vmatprep.subr.mxu0 0.0
    %221 = vmatpush2.msra.mxu0 0.0
    %222 = vmatprep.mubr.f32.mxu0 0.0
    %223 = vmatmul.mubr.f32.gmra.mxu0 %v156
    %v224 = vpop.f32.mrf.mxu0
    %v225 = vadd.f32 %v152, %v224
    %v226 = vpop.f32.mrf.mxu0
    %227 = vdwg.mxu0
    %v228 = vmax.f32 %v225, 0.0
    %v229 = vld [vmem:[#allocation10] sm:$0xff]
    %v230 = vld [vmem:[#allocation10 + $0x8] sm:$0xff]
    %v231 = vld [vmem:[#allocation10 + $0x10] sm:$0xff]
    %v232 = vld [vmem:[#allocation10 + $0x18] sm:$0xff]
    %v233 = vld [vmem:[#allocation10 + $0x20] sm:$0xff]
    %v234 = vld [vmem:[#allocation10 + $0x28] sm:$0xff]
    %v235 = vld [vmem:[#allocation10 + $0x30] sm:$0xff]
    %v236 = vld [vmem:[#allocation10 + $0x38] sm:$0xff]
    %v237 = vld [vmem:[%s7] sm:$0x3]
    %v238 = vld [vmem:[#allocation7] sm:$0xff]
    %v240 = vlaneseq
    %v241 = vshrl.u32 %v240, 7
    %v242 = vsub.s32 0, %v241
    %v243 = vrot.slane %v237, %v242
    %v244 = vlaneseq
    %v245 = vshrl.u32 %v244, 7
    %v246 = vsub.s32 1, %v245
    %v247 = vrot.slane %v237, %v246
    %v251 = vsel %vm154, %v238, 0
    %253 = vmatprep.subr.mxu0 0.0
    %254 = vmatpush1.msra.mxu0 0.0
    %255 = vmatprep.subr.mxu0 0.0
    %256 = vmatpush1.msra.mxu0 0.0
    %257 = vmatprep.subr.mxu0 0.0
    %258 = vmatpush1.msra.mxu0 0.0
    %259 = vmatprep.subr.mxu0 0.0
    %260 = vmatpush1.msra.mxu0 0.0
    %261 = vmatprep.subr.mxu0 0.0
    %262 = vmatpush1.msra.mxu0 0.0
    %263 = vmatprep.subr.mxu0 0.0
    %264 = vmatpush1.msra.mxu0 0.0
    %265 = vmatprep.subr.mxu0 0.0
    %266 = vmatpush1.msra.mxu0 0.0
    %267 = vmatprep.subr.mxu0 0.0
    %268 = vmatpush1.msra.mxu0 0.0
    %269 = vmatprep.subr.mxu0 0.0
    %270 = vmatpush1.msra.mxu0 0.0
    %271 = vmatprep.subr.mxu0 0.0
    %272 = vmatpush1.msra.mxu0 0.0
    %273 = vmatprep.subr.mxu0 0.0
    %274 = vmatpush1.msra.mxu0 0.0
    %275 = vmatprep.subr.mxu0 0.0
    %276 = vmatpush1.msra.mxu0 0.0
    %277 = vmatprep.subr.mxu0 %v236
    %278 = vmatpush1.msra.mxu0 %v235
    %279 = vmatprep.subr.mxu0 %v234
    %280 = vmatpush1.msra.mxu0 %v233
    %281 = vmatprep.subr.mxu0 %v232
    %282 = vmatpush1.msra.mxu0 %v231
    %283 = vmatprep.subr.mxu0 %v230
    %284 = vmatpush1.msra.mxu0 %v229
    %285 = vmatprep.subr.mxu0 0.0
    %286 = vmatpush2.msra.mxu0 0.0
    %287 = vmatprep.subr.mxu0 0.0
    %288 = vmatpush2.msra.mxu0 0.0
    %289 = vmatprep.subr.mxu0 0.0
    %290 = vmatpush2.msra.mxu0 0.0
    %291 = vmatprep.subr.mxu0 0.0
    %292 = vmatpush2.msra.mxu0 0.0
    %293 = vmatprep.subr.mxu0 0.0
    %294 = vmatpush2.msra.mxu0 0.0
    %295 = vmatprep.subr.mxu0 0.0
    %296 = vmatpush2.msra.mxu0 0.0
    %297 = vmatprep.subr.mxu0 0.0
    %298 = vmatpush2.msra.mxu0 0.0
    %299 = vmatprep.subr.mxu0 0.0
    %300 = vmatpush2.msra.mxu0 0.0
    %301 = vmatprep.subr.mxu0 0.0
    %302 = vmatpush2.msra.mxu0 0.0
    %303 = vmatprep.subr.mxu0 0.0
    %304 = vmatpush2.msra.mxu0 0.0
    %305 = vmatprep.subr.mxu0 0.0
    %306 = vmatpush2.msra.mxu0 0.0
    %307 = vmatprep.subr.mxu0 0.0
    %308 = vmatpush2.msra.mxu0 0.0
    %309 = vmatprep.subr.mxu0 0.0
    %310 = vmatpush2.msra.mxu0 0.0
    %311 = vmatprep.subr.mxu0 0.0
    %312 = vmatpush2.msra.mxu0 0.0
    %313 = vmatprep.subr.mxu0 0.0
    %314 = vmatpush2.msra.mxu0 0.0
    %315 = vmatprep.subr.mxu0 0.0
    %316 = vmatpush2.msra.mxu0 0.0
    %317 = vmatprep.mubr.f32.mxu0 0.0
    %318 = vmatmul.mubr.f32.gmra.mxu0 %v251
    %v319 = vpop.f32.mrf.mxu0
    %v320 = vadd.f32 %v243, %v319
    %v321 = vpop.f32.mrf.mxu0
    %v322 = vadd.f32 %v247, %v321
    %323 = vdwg.mxu0
    %v326 = vcombine.low %v320, %v322
    %v327 = vcombine.high %v320, %v322
    %v329 = vunpack.c.l.s4 1966171168
    %v330 = vunpack.c.0.s8 %v329
    %v331 = vlaneseq
    %v332 = vshrl.u32 %v331, 7
    %v333 = vsub.s32 %v330, %v332
    %v334 = vrot.slane %v326, %v333
    %v336 = vunpack.c.l.s4 1966171168
    %v337 = vunpack.c.0.s8 %v336
    %v338 = vlaneseq
    %v339 = vshrl.u32 %v338, 7
    %v340 = vsub.s32 %v337, %v339
    %v341 = vrot.slane %v327, %v340
    %v342 = vcombine.high %v334, %v334
    %v343 = vcombine.high %v341, %v341
    %v345 = vunpack.c.l.s4 1966171168
    %v346 = vunpack.c.0.s8 %v345
    %v347 = vlaneseq
    %v348 = vshrl.u32 %v347, 7
    %v349 = vsub.s32 %v346, %v348
    %v350 = vrot.slane %v334, %v349
    %v352 = vunpack.c.l.s4 1966171168
    %v353 = vunpack.c.0.s8 %v352
    %v354 = vlaneseq
    %v355 = vshrl.u32 %v354, 7
    %v356 = vsub.s32 %v353, %v355
    %v357 = vrot.slane %v341, %v356
    %v359 = vunpack.c.l.s4 1966171168
    %v360 = vunpack.c.0.s8 %v359
    %v361 = vlaneseq
    %v362 = vshrl.u32 %v361, 7
    %v363 = vsub.s32 %v360, %v362
    %v364 = vrot.slane %v342, %v363
    %v366 = vunpack.c.l.s4 1966171168
    %v367 = vunpack.c.0.s8 %v366
    %v368 = vlaneseq
    %v369 = vshrl.u32 %v368, 7
    %v370 = vsub.s32 %v367, %v369
    %v371 = vrot.slane %v343, %v370
    %v372 = vcombine.high %v350, %v350
    %v373 = vcombine.high %v357, %v357
    %v374 = vcombine.high %v364, %v364
    %v375 = vcombine.high %v371, %v371
    %v384 = vlaneseq
    %vm385 = vcmp.ge.s32.totalorder %v384, 0
    %vm386 = vcmp.lt.s32.totalorder %v384, 256
    %vm387 = vmand %vm385, %vm386
    %388 = vst.msk [vmem:[#allocation2] ss:$2 sm:$0x3] %vm387, %v350
    %s389 = scalar_lea.vmem [#allocation2], 4
    %390 = vst.msk [vmem:[%s389] ss:$2 sm:$0x3] %vm387, %v364
    %s391 = scalar_lea.vmem [#allocation2], 8
    %392 = vst.msk [vmem:[%s391] ss:$2 sm:$0x3] %vm387, %v372
    %s393 = scalar_lea.vmem [#allocation2], 12
    %394 = vst.msk [vmem:[%s393] ss:$2 sm:$0x3] %vm387, %v374
    %s395 = scalar_lea.vmem [#allocation2], 16
    %396 = vst.msk [vmem:[%s395] ss:$2 sm:$0x3] %vm387, %v357
    %s397 = scalar_lea.vmem [#allocation2], 20
    %398 = vst.msk [vmem:[%s397] ss:$2 sm:$0x3] %vm387, %v371
    %s399 = scalar_lea.vmem [#allocation2], 24
    %400 = vst.msk [vmem:[%s399] ss:$2 sm:$0x3] %vm387, %v373
    %s401 = scalar_lea.vmem [#allocation2], 28
    %402 = vst.msk [vmem:[%s401] ss:$2 sm:$0x3] %vm387, %v375
    %s403 = scalar_lea.vmem [#allocation7], 8
    %v404 = vld [vmem:[%s403] sm:$0xff]
    %v406 = vsel %vm154, %v404, 0
    %408 = vmatprep.subr.mxu0 0.0
    %409 = vmatpush1.msra.mxu0 0.0
    %410 = vmatprep.subr.mxu0 0.0
    %411 = vmatpush1.msra.mxu0 0.0
    %412 = vmatprep.subr.mxu0 0.0
    %413 = vmatpush1.msra.mxu0 0.0
    %414 = vmatprep.subr.mxu0 0.0
    %415 = vmatpush1.msra.mxu0 0.0
    %416 = vmatprep.subr.mxu0 0.0
    %417 = vmatpush1.msra.mxu0 0.0
    %418 = vmatprep.subr.mxu0 0.0
    %419 = vmatpush1.msra.mxu0 0.0
    %420 = vmatprep.subr.mxu0 0.0
    %421 = vmatpush1.msra.mxu0 0.0
    %422 = vmatprep.subr.mxu0 0.0
    %423 = vmatpush1.msra.mxu0 0.0
    %424 = vmatprep.subr.mxu0 0.0
    %425 = vmatpush1.msra.mxu0 0.0
    %426 = vmatprep.subr.mxu0 0.0
    %427 = vmatpush1.msra.mxu0 0.0
    %428 = vmatprep.subr.mxu0 0.0
    %429 = vmatpush1.msra.mxu0 0.0
    %430 = vmatprep.subr.mxu0 0.0
    %431 = vmatpush1.msra.mxu0 0.0
    %432 = vmatprep.subr.mxu0 %v236
    %433 = vmatpush1.msra.mxu0 %v235
    %434 = vmatprep.subr.mxu0 %v234
    %435 = vmatpush1.msra.mxu0 %v233
    %436 = vmatprep.subr.mxu0 %v232
    %437 = vmatpush1.msra.mxu0 %v231
    %438 = vmatprep.subr.mxu0 %v230
    %439 = vmatpush1.msra.mxu0 %v229
    %440 = vmatprep.subr.mxu0 0.0
    %441 = vmatpush2.msra.mxu0 0.0
    %442 = vmatprep.subr.mxu0 0.0
    %443 = vmatpush2.msra.mxu0 0.0
    %444 = vmatprep.subr.mxu0 0.0
    %445 = vmatpush2.msra.mxu0 0.0
    %446 = vmatprep.subr.mxu0 0.0
    %447 = vmatpush2.msra.mxu0 0.0
    %448 = vmatprep.subr.mxu0 0.0
    %449 = vmatpush2.msra.mxu0 0.0
    %450 = vmatprep.subr.mxu0 0.0
    %451 = vmatpush2.msra.mxu0 0.0
    %452 = vmatprep.subr.mxu0 0.0
    %453 = vmatpush2.msra.mxu0 0.0
    %454 = vmatprep.subr.mxu0 0.0
    %455 = vmatpush2.msra.mxu0 0.0
    %456 = vmatprep.subr.mxu0 0.0
    %457 = vmatpush2.msra.mxu0 0.0
    %458 = vmatprep.subr.mxu0 0.0
    %459 = vmatpush2.msra.mxu0 0.0
    %460 = vmatprep.subr.mxu0 0.0
    %461 = vmatpush2.msra.mxu0 0.0
    %462 = vmatprep.subr.mxu0 0.0
    %463 = vmatpush2.msra.mxu0 0.0
    %464 = vmatprep.subr.mxu0 0.0
    %465 = vmatpush2.msra.mxu0 0.0
    %466 = vmatprep.subr.mxu0 0.0
    %467 = vmatpush2.msra.mxu0 0.0
    %468 = vmatprep.subr.mxu0 0.0
    %469 = vmatpush2.msra.mxu0 0.0
    %470 = vmatprep.subr.mxu0 0.0
    %471 = vmatpush2.msra.mxu0 0.0
    %472 = vmatprep.mubr.f32.mxu0 0.0
    %473 = vmatmul.mubr.f32.gmra.mxu0 %v406
    %v474 = vpop.f32.mrf.mxu0
    %v475 = vadd.f32 %v243, %v474
    %v476 = vpop.f32.mrf.mxu0
    %v477 = vadd.f32 %v247, %v476
    %478 = vdwg.mxu0
    %v481 = vcombine.low %v475, %v477
    %v482 = vcombine.high %v475, %v477
    %v484 = vunpack.c.l.s4 1966171168
    %v485 = vunpack.c.0.s8 %v484
    %v486 = vlaneseq
    %v487 = vshrl.u32 %v486, 7
    %v488 = vsub.s32 %v485, %v487
    %v489 = vrot.slane %v481, %v488
    %v491 = vunpack.c.l.s4 1966171168
    %v492 = vunpack.c.0.s8 %v491
    %v493 = vlaneseq
    %v494 = vshrl.u32 %v493, 7
    %v495 = vsub.s32 %v492, %v494
    %v496 = vrot.slane %v482, %v495
    %v497 = vcombine.high %v489, %v489
    %v498 = vcombine.high %v496, %v496
    %v500 = vunpack.c.l.s4 1966171168
    %v501 = vunpack.c.0.s8 %v500
    %v502 = vlaneseq
    %v503 = vshrl.u32 %v502, 7
    %v504 = vsub.s32 %v501, %v503
    %v505 = vrot.slane %v489, %v504
    %v507 = vunpack.c.l.s4 1966171168
    %v508 = vunpack.c.0.s8 %v507
    %v509 = vlaneseq
    %v510 = vshrl.u32 %v509, 7
    %v511 = vsub.s32 %v508, %v510
    %v512 = vrot.slane %v496, %v511
    %v514 = vunpack.c.l.s4 1966171168
    %v515 = vunpack.c.0.s8 %v514
    %v516 = vlaneseq
    %v517 = vshrl.u32 %v516, 7
    %v518 = vsub.s32 %v515, %v517
    %v519 = vrot.slane %v497, %v518
    %v521 = vunpack.c.l.s4 1966171168
    %v522 = vunpack.c.0.s8 %v521
    %v523 = vlaneseq
    %v524 = vshrl.u32 %v523, 7
    %v525 = vsub.s32 %v522, %v524
    %v526 = vrot.slane %v498, %v525
    %v527 = vcombine.high %v505, %v505
    %v528 = vcombine.high %v512, %v512
    %v529 = vcombine.high %v519, %v519
    %v530 = vcombine.high %v526, %v526
    %s539 = scalar_lea.vmem [#allocation2], 1
    %540 = vst.msk [vmem:[%s539] ss:$2 sm:$0x3] %vm387, %v505
    %s541 = scalar_lea.vmem [#allocation2], 5
    %542 = vst.msk [vmem:[%s541] ss:$2 sm:$0x3] %vm387, %v519
    %s543 = scalar_lea.vmem [#allocation2], 9
    %544 = vst.msk [vmem:[%s543] ss:$2 sm:$0x3] %vm387, %v527
    %s545 = scalar_lea.vmem [#allocation2], 13
    %546 = vst.msk [vmem:[%s545] ss:$2 sm:$0x3] %vm387, %v529
    %s547 = scalar_lea.vmem [#allocation2], 17
    %548 = vst.msk [vmem:[%s547] ss:$2 sm:$0x3] %vm387, %v512
    %s549 = scalar_lea.vmem [#allocation2], 21
    %550 = vst.msk [vmem:[%s549] ss:$2 sm:$0x3] %vm387, %v526
    %s551 = scalar_lea.vmem [#allocation2], 25
    %552 = vst.msk [vmem:[%s551] ss:$2 sm:$0x3] %vm387, %v528
    %s553 = scalar_lea.vmem [#allocation2], 29
    %554 = vst.msk [vmem:[%s553] ss:$2 sm:$0x3] %vm387, %v530
    %v555 = vld [vmem:[#allocation12] sm:$0xff]
    %v556 = vld [vmem:[#allocation12 + $0x8] sm:$0xff]
    %v557 = vld [vmem:[#allocation12 + $0x10] sm:$0xff]
    %v558 = vld [vmem:[#allocation12 + $0x18] sm:$0xff]
    %v559 = vld [vmem:[#allocation13] sm:$0xff]
    %v560 = vld [vmem:[#allocation13 + $0x8] sm:$0xff]
    %v561 = vld [vmem:[#allocation13 + $0x10] sm:$0xff]
    %v562 = vld [vmem:[#allocation13 + $0x18] sm:$0xff]
    %v563 = vld [vmem:[#allocation2] sm:$0xf]
    %s564 = scalar_lea.vmem [#allocation2], 28
    %v565 = vld [vmem:[%s564] sm:$0xf]
    %v567 = vsel %vm154, 0.0, 0
    %569 = vmatprep.subr.mxu0 0.0
    %570 = vmatpush1.msra.mxu0 0.0
    %571 = vmatprep.subr.mxu0 0.0
    %572 = vmatpush1.msra.mxu0 0.0
    %573 = vmatprep.subr.mxu0 0.0
    %574 = vmatpush1.msra.mxu0 0.0
    %575 = vmatprep.subr.mxu0 0.0
    %576 = vmatpush1.msra.mxu0 0.0
    %577 = vmatprep.subr.mxu0 0.0
    %578 = vmatpush1.msra.mxu0 0.0
    %579 = vmatprep.subr.mxu0 0.0
    %580 = vmatpush1.msra.mxu0 0.0
    %581 = vmatprep.subr.mxu0 0.0
    %582 = vmatpush1.msra.mxu0 0.0
    %583 = vmatprep.subr.mxu0 0.0
    %584 = vmatpush1.msra.mxu0 0.0
    %585 = vmatprep.subr.mxu0 0.0
    %586 = vmatpush1.msra.mxu0 0.0
    %587 = vmatprep.subr.mxu0 0.0
    %588 = vmatpush1.msra.mxu0 0.0
    %589 = vmatprep.subr.mxu0 0.0
    %590 = vmatpush1.msra.mxu0 0.0
    %591 = vmatprep.subr.mxu0 0.0
    %592 = vmatpush1.msra.mxu0 0.0
    %593 = vmatprep.subr.mxu0 0.0
    %594 = vmatpush1.msra.mxu0 %v558
    %595 = vmatprep.subr.mxu0 0.0
    %596 = vmatpush1.msra.mxu0 %v557
    %597 = vmatprep.subr.mxu0 0.0
    %598 = vmatpush1.msra.mxu0 %v556
    %599 = vmatprep.subr.mxu0 0.0
    %600 = vmatpush1.msra.mxu0 %v555
    %601 = vmatprep.subr.mxu0 0.0
    %602 = vmatpush2.msra.mxu0 0.0
    %603 = vmatprep.subr.mxu0 0.0
    %604 = vmatpush2.msra.mxu0 0.0
    %605 = vmatprep.subr.mxu0 0.0
    %606 = vmatpush2.msra.mxu0 0.0
    %607 = vmatprep.subr.mxu0 0.0
    %608 = vmatpush2.msra.mxu0 0.0
    %609 = vmatprep.subr.mxu0 0.0
    %610 = vmatpush2.msra.mxu0 0.0
    %611 = vmatprep.subr.mxu0 0.0
    %612 = vmatpush2.msra.mxu0 0.0
    %613 = vmatprep.subr.mxu0 0.0
    %614 = vmatpush2.msra.mxu0 0.0
    %615 = vmatprep.subr.mxu0 0.0
    %616 = vmatpush2.msra.mxu0 0.0
    %617 = vmatprep.subr.mxu0 0.0
    %618 = vmatpush2.msra.mxu0 0.0
    %619 = vmatprep.subr.mxu0 0.0
    %620 = vmatpush2.msra.mxu0 0.0
    %621 = vmatprep.subr.mxu0 0.0
    %622 = vmatpush2.msra.mxu0 0.0
    %623 = vmatprep.subr.mxu0 0.0
    %624 = vmatpush2.msra.mxu0 0.0
    %625 = vmatprep.subr.mxu0 0.0
    %626 = vmatpush2.msra.mxu0 0.0
    %627 = vmatprep.subr.mxu0 0.0
    %628 = vmatpush2.msra.mxu0 0.0
    %629 = vmatprep.subr.mxu0 0.0
    %630 = vmatpush2.msra.mxu0 0.0
    %631 = vmatprep.subr.mxu0 0.0
    %632 = vmatpush2.msra.mxu0 0.0
    %633 = vmatprep.mubr.f32.mxu0 0.0
    %634 = vmatmul.mubr.f32.gmra.mxu0 %v567
    %v635 = vpop.f32.mrf.mxu0
    %v636 = vadd.f32 0.0, %v635
    %v637 = vpop.f32.mrf.mxu0
    %638 = vdwg.mxu0
    %v639 = vadd.f32 %v563, %v636
    %640 = vmatprep.subr.mxu0 0.0
    %641 = vmatpush1.msra.mxu0 0.0
    %642 = vmatprep.subr.mxu0 0.0
    %643 = vmatpush1.msra.mxu0 0.0
    %644 = vmatprep.subr.mxu0 0.0
    %645 = vmatpush1.msra.mxu0 0.0
    %646 = vmatprep.subr.mxu0 0.0
    %647 = vmatpush1.msra.mxu0 0.0
    %648 = vmatprep.subr.mxu0 0.0
    %649 = vmatpush1.msra.mxu0 0.0
    %650 = vmatprep.subr.mxu0 0.0
    %651 = vmatpush1.msra.mxu0 0.0
    %652 = vmatprep.subr.mxu0 0.0
    %653 = vmatpush1.msra.mxu0 0.0
    %654 = vmatprep.subr.mxu0 0.0
    %655 = vmatpush1.msra.mxu0 0.0
    %656 = vmatprep.subr.mxu0 0.0
    %657 = vmatpush1.msra.mxu0 0.0
    %658 = vmatprep.subr.mxu0 0.0
    %659 = vmatpush1.msra.mxu0 0.0
    %660 = vmatprep.subr.mxu0 0.0
    %661 = vmatpush1.msra.mxu0 0.0
    %662 = vmatprep.subr.mxu0 0.0
    %663 = vmatpush1.msra.mxu0 0.0
    %664 = vmatprep.subr.mxu0 0.0
    %665 = vmatpush1.msra.mxu0 %v562
    %666 = vmatprep.subr.mxu0 0.0
    %667 = vmatpush1.msra.mxu0 %v561
    %668 = vmatprep.subr.mxu0 0.0
    %669 = vmatpush1.msra.mxu0 %v560
    %670 = vmatprep.subr.mxu0 0.0
    %671 = vmatpush1.msra.mxu0 %v559
    %672 = vmatprep.subr.mxu0 0.0
    %673 = vmatpush2.msra.mxu0 0.0
    %674 = vmatprep.subr.mxu0 0.0
    %675 = vmatpush2.msra.mxu0 0.0
    %676 = vmatprep.subr.mxu0 0.0
    %677 = vmatpush2.msra.mxu0 0.0
    %678 = vmatprep.subr.mxu0 0.0
    %679 = vmatpush2.msra.mxu0 0.0
    %680 = vmatprep.subr.mxu0 0.0
    %681 = vmatpush2.msra.mxu0 0.0
    %682 = vmatprep.subr.mxu0 0.0
    %683 = vmatpush2.msra.mxu0 0.0
    %684 = vmatprep.subr.mxu0 0.0
    %685 = vmatpush2.msra.mxu0 0.0
    %686 = vmatprep.subr.mxu0 0.0
    %687 = vmatpush2.msra.mxu0 0.0
    %688 = vmatprep.subr.mxu0 0.0
    %689 = vmatpush2.msra.mxu0 0.0
    %690 = vmatprep.subr.mxu0 0.0
    %691 = vmatpush2.msra.mxu0 0.0
    %692 = vmatprep.subr.mxu0 0.0
    %693 = vmatpush2.msra.mxu0 0.0
    %694 = vmatprep.subr.mxu0 0.0
    %695 = vmatpush2.msra.mxu0 0.0
    %696 = vmatprep.subr.mxu0 0.0
    %697 = vmatpush2.msra.mxu0 0.0
    %698 = vmatprep.subr.mxu0 0.0
    %699 = vmatpush2.msra.mxu0 0.0
    %700 = vmatprep.subr.mxu0 0.0
    %701 = vmatpush2.msra.mxu0 0.0
    %702 = vmatprep.subr.mxu0 0.0
    %703 = vmatpush2.msra.mxu0 0.0
    %704 = vmatprep.mubr.f32.mxu0 0.0
    %705 = vmatmul.mubr.f32.gmra.mxu0 %v567
    %v706 = vpop.f32.mrf.mxu0
    %v707 = vadd.f32 0.0, %v706
    %v708 = vpop.f32.mrf.mxu0
    %709 = vdwg.mxu0
    %v711 = vrot.slane %v565, 2
    %v713 = vadd.f32 %v711, %v707
    %v714 = vxor.u32 %v639, 2147483648
    %v715 = vmul.f32 %v714, 1.442695
    %v716 = vpow.pop %v715
    %v717 = vadd.f32 %v716, 1.0
    %v718 = vrcp.pop %v717
    %v719 = vmul.f32 1.0, %v718
    %v720 = vtanh.pop %v639
    %v721 = vmul.f32 %v719, 0.0
    %723 = vrot.lane.b32.xlu0 %v720, 64
    %v724 = vpop.permute.xlu0 %723
    %v726 = vmul.f32 %v719, %v724
    %728 = vrot.lane.b32.xlu0 %v726, 32
    %v729 = vpop.permute.xlu0 %728
    %v731 = vadd.f32 %v721, %v729
    %v732 = vtanh.pop %v731
    %734 = vrot.lane.b32.xlu0 %v732, 64
    %v735 = vpop.permute.xlu0 %734
    %v737 = vmul.f32 %v719, %v735
    %v738 = vxor.u32 %v713, 2147483648
    %v739 = vmul.f32 %v738, 1.442695
    %v740 = vpow.pop %v739
    %v741 = vadd.f32 %v740, 1.0
    %v742 = vrcp.pop %v741
    %v743 = vmul.f32 1.0, %v742
    %v744 = vtanh.pop %v713
    %v745 = vmul.f32 %v743, 0.0
    %747 = vrot.lane.b32.xlu0 %v744, 64
    %v748 = vpop.permute.xlu0 %747
    %v750 = vmul.f32 %v743, %v748
    %752 = vrot.lane.b32.xlu0 %v750, 32
    %v753 = vpop.permute.xlu0 %752
    %v755 = vadd.f32 %v745, %v753
    %v756 = vtanh.pop %v755
    %758 = vrot.lane.b32.xlu0 %v756, 64
    %v759 = vpop.permute.xlu0 %758
    %v761 = vmul.f32 %v743, %v759
    %s762 = scalar_lea.vmem [#allocation2], 4
    %v763 = vld [vmem:[%s762] sm:$0xf]
    %s764 = scalar_lea.vmem [#allocation2], 24
    %v765 = vld [vmem:[%s764] sm:$0xf]
    %v768 = vunpack.c.l.s4 1983009808
    %v769 = vunpack.c.0.s8 %v768
    %v770 = vlaneseq
    %v771 = vshrl.u32 %v770, 7
    %v772 = vsub.s32 %v769, %v771
    %v773 = vrot.slane %v737, %v772
    %774 = vrot.lane.b32.xlu0 %v773, 32
    %v775 = vpop.permute.xlu0 %774
    %v776 = vsel %vm154, %v775, 0
    %778 = vmatprep.subr.mxu0 0.0
    %779 = vmatpush1.msra.mxu0 0.0
    %780 = vmatprep.subr.mxu0 0.0
    %781 = vmatpush1.msra.mxu0 0.0
    %782 = vmatprep.subr.mxu0 0.0
    %783 = vmatpush1.msra.mxu0 0.0
    %784 = vmatprep.subr.mxu0 0.0
    %785 = vmatpush1.msra.mxu0 0.0
    %786 = vmatprep.subr.mxu0 0.0
    %787 = vmatpush1.msra.mxu0 0.0
    %788 = vmatprep.subr.mxu0 0.0
    %789 = vmatpush1.msra.mxu0 0.0
    %790 = vmatprep.subr.mxu0 0.0
    %791 = vmatpush1.msra.mxu0 0.0
    %792 = vmatprep.subr.mxu0 0.0
    %793 = vmatpush1.msra.mxu0 0.0
    %794 = vmatprep.subr.mxu0 0.0
    %795 = vmatpush1.msra.mxu0 0.0
    %796 = vmatprep.subr.mxu0 0.0
    %797 = vmatpush1.msra.mxu0 0.0
    %798 = vmatprep.subr.mxu0 0.0
    %799 = vmatpush1.msra.mxu0 0.0
    %800 = vmatprep.subr.mxu0 0.0
    %801 = vmatpush1.msra.mxu0 0.0
    %802 = vmatprep.subr.mxu0 0.0
    %803 = vmatpush1.msra.mxu0 %v558
    %804 = vmatprep.subr.mxu0 0.0
    %805 = vmatpush1.msra.mxu0 %v557
    %806 = vmatprep.subr.mxu0 0.0
    %807 = vmatpush1.msra.mxu0 %v556
    %808 = vmatprep.subr.mxu0 0.0
    %809 = vmatpush1.msra.mxu0 %v555
    %810 = vmatprep.subr.mxu0 0.0
    %811 = vmatpush2.msra.mxu0 0.0
    %812 = vmatprep.subr.mxu0 0.0
    %813 = vmatpush2.msra.mxu0 0.0
    %814 = vmatprep.subr.mxu0 0.0
    %815 = vmatpush2.msra.mxu0 0.0
    %816 = vmatprep.subr.mxu0 0.0
    %817 = vmatpush2.msra.mxu0 0.0
    %818 = vmatprep.subr.mxu0 0.0
    %819 = vmatpush2.msra.mxu0 0.0
    %820 = vmatprep.subr.mxu0 0.0
    %821 = vmatpush2.msra.mxu0 0.0
    %822 = vmatprep.subr.mxu0 0.0
    %823 = vmatpush2.msra.mxu0 0.0
    %824 = vmatprep.subr.mxu0 0.0
    %825 = vmatpush2.msra.mxu0 0.0
    %826 = vmatprep.subr.mxu0 0.0
    %827 = vmatpush2.msra.mxu0 0.0
    %828 = vmatprep.subr.mxu0 0.0
    %829 = vmatpush2.msra.mxu0 0.0
    %830 = vmatprep.subr.mxu0 0.0
    %831 = vmatpush2.msra.mxu0 0.0
    %832 = vmatprep.subr.mxu0 0.0
    %833 = vmatpush2.msra.mxu0 0.0
    %834 = vmatprep.subr.mxu0 0.0
    %835 = vmatpush2.msra.mxu0 0.0
    %836 = vmatprep.subr.mxu0 0.0
    %837 = vmatpush2.msra.mxu0 0.0
    %838 = vmatprep.subr.mxu0 0.0
    %839 = vmatpush2.msra.mxu0 0.0
    %840 = vmatprep.subr.mxu0 0.0
    %841 = vmatpush2.msra.mxu0 0.0
    %842 = vmatprep.mubr.f32.mxu0 0.0
    %843 = vmatmul.mubr.f32.gmra.mxu0 %v776
    %v844 = vpop.f32.mrf.mxu0
    %v845 = vadd.f32 0.0, %v844
    %v846 = vpop.f32.mrf.mxu0
    %847 = vdwg.mxu0
    %v848 = vadd.f32 %v763, %v845
    %v851 = vunpack.c.l.s4 1983009808
    %v852 = vunpack.c.0.s8 %v851
    %v853 = vlaneseq
    %v854 = vshrl.u32 %v853, 7
    %v855 = vsub.s32 %v852, %v854
    %v856 = vrot.slane %v761, %v855
    %857 = vrot.lane.b32.xlu0 %v856, 32
    %v858 = vpop.permute.xlu0 %857
    %v859 = vsel %vm154, %v858, 0
    %861 = vmatprep.subr.mxu0 0.0
    %862 = vmatpush1.msra.mxu0 0.0
    %863 = vmatprep.subr.mxu0 0.0
    %864 = vmatpush1.msra.mxu0 0.0
    %865 = vmatprep.subr.mxu0 0.0
    %866 = vmatpush1.msra.mxu0 0.0
    %867 = vmatprep.subr.mxu0 0.0
    %868 = vmatpush1.msra.mxu0 0.0
    %869 = vmatprep.subr.mxu0 0.0
    %870 = vmatpush1.msra.mxu0 0.0
    %871 = vmatprep.subr.mxu0 0.0
    %872 = vmatpush1.msra.mxu0 0.0
    %873 = vmatprep.subr.mxu0 0.0
    %874 = vmatpush1.msra.mxu0 0.0
    %875 = vmatprep.subr.mxu0 0.0
    %876 = vmatpush1.msra.mxu0 0.0
    %877 = vmatprep.subr.mxu0 0.0
    %878 = vmatpush1.msra.mxu0 0.0
    %879 = vmatprep.subr.mxu0 0.0
    %880 = vmatpush1.msra.mxu0 0.0
    %881 = vmatprep.subr.mxu0 0.0
    %882 = vmatpush1.msra.mxu0 0.0
    %883 = vmatprep.subr.mxu0 0.0
    %884 = vmatpush1.msra.mxu0 0.0
    %885 = vmatprep.subr.mxu0 0.0
    %886 = vmatpush1.msra.mxu0 %v562
    %887 = vmatprep.subr.mxu0 0.0
    %888 = vmatpush1.msra.mxu0 %v561
    %889 = vmatprep.subr.mxu0 0.0
    %890 = vmatpush1.msra.mxu0 %v560
    %891 = vmatprep.subr.mxu0 0.0
    %892 = vmatpush1.msra.mxu0 %v559
    %893 = vmatprep.subr.mxu0 0.0
    %894 = vmatpush2.msra.mxu0 0.0
    %895 = vmatprep.subr.mxu0 0.0
    %896 = vmatpush2.msra.mxu0 0.0
    %897 = vmatprep.subr.mxu0 0.0
    %898 = vmatpush2.msra.mxu0 0.0
    %899 = vmatprep.subr.mxu0 0.0
    %900 = vmatpush2.msra.mxu0 0.0
    %901 = vmatprep.subr.mxu0 0.0
    %902 = vmatpush2.msra.mxu0 0.0
    %903 = vmatprep.subr.mxu0 0.0
    %904 = vmatpush2.msra.mxu0 0.0
    %905 = vmatprep.subr.mxu0 0.0
    %906 = vmatpush2.msra.mxu0 0.0
    %907 = vmatprep.subr.mxu0 0.0
    %908 = vmatpush2.msra.mxu0 0.0
    %909 = vmatprep.subr.mxu0 0.0
    %910 = vmatpush2.msra.mxu0 0.0
    %911 = vmatprep.subr.mxu0 0.0
    %912 = vmatpush2.msra.mxu0 0.0
    %913 = vmatprep.subr.mxu0 0.0
    %914 = vmatpush2.msra.mxu0 0.0
    %915 = vmatprep.subr.mxu0 0.0
    %916 = vmatpush2.msra.mxu0 0.0
    %917 = vmatprep.subr.mxu0 0.0
    %918 = vmatpush2.msra.mxu0 0.0
    %919 = vmatprep.subr.mxu0 0.0
    %920 = vmatpush2.msra.mxu0 0.0
    %921 = vmatprep.subr.mxu0 0.0
    %922 = vmatpush2.msra.mxu0 0.0
    %923 = vmatprep.subr.mxu0 0.0
    %924 = vmatpush2.msra.mxu0 0.0
    %925 = vmatprep.mubr.f32.mxu0 0.0
    %926 = vmatmul.mubr.f32.gmra.mxu0 %v859
    %v927 = vpop.f32.mrf.mxu0
    %v928 = vadd.f32 0.0, %v927
    %v929 = vpop.f32.mrf.mxu0
    %930 = vdwg.mxu0
    %v932 = vrot.slane %v765, 2
    %v934 = vadd.f32 %v932, %v928
    %v935 = vxor.u32 %v848, 2147483648
    %v936 = vmul.f32 %v935, 1.442695
    %v937 = vpow.pop %v936
    %v938 = vadd.f32 %v937, 1.0
    %v939 = vrcp.pop %v938
    %v940 = vmul.f32 1.0, %v939
    %v941 = vtanh.pop %v848
    %v942 = vmul.f32 %v940, %v731
    %944 = vrot.lane.b32.xlu0 %v941, 64
    %v945 = vpop.permute.xlu0 %944
    %v947 = vmul.f32 %v940, %v945
    %949 = vrot.lane.b32.xlu0 %v947, 32
    %v950 = vpop.permute.xlu0 %949
    %v952 = vadd.f32 %v942, %v950
    %v953 = vtanh.pop %v952
    %955 = vrot.lane.b32.xlu0 %v953, 64
    %v956 = vpop.permute.xlu0 %955
    %v958 = vmul.f32 %v940, %v956
    %v959 = vxor.u32 %v934, 2147483648
    %v960 = vmul.f32 %v959, 1.442695
    %v961 = vpow.pop %v960
    %v962 = vadd.f32 %v961, 1.0
    %v963 = vrcp.pop %v962
    %v964 = vmul.f32 1.0, %v963
    %v965 = vtanh.pop %v934
    %v966 = vmul.f32 %v964, %v755
    %968 = vrot.lane.b32.xlu0 %v965, 64
    %v969 = vpop.permute.xlu0 %968
    %v971 = vmul.f32 %v964, %v969
    %973 = vrot.lane.b32.xlu0 %v971, 32
    %v974 = vpop.permute.xlu0 %973
    %v976 = vadd.f32 %v966, %v974
    %v977 = vtanh.pop %v976
    %979 = vrot.lane.b32.xlu0 %v977, 64
    %v980 = vpop.permute.xlu0 %979
    %v982 = vmul.f32 %v964, %v980
    %s983 = scalar_lea.vmem [#allocation2], 8
    %v984 = vld [vmem:[%s983] sm:$0xf]
    %s985 = scalar_lea.vmem [#allocation2], 20
    %v986 = vld [vmem:[%s985] sm:$0xf]
    %v989 = vunpack.c.l.s4 1983009808
    %v990 = vunpack.c.0.s8 %v989
    %v991 = vlaneseq
    %v992 = vshrl.u32 %v991, 7
    %v993 = vsub.s32 %v990, %v992
    %v994 = vrot.slane %v958, %v993
    %995 = vrot.lane.b32.xlu0 %v994, 32
    %v996 = vpop.permute.xlu0 %995
    %v997 = vsel %vm154, %v996, 0
    %999 = vmatprep.subr.mxu0 0.0
    %1000 = vmatpush1.msra.mxu0 0.0
    %1001 = vmatprep.subr.mxu0 0.0
    %1002 = vmatpush1.msra.mxu0 0.0
    %1003 = vmatprep.subr.mxu0 0.0
    %1004 = vmatpush1.msra.mxu0 0.0
    %1005 = vmatprep.subr.mxu0 0.0
    %1006 = vmatpush1.msra.mxu0 0.0
    %1007 = vmatprep.subr.mxu0 0.0
    %1008 = vmatpush1.msra.mxu0 0.0
    %1009 = vmatprep.subr.mxu0 0.0
    %1010 = vmatpush1.msra.mxu0 0.0
    %1011 = vmatprep.subr.mxu0 0.0
    %1012 = vmatpush1.msra.mxu0 0.0
    %1013 = vmatprep.subr.mxu0 0.0
    %1014 = vmatpush1.msra.mxu0 0.0
    %1015 = vmatprep.subr.mxu0 0.0
    %1016 = vmatpush1.msra.mxu0 0.0
    %1017 = vmatprep.subr.mxu0 0.0
    %1018 = vmatpush1.msra.mxu0 0.0
    %1019 = vmatprep.subr.mxu0 0.0
    %1020 = vmatpush1.msra.mxu0 0.0
    %1021 = vmatprep.subr.mxu0 0.0
    %1022 = vmatpush1.msra.mxu0 0.0
    %1023 = vmatprep.subr.mxu0 0.0
    %1024 = vmatpush1.msra.mxu0 %v558
    %1025 = vmatprep.subr.mxu0 0.0
    %1026 = vmatpush1.msra.mxu0 %v557
    %1027 = vmatprep.subr.mxu0 0.0
    %1028 = vmatpush1.msra.mxu0 %v556
    %1029 = vmatprep.subr.mxu0 0.0
    %1030 = vmatpush1.msra.mxu0 %v555
    %1031 = vmatprep.subr.mxu0 0.0
    %1032 = vmatpush2.msra.mxu0 0.0
    %1033 = vmatprep.subr.mxu0 0.0
    %1034 = vmatpush2.msra.mxu0 0.0
    %1035 = vmatprep.subr.mxu0 0.0
    %1036 = vmatpush2.msra.mxu0 0.0
    %1037 = vmatprep.subr.mxu0 0.0
    %1038 = vmatpush2.msra.mxu0 0.0
    %1039 = vmatprep.subr.mxu0 0.0
    %1040 = vmatpush2.msra.mxu0 0.0
    %1041 = vmatprep.subr.mxu0 0.0
    %1042 = vmatpush2.msra.mxu0 0.0
    %1043 = vmatprep.subr.mxu0 0.0
    %1044 = vmatpush2.msra.mxu0 0.0
    %1045 = vmatprep.subr.mxu0 0.0
    %1046 = vmatpush2.msra.mxu0 0.0
    %1047 = vmatprep.subr.mxu0 0.0
    %1048 = vmatpush2.msra.mxu0 0.0
    %1049 = vmatprep.subr.mxu0 0.0
    %1050 = vmatpush2.msra.mxu0 0.0
    %1051 = vmatprep.subr.mxu0 0.0
    %1052 = vmatpush2.msra.mxu0 0.0
    %1053 = vmatprep.subr.mxu0 0.0
    %1054 = vmatpush2.msra.mxu0 0.0
    %1055 = vmatprep.subr.mxu0 0.0
    %1056 = vmatpush2.msra.mxu0 0.0
    %1057 = vmatprep.subr.mxu0 0.0
    %1058 = vmatpush2.msra.mxu0 0.0
    %1059 = vmatprep.subr.mxu0 0.0
    %1060 = vmatpush2.msra.mxu0 0.0
    %1061 = vmatprep.subr.mxu0 0.0
    %1062 = vmatpush2.msra.mxu0 0.0
    %1063 = vmatprep.mubr.f32.mxu0 0.0
    %1064 = vmatmul.mubr.f32.gmra.mxu0 %v997
    %v1065 = vpop.f32.mrf.mxu0
    %v1066 = vadd.f32 0.0, %v1065
    %v1067 = vpop.f32.mrf.mxu0
    %1068 = vdwg.mxu0
    %v1069 = vadd.f32 %v984, %v1066
    %v1072 = vunpack.c.l.s4 1983009808
    %v1073 = vunpack.c.0.s8 %v1072
    %v1074 = vlaneseq
    %v1075 = vshrl.u32 %v1074, 7
    %v1076 = vsub.s32 %v1073, %v1075
    %v1077 = vrot.slane %v982, %v1076
    %1078 = vrot.lane.b32.xlu0 %v1077, 32
    %v1079 = vpop.permute.xlu0 %1078
    %v1080 = vsel %vm154, %v1079, 0
    %1082 = vmatprep.subr.mxu0 0.0
    %1083 = vmatpush1.msra.mxu0 0.0
    %1084 = vmatprep.subr.mxu0 0.0
    %1085 = vmatpush1.msra.mxu0 0.0
    %1086 = vmatprep.subr.mxu0 0.0
    %1087 = vmatpush1.msra.mxu0 0.0
    %1088 = vmatprep.subr.mxu0 0.0
    %1089 = vmatpush1.msra.mxu0 0.0
    %1090 = vmatprep.subr.mxu0 0.0
    %1091 = vmatpush1.msra.mxu0 0.0
    %1092 = vmatprep.subr.mxu0 0.0
    %1093 = vmatpush1.msra.mxu0 0.0
    %1094 = vmatprep.subr.mxu0 0.0
    %1095 = vmatpush1.msra.mxu0 0.0
    %1096 = vmatprep.subr.mxu0 0.0
    %1097 = vmatpush1.msra.mxu0 0.0
    %1098 = vmatprep.subr.mxu0 0.0
    %1099 = vmatpush1.msra.mxu0 0.0
    %1100 = vmatprep.subr.mxu0 0.0
    %1101 = vmatpush1.msra.mxu0 0.0
    %1102 = vmatprep.subr.mxu0 0.0
    %1103 = vmatpush1.msra.mxu0 0.0
    %1104 = vmatprep.subr.mxu0 0.0
    %1105 = vmatpush1.msra.mxu0 0.0
    %1106 = vmatprep.subr.mxu0 0.0
    %1107 = vmatpush1.msra.mxu0 %v562
    %1108 = vmatprep.subr.mxu0 0.0
    %1109 = vmatpush1.msra.mxu0 %v561
    %1110 = vmatprep.subr.mxu0 0.0
    %1111 = vmatpush1.msra.mxu0 %v560
    %1112 = vmatprep.subr.mxu0 0.0
    %1113 = vmatpush1.msra.mxu0 %v559
    %1114 = vmatprep.subr.mxu0 0.0
    %1115 = vmatpush2.msra.mxu0 0.0
    %1116 = vmatprep.subr.mxu0 0.0
    %1117 = vmatpush2.msra.mxu0 0.0
    %1118 = vmatprep.subr.mxu0 0.0
    %1119 = vmatpush2.msra.mxu0 0.0
    %1120 = vmatprep.subr.mxu0 0.0
    %1121 = vmatpush2.msra.mxu0 0.0
    %1122 = vmatprep.subr.mxu0 0.0
    %1123 = vmatpush2.msra.mxu0 0.0
    %1124 = vmatprep.subr.mxu0 0.0
    %1125 = vmatpush2.msra.mxu0 0.0
    %1126 = vmatprep.subr.mxu0 0.0
    %1127 = vmatpush2.msra.mxu0 0.0
    %1128 = vmatprep.subr.mxu0 0.0
    %1129 = vmatpush2.msra.mxu0 0.0
    %1130 = vmatprep.subr.mxu0 0.0
    %1131 = vmatpush2.msra.mxu0 0.0
    %1132 = vmatprep.subr.mxu0 0.0
    %1133 = vmatpush2.msra.mxu0 0.0
    %1134 = vmatprep.subr.mxu0 0.0
    %1135 = vmatpush2.msra.mxu0 0.0
    %1136 = vmatprep.subr.mxu0 0.0
    %1137 = vmatpush2.msra.mxu0 0.0
    %1138 = vmatprep.subr.mxu0 0.0
    %1139 = vmatpush2.msra.mxu0 0.0
    %1140 = vmatprep.subr.mxu0 0.0
    %1141 = vmatpush2.msra.mxu0 0.0
    %1142 = vmatprep.subr.mxu0 0.0
    %1143 = vmatpush2.msra.mxu0 0.0
    %1144 = vmatprep.subr.mxu0 0.0
    %1145 = vmatpush2.msra.mxu0 0.0
    %1146 = vmatprep.mubr.f32.mxu0 0.0
    %1147 = vmatmul.mubr.f32.gmra.mxu0 %v1080
    %v1148 = vpop.f32.mrf.mxu0
    %v1149 = vadd.f32 0.0, %v1148
    %v1150 = vpop.f32.mrf.mxu0
    %1151 = vdwg.mxu0
    %v1153 = vrot.slane %v986, 2
    %v1155 = vadd.f32 %v1153, %v1149
    %v1156 = vxor.u32 %v1069, 2147483648
    %v1157 = vmul.f32 %v1156, 1.442695
    %v1158 = vpow.pop %v1157
    %v1159 = vadd.f32 %v1158, 1.0
    %v1160 = vrcp.pop %v1159
    %v1161 = vmul.f32 1.0, %v1160
    %v1162 = vtanh.pop %v1069
    %v1163 = vmul.f32 %v1161, %v952
    %1165 = vrot.lane.b32.xlu0 %v1162, 64
    %v1166 = vpop.permute.xlu0 %1165
    %v1168 = vmul.f32 %v1161, %v1166
    %1170 = vrot.lane.b32.xlu0 %v1168, 32
    %v1171 = vpop.permute.xlu0 %1170
    %v1173 = vadd.f32 %v1163, %v1171
    %v1174 = vtanh.pop %v1173
    %1176 = vrot.lane.b32.xlu0 %v1174, 64
    %v1177 = vpop.permute.xlu0 %1176
    %v1179 = vmul.f32 %v1161, %v1177
    %v1180 = vxor.u32 %v1155, 2147483648
    %v1181 = vmul.f32 %v1180, 1.442695
    %v1182 = vpow.pop %v1181
    %v1183 = vadd.f32 %v1182, 1.0
    %v1184 = vrcp.pop %v1183
    %v1185 = vmul.f32 1.0, %v1184
    %v1186 = vtanh.pop %v1155
    %v1187 = vmul.f32 %v1185, %v976
    %1189 = vrot.lane.b32.xlu0 %v1186, 64
    %v1190 = vpop.permute.xlu0 %1189
    %v1192 = vmul.f32 %v1185, %v1190
    %1194 = vrot.lane.b32.xlu0 %v1192, 32
    %v1195 = vpop.permute.xlu0 %1194
    %v1197 = vadd.f32 %v1187, %v1195
    %v1198 = vtanh.pop %v1197
    %1200 = vrot.lane.b32.xlu0 %v1198, 64
    %v1201 = vpop.permute.xlu0 %1200
    %v1203 = vmul.f32 %v1185, %v1201
    %s1204 = scalar_lea.vmem [#allocation2], 12
    %v1205 = vld [vmem:[%s1204] sm:$0xf]
    %s1206 = scalar_lea.vmem [#allocation2], 16
    %v1207 = vld [vmem:[%s1206] sm:$0xf]
    %v1210 = vunpack.c.l.s4 1983009808
    %v1211 = vunpack.c.0.s8 %v1210
    %v1212 = vlaneseq
    %v1213 = vshrl.u32 %v1212, 7
    %v1214 = vsub.s32 %v1211, %v1213
    %v1215 = vrot.slane %v1179, %v1214
    %1216 = vrot.lane.b32.xlu0 %v1215, 32
    %v1217 = vpop.permute.xlu0 %1216
    %v1218 = vsel %vm154, %v1217, 0
    %1220 = vmatprep.subr.mxu0 0.0
    %1221 = vmatpush1.msra.mxu0 0.0
    %1222 = vmatprep.subr.mxu0 0.0
    %1223 = vmatpush1.msra.mxu0 0.0
    %1224 = vmatprep.subr.mxu0 0.0
    %1225 = vmatpush1.msra.mxu0 0.0
    %1226 = vmatprep.subr.mxu0 0.0
    %1227 = vmatpush1.msra.mxu0 0.0
    %1228 = vmatprep.subr.mxu0 0.0
    %1229 = vmatpush1.msra.mxu0 0.0
    %1230 = vmatprep.subr.mxu0 0.0
    %1231 = vmatpush1.msra.mxu0 0.0
    %1232 = vmatprep.subr.mxu0 0.0
    %1233 = vmatpush1.msra.mxu0 0.0
    %1234 = vmatprep.subr.mxu0 0.0
    %1235 = vmatpush1.msra.mxu0 0.0
    %1236 = vmatprep.subr.mxu0 0.0
    %1237 = vmatpush1.msra.mxu0 0.0
    %1238 = vmatprep.subr.mxu0 0.0
    %1239 = vmatpush1.msra.mxu0 0.0
    %1240 = vmatprep.subr.mxu0 0.0
    %1241 = vmatpush1.msra.mxu0 0.0
    %1242 = vmatprep.subr.mxu0 0.0
    %1243 = vmatpush1.msra.mxu0 0.0
    %1244 = vmatprep.subr.mxu0 0.0
    %1245 = vmatpush1.msra.mxu0 %v558
    %1246 = vmatprep.subr.mxu0 0.0
    %1247 = vmatpush1.msra.mxu0 %v557
    %1248 = vmatprep.subr.mxu0 0.0
    %1249 = vmatpush1.msra.mxu0 %v556
    %1250 = vmatprep.subr.mxu0 0.0
    %1251 = vmatpush1.msra.mxu0 %v555
    %1252 = vmatprep.subr.mxu0 0.0
    %1253 = vmatpush2.msra.mxu0 0.0
    %1254 = vmatprep.subr.mxu0 0.0
    %1255 = vmatpush2.msra.mxu0 0.0
    %1256 = vmatprep.subr.mxu0 0.0
    %1257 = vmatpush2.msra.mxu0 0.0
    %1258 = vmatprep.subr.mxu0 0.0
    %1259 = vmatpush2.msra.mxu0 0.0
    %1260 = vmatprep.subr.mxu0 0.0
    %1261 = vmatpush2.msra.mxu0 0.0
    %1262 = vmatprep.subr.mxu0 0.0
    %1263 = vmatpush2.msra.mxu0 0.0
    %1264 = vmatprep.subr.mxu0 0.0
    %1265 = vmatpush2.msra.mxu0 0.0
    %1266 = vmatprep.subr.mxu0 0.0
    %1267 = vmatpush2.msra.mxu0 0.0
    %1268 = vmatprep.subr.mxu0 0.0
    %1269 = vmatpush2.msra.mxu0 0.0
    %1270 = vmatprep.subr.mxu0 0.0
    %1271 = vmatpush2.msra.mxu0 0.0
    %1272 = vmatprep.subr.mxu0 0.0
    %1273 = vmatpush2.msra.mxu0 0.0
    %1274 = vmatprep.subr.mxu0 0.0
    %1275 = vmatpush2.msra.mxu0 0.0
    %1276 = vmatprep.subr.mxu0 0.0
    %1277 = vmatpush2.msra.mxu0 0.0
    %1278 = vmatprep.subr.mxu0 0.0
    %1279 = vmatpush2.msra.mxu0 0.0
    %1280 = vmatprep.subr.mxu0 0.0
    %1281 = vmatpush2.msra.mxu0 0.0
    %1282 = vmatprep.subr.mxu0 0.0
    %1283 = vmatpush2.msra.mxu0 0.0
    %1284 = vmatprep.mubr.f32.mxu0 0.0
    %1285 = vmatmul.mubr.f32.gmra.mxu0 %v1218
    %v1286 = vpop.f32.mrf.mxu0
    %v1287 = vadd.f32 0.0, %v1286
    %v1288 = vpop.f32.mrf.mxu0
    %1289 = vdwg.mxu0
    %v1290 = vadd.f32 %v1205, %v1287
    %v1293 = vunpack.c.l.s4 1983009808
    %v1294 = vunpack.c.0.s8 %v1293
    %v1295 = vlaneseq
    %v1296 = vshrl.u32 %v1295, 7
    %v1297 = vsub.s32 %v1294, %v1296
    %v1298 = vrot.slane %v1203, %v1297
    %1299 = vrot.lane.b32.xlu0 %v1298, 32
    %v1300 = vpop.permute.xlu0 %1299
    %v1301 = vsel %vm154, %v1300, 0
    %1303 = vmatprep.subr.mxu0 0.0
    %1304 = vmatpush1.msra.mxu0 0.0
    %1305 = vmatprep.subr.mxu0 0.0
    %1306 = vmatpush1.msra.mxu0 0.0
    %1307 = vmatprep.subr.mxu0 0.0
    %1308 = vmatpush1.msra.mxu0 0.0
    %1309 = vmatprep.subr.mxu0 0.0
    %1310 = vmatpush1.msra.mxu0 0.0
    %1311 = vmatprep.subr.mxu0 0.0
    %1312 = vmatpush1.msra.mxu0 0.0
    %1313 = vmatprep.subr.mxu0 0.0
    %1314 = vmatpush1.msra.mxu0 0.0
    %1315 = vmatprep.subr.mxu0 0.0
    %1316 = vmatpush1.msra.mxu0 0.0
    %1317 = vmatprep.subr.mxu0 0.0
    %1318 = vmatpush1.msra.mxu0 0.0
    %1319 = vmatprep.subr.mxu0 0.0
    %1320 = vmatpush1.msra.mxu0 0.0
    %1321 = vmatprep.subr.mxu0 0.0
    %1322 = vmatpush1.msra.mxu0 0.0
    %1323 = vmatprep.subr.mxu0 0.0
    %1324 = vmatpush1.msra.mxu0 0.0
    %1325 = vmatprep.subr.mxu0 0.0
    %1326 = vmatpush1.msra.mxu0 0.0
    %1327 = vmatprep.subr.mxu0 0.0
    %1328 = vmatpush1.msra.mxu0 %v562
    %1329 = vmatprep.subr.mxu0 0.0
    %1330 = vmatpush1.msra.mxu0 %v561
    %1331 = vmatprep.subr.mxu0 0.0
    %1332 = vmatpush1.msra.mxu0 %v560
    %1333 = vmatprep.subr.mxu0 0.0
    %1334 = vmatpush1.msra.mxu0 %v559
    %1335 = vmatprep.subr.mxu0 0.0
    %1336 = vmatpush2.msra.mxu0 0.0
    %1337 = vmatprep.subr.mxu0 0.0
    %1338 = vmatpush2.msra.mxu0 0.0
    %1339 = vmatprep.subr.mxu0 0.0
    %1340 = vmatpush2.msra.mxu0 0.0
    %1341 = vmatprep.subr.mxu0 0.0
    %1342 = vmatpush2.msra.mxu0 0.0
    %1343 = vmatprep.subr.mxu0 0.0
    %1344 = vmatpush2.msra.mxu0 0.0
    %1345 = vmatprep.subr.mxu0 0.0
    %1346 = vmatpush2.msra.mxu0 0.0
    %1347 = vmatprep.subr.mxu0 0.0
    %1348 = vmatpush2.msra.mxu0 0.0
    %1349 = vmatprep.subr.mxu0 0.0
    %1350 = vmatpush2.msra.mxu0 0.0
    %1351 = vmatprep.subr.mxu0 0.0
    %1352 = vmatpush2.msra.mxu0 0.0
    %1353 = vmatprep.subr.mxu0 0.0
    %1354 = vmatpush2.msra.mxu0 0.0
    %1355 = vmatprep.subr.mxu0 0.0
    %1356 = vmatpush2.msra.mxu0 0.0
    %1357 = vmatprep.subr.mxu0 0.0
    %1358 = vmatpush2.msra.mxu0 0.0
    %1359 = vmatprep.subr.mxu0 0.0
    %1360 = vmatpush2.msra.mxu0 0.0
    %1361 = vmatprep.subr.mxu0 0.0
    %1362 = vmatpush2.msra.mxu0 0.0
    %1363 = vmatprep.subr.mxu0 0.0
    %1364 = vmatpush2.msra.mxu0 0.0
    %1365 = vmatprep.subr.mxu0 0.0
    %1366 = vmatpush2.msra.mxu0 0.0
    %1367 = vmatprep.mubr.f32.mxu0 0.0
    %1368 = vmatmul.mubr.f32.gmra.mxu0 %v1301
    %v1369 = vpop.f32.mrf.mxu0
    %v1370 = vadd.f32 0.0, %v1369
    %v1371 = vpop.f32.mrf.mxu0
    %1372 = vdwg.mxu0
    %v1374 = vrot.slane %v1207, 2
    %v1376 = vadd.f32 %v1374, %v1370
    %v1377 = vxor.u32 %v1290, 2147483648
    %v1378 = vmul.f32 %v1377, 1.442695
    %v1379 = vpow.pop %v1378
    %v1380 = vadd.f32 %v1379, 1.0
    %v1381 = vrcp.pop %v1380
    %v1382 = vmul.f32 1.0, %v1381
    %v1383 = vtanh.pop %v1290
    %v1384 = vmul.f32 %v1382, %v1173
    %1386 = vrot.lane.b32.xlu0 %v1383, 64
    %v1387 = vpop.permute.xlu0 %1386
    %v1389 = vmul.f32 %v1382, %v1387
    %1391 = vrot.lane.b32.xlu0 %v1389, 32
    %v1392 = vpop.permute.xlu0 %1391
    %v1394 = vadd.f32 %v1384, %v1392
    %v1395 = vtanh.pop %v1394
    %1397 = vrot.lane.b32.xlu0 %v1395, 64
    %v1398 = vpop.permute.xlu0 %1397
    %v1400 = vmul.f32 %v1382, %v1398
    %v1401 = vxor.u32 %v1376, 2147483648
    %v1402 = vmul.f32 %v1401, 1.442695
    %v1403 = vpow.pop %v1402
    %v1404 = vadd.f32 %v1403, 1.0
    %v1405 = vrcp.pop %v1404
    %v1406 = vmul.f32 1.0, %v1405
    %v1407 = vtanh.pop %v1376
    %v1408 = vmul.f32 %v1406, %v1197
    %1410 = vrot.lane.b32.xlu0 %v1407, 64
    %v1411 = vpop.permute.xlu0 %1410
    %v1413 = vmul.f32 %v1406, %v1411
    %1415 = vrot.lane.b32.xlu0 %v1413, 32
    %v1416 = vpop.permute.xlu0 %1415
    %v1418 = vadd.f32 %v1408, %v1416
    %v1419 = vtanh.pop %v1418
    %1421 = vrot.lane.b32.xlu0 %v1419, 64
    %v1422 = vpop.permute.xlu0 %1421
    %v1424 = vmul.f32 %v1406, %v1422
    %v1427 = vunpack.c.l.s4 1983009808
    %v1428 = vunpack.c.0.s8 %v1427
    %v1429 = vlaneseq
    %v1430 = vshrl.u32 %v1429, 7
    %v1431 = vsub.s32 %v1428, %v1430
    %v1432 = vrot.slane %v1400, %v1431
    %1433 = vrot.lane.b32.xlu0 %v1432, 32
    %v1434 = vpop.permute.xlu0 %1433
    %v1435 = vsel %vm154, %v1434, 0
    %1437 = vmatprep.subr.mxu0 0.0
    %1438 = vmatpush1.msra.mxu0 0.0
    %1439 = vmatprep.subr.mxu0 0.0
    %1440 = vmatpush1.msra.mxu0 0.0
    %1441 = vmatprep.subr.mxu0 0.0
    %1442 = vmatpush1.msra.mxu0 0.0
    %1443 = vmatprep.subr.mxu0 0.0
    %1444 = vmatpush1.msra.mxu0 0.0
    %1445 = vmatprep.subr.mxu0 0.0
    %1446 = vmatpush1.msra.mxu0 0.0
    %1447 = vmatprep.subr.mxu0 0.0
    %1448 = vmatpush1.msra.mxu0 0.0
    %1449 = vmatprep.subr.mxu0 0.0
    %1450 = vmatpush1.msra.mxu0 0.0
    %1451 = vmatprep.subr.mxu0 0.0
    %1452 = vmatpush1.msra.mxu0 0.0
    %1453 = vmatprep.subr.mxu0 0.0
    %1454 = vmatpush1.msra.mxu0 0.0
    %1455 = vmatprep.subr.mxu0 0.0
    %1456 = vmatpush1.msra.mxu0 0.0
    %1457 = vmatprep.subr.mxu0 0.0
    %1458 = vmatpush1.msra.mxu0 0.0
    %1459 = vmatprep.subr.mxu0 0.0
    %1460 = vmatpush1.msra.mxu0 0.0
    %1461 = vmatprep.subr.mxu0 0.0
    %1462 = vmatpush1.msra.mxu0 %v558
    %1463 = vmatprep.subr.mxu0 0.0
    %1464 = vmatpush1.msra.mxu0 %v557
    %1465 = vmatprep.subr.mxu0 0.0
    %1466 = vmatpush1.msra.mxu0 %v556
    %1467 = vmatprep.subr.mxu0 0.0
    %1468 = vmatpush1.msra.mxu0 %v555
    %1469 = vmatprep.subr.mxu0 0.0
    %1470 = vmatpush2.msra.mxu0 0.0
    %1471 = vmatprep.subr.mxu0 0.0
    %1472 = vmatpush2.msra.mxu0 0.0
    %1473 = vmatprep.subr.mxu0 0.0
    %1474 = vmatpush2.msra.mxu0 0.0
    %1475 = vmatprep.subr.mxu0 0.0
    %1476 = vmatpush2.msra.mxu0 0.0
    %1477 = vmatprep.subr.mxu0 0.0
    %1478 = vmatpush2.msra.mxu0 0.0
    %1479 = vmatprep.subr.mxu0 0.0
    %1480 = vmatpush2.msra.mxu0 0.0
    %1481 = vmatprep.subr.mxu0 0.0
    %1482 = vmatpush2.msra.mxu0 0.0
    %1483 = vmatprep.subr.mxu0 0.0
    %1484 = vmatpush2.msra.mxu0 0.0
    %1485 = vmatprep.subr.mxu0 0.0
    %1486 = vmatpush2.msra.mxu0 0.0
    %1487 = vmatprep.subr.mxu0 0.0
    %1488 = vmatpush2.msra.mxu0 0.0
    %1489 = vmatprep.subr.mxu0 0.0
    %1490 = vmatpush2.msra.mxu0 0.0
    %1491 = vmatprep.subr.mxu0 0.0
    %1492 = vmatpush2.msra.mxu0 0.0
    %1493 = vmatprep.subr.mxu0 0.0
    %1494 = vmatpush2.msra.mxu0 0.0
    %1495 = vmatprep.subr.mxu0 0.0
    %1496 = vmatpush2.msra.mxu0 0.0
    %1497 = vmatprep.subr.mxu0 0.0
    %1498 = vmatpush2.msra.mxu0 0.0
    %1499 = vmatprep.subr.mxu0 0.0
    %1500 = vmatpush2.msra.mxu0 0.0
    %1501 = vmatprep.mubr.f32.mxu0 0.0
    %1502 = vmatmul.mubr.f32.gmra.mxu0 %v1435
    %v1503 = vpop.f32.mrf.mxu0
    %v1504 = vadd.f32 0.0, %v1503
    %v1505 = vpop.f32.mrf.mxu0
    %1506 = vdwg.mxu0
    %v1507 = vadd.f32 %v1207, %v1504
    %v1510 = vunpack.c.l.s4 1983009808
    %v1511 = vunpack.c.0.s8 %v1510
    %v1512 = vlaneseq
    %v1513 = vshrl.u32 %v1512, 7
    %v1514 = vsub.s32 %v1511, %v1513
    %v1515 = vrot.slane %v1424, %v1514
    %1516 = vrot.lane.b32.xlu0 %v1515, 32
    %v1517 = vpop.permute.xlu0 %1516
    %v1518 = vsel %vm154, %v1517, 0
    %1520 = vmatprep.subr.mxu0 0.0
    %1521 = vmatpush1.msra.mxu0 0.0
    %1522 = vmatprep.subr.mxu0 0.0
    %1523 = vmatpush1.msra.mxu0 0.0
    %1524 = vmatprep.subr.mxu0 0.0
    %1525 = vmatpush1.msra.mxu0 0.0
    %1526 = vmatprep.subr.mxu0 0.0
    %1527 = vmatpush1.msra.mxu0 0.0
    %1528 = vmatprep.subr.mxu0 0.0
    %1529 = vmatpush1.msra.mxu0 0.0
    %1530 = vmatprep.subr.mxu0 0.0
    %1531 = vmatpush1.msra.mxu0 0.0
    %1532 = vmatprep.subr.mxu0 0.0
    %1533 = vmatpush1.msra.mxu0 0.0
    %1534 = vmatprep.subr.mxu0 0.0
    %1535 = vmatpush1.msra.mxu0 0.0
    %1536 = vmatprep.subr.mxu0 0.0
    %1537 = vmatpush1.msra.mxu0 0.0
    %1538 = vmatprep.subr.mxu0 0.0
    %1539 = vmatpush1.msra.mxu0 0.0
    %1540 = vmatprep.subr.mxu0 0.0
    %1541 = vmatpush1.msra.mxu0 0.0
    %1542 = vmatprep.subr.mxu0 0.0
    %1543 = vmatpush1.msra.mxu0 0.0
    %1544 = vmatprep.subr.mxu0 0.0
    %1545 = vmatpush1.msra.mxu0 %v562
    %1546 = vmatprep.subr.mxu0 0.0
    %1547 = vmatpush1.msra.mxu0 %v561
    %1548 = vmatprep.subr.mxu0 0.0
    %1549 = vmatpush1.msra.mxu0 %v560
    %1550 = vmatprep.subr.mxu0 0.0
    %1551 = vmatpush1.msra.mxu0 %v559
    %1552 = vmatprep.subr.mxu0 0.0
    %1553 = vmatpush2.msra.mxu0 0.0
    %1554 = vmatprep.subr.mxu0 0.0
    %1555 = vmatpush2.msra.mxu0 0.0
    %1556 = vmatprep.subr.mxu0 0.0
    %1557 = vmatpush2.msra.mxu0 0.0
    %1558 = vmatprep.subr.mxu0 0.0
    %1559 = vmatpush2.msra.mxu0 0.0
    %1560 = vmatprep.subr.mxu0 0.0
    %1561 = vmatpush2.msra.mxu0 0.0
    %1562 = vmatprep.subr.mxu0 0.0
    %1563 = vmatpush2.msra.mxu0 0.0
    %1564 = vmatprep.subr.mxu0 0.0
    %1565 = vmatpush2.msra.mxu0 0.0
    %1566 = vmatprep.subr.mxu0 0.0
    %1567 = vmatpush2.msra.mxu0 0.0
    %1568 = vmatprep.subr.mxu0 0.0
    %1569 = vmatpush2.msra.mxu0 0.0
    %1570 = vmatprep.subr.mxu0 0.0
    %1571 = vmatpush2.msra.mxu0 0.0
    %1572 = vmatprep.subr.mxu0 0.0
    %1573 = vmatpush2.msra.mxu0 0.0
    %1574 = vmatprep.subr.mxu0 0.0
    %1575 = vmatpush2.msra.mxu0 0.0
    %1576 = vmatprep.subr.mxu0 0.0
    %1577 = vmatpush2.msra.mxu0 0.0
    %1578 = vmatprep.subr.mxu0 0.0
    %1579 = vmatpush2.msra.mxu0 0.0
    %1580 = vmatprep.subr.mxu0 0.0
    %1581 = vmatpush2.msra.mxu0 0.0
    %1582 = vmatprep.subr.mxu0 0.0
    %1583 = vmatpush2.msra.mxu0 0.0
    %1584 = vmatprep.mubr.f32.mxu0 0.0
    %1585 = vmatmul.mubr.f32.gmra.mxu0 %v1518
    %v1586 = vpop.f32.mrf.mxu0
    %v1587 = vadd.f32 0.0, %v1586
    %v1588 = vpop.f32.mrf.mxu0
    %1589 = vdwg.mxu0
    %v1591 = vrot.slane %v1205, 2
    %v1593 = vadd.f32 %v1591, %v1587
    %v1594 = vxor.u32 %v1507, 2147483648
    %v1595 = vmul.f32 %v1594, 1.442695
    %v1596 = vpow.pop %v1595
    %v1597 = vadd.f32 %v1596, 1.0
    %v1598 = vrcp.pop %v1597
    %v1599 = vmul.f32 1.0, %v1598
    %v1600 = vtanh.pop %v1507
    %v1601 = vmul.f32 %v1599, %v1394
    %1603 = vrot.lane.b32.xlu0 %v1600, 64
    %v1604 = vpop.permute.xlu0 %1603
    %v1606 = vmul.f32 %v1599, %v1604
    %1608 = vrot.lane.b32.xlu0 %v1606, 32
    %v1609 = vpop.permute.xlu0 %1608
    %v1611 = vadd.f32 %v1601, %v1609
    %v1612 = vtanh.pop %v1611
    %1614 = vrot.lane.b32.xlu0 %v1612, 64
    %v1615 = vpop.permute.xlu0 %1614
    %v1617 = vmul.f32 %v1599, %v1615
    %v1618 = vxor.u32 %v1593, 2147483648
    %v1619 = vmul.f32 %v1618, 1.442695
    %v1620 = vpow.pop %v1619
    %v1621 = vadd.f32 %v1620, 1.0
    %v1622 = vrcp.pop %v1621
    %v1623 = vmul.f32 1.0, %v1622
    %v1624 = vtanh.pop %v1593
    %v1625 = vmul.f32 %v1623, %v1418
    %1627 = vrot.lane.b32.xlu0 %v1624, 64
    %v1628 = vpop.permute.xlu0 %1627
    %v1630 = vmul.f32 %v1623, %v1628
    %1632 = vrot.lane.b32.xlu0 %v1630, 32
    %v1633 = vpop.permute.xlu0 %1632
    %v1635 = vadd.f32 %v1625, %v1633
    %v1636 = vtanh.pop %v1635
    %1638 = vrot.lane.b32.xlu0 %v1636, 64
    %v1639 = vpop.permute.xlu0 %1638
    %v1641 = vmul.f32 %v1623, %v1639
    %v1644 = vunpack.c.l.s4 1983009808
    %v1645 = vunpack.c.0.s8 %v1644
    %v1646 = vlaneseq
    %v1647 = vshrl.u32 %v1646, 7
    %v1648 = vsub.s32 %v1645, %v1647
    %v1649 = vrot.slane %v1617, %v1648
    %1650 = vrot.lane.b32.xlu0 %v1649, 32
    %v1651 = vpop.permute.xlu0 %1650
    %v1652 = vsel %vm154, %v1651, 0
    %1654 = vmatprep.subr.mxu0 0.0
    %1655 = vmatpush1.msra.mxu0 0.0
    %1656 = vmatprep.subr.mxu0 0.0
    %1657 = vmatpush1.msra.mxu0 0.0
    %1658 = vmatprep.subr.mxu0 0.0
    %1659 = vmatpush1.msra.mxu0 0.0
    %1660 = vmatprep.subr.mxu0 0.0
    %1661 = vmatpush1.msra.mxu0 0.0
    %1662 = vmatprep.subr.mxu0 0.0
    %1663 = vmatpush1.msra.mxu0 0.0
    %1664 = vmatprep.subr.mxu0 0.0
    %1665 = vmatpush1.msra.mxu0 0.0
    %1666 = vmatprep.subr.mxu0 0.0
    %1667 = vmatpush1.msra.mxu0 0.0
    %1668 = vmatprep.subr.mxu0 0.0
    %1669 = vmatpush1.msra.mxu0 0.0
    %1670 = vmatprep.subr.mxu0 0.0
    %1671 = vmatpush1.msra.mxu0 0.0
    %1672 = vmatprep.subr.mxu0 0.0
    %1673 = vmatpush1.msra.mxu0 0.0
    %1674 = vmatprep.subr.mxu0 0.0
    %1675 = vmatpush1.msra.mxu0 0.0
    %1676 = vmatprep.subr.mxu0 0.0
    %1677 = vmatpush1.msra.mxu0 0.0
    %1678 = vmatprep.subr.mxu0 0.0
    %1679 = vmatpush1.msra.mxu0 %v558
    %1680 = vmatprep.subr.mxu0 0.0
    %1681 = vmatpush1.msra.mxu0 %v557
    %1682 = vmatprep.subr.mxu0 0.0
    %1683 = vmatpush1.msra.mxu0 %v556
    %1684 = vmatprep.subr.mxu0 0.0
    %1685 = vmatpush1.msra.mxu0 %v555
    %1686 = vmatprep.subr.mxu0 0.0
    %1687 = vmatpush2.msra.mxu0 0.0
    %1688 = vmatprep.subr.mxu0 0.0
    %1689 = vmatpush2.msra.mxu0 0.0
    %1690 = vmatprep.subr.mxu0 0.0
    %1691 = vmatpush2.msra.mxu0 0.0
    %1692 = vmatprep.subr.mxu0 0.0
    %1693 = vmatpush2.msra.mxu0 0.0
    %1694 = vmatprep.subr.mxu0 0.0
    %1695 = vmatpush2.msra.mxu0 0.0
    %1696 = vmatprep.subr.mxu0 0.0
    %1697 = vmatpush2.msra.mxu0 0.0
    %1698 = vmatprep.subr.mxu0 0.0
    %1699 = vmatpush2.msra.mxu0 0.0
    %1700 = vmatprep.subr.mxu0 0.0
    %1701 = vmatpush2.msra.mxu0 0.0
    %1702 = vmatprep.subr.mxu0 0.0
    %1703 = vmatpush2.msra.mxu0 0.0
    %1704 = vmatprep.subr.mxu0 0.0
    %1705 = vmatpush2.msra.mxu0 0.0
    %1706 = vmatprep.subr.mxu0 0.0
    %1707 = vmatpush2.msra.mxu0 0.0
    %1708 = vmatprep.subr.mxu0 0.0
    %1709 = vmatpush2.msra.mxu0 0.0
    %1710 = vmatprep.subr.mxu0 0.0
    %1711 = vmatpush2.msra.mxu0 0.0
    %1712 = vmatprep.subr.mxu0 0.0
    %1713 = vmatpush2.msra.mxu0 0.0
    %1714 = vmatprep.subr.mxu0 0.0
    %1715 = vmatpush2.msra.mxu0 0.0
    %1716 = vmatprep.subr.mxu0 0.0
    %1717 = vmatpush2.msra.mxu0 0.0
    %1718 = vmatprep.mubr.f32.mxu0 0.0
    %1719 = vmatmul.mubr.f32.gmra.mxu0 %v1652
    %v1720 = vpop.f32.mrf.mxu0
    %v1721 = vadd.f32 0.0, %v1720
    %v1722 = vpop.f32.mrf.mxu0
    %1723 = vdwg.mxu0
    %v1724 = vadd.f32 %v986, %v1721
    %v1727 = vunpack.c.l.s4 1983009808
    %v1728 = vunpack.c.0.s8 %v1727
    %v1729 = vlaneseq
    %v1730 = vshrl.u32 %v1729, 7
    %v1731 = vsub.s32 %v1728, %v1730
    %v1732 = vrot.slane %v1641, %v1731
    %1733 = vrot.lane.b32.xlu0 %v1732, 32
    %v1734 = vpop.permute.xlu0 %1733
    %v1735 = vsel %vm154, %v1734, 0
    %1737 = vmatprep.subr.mxu0 0.0
    %1738 = vmatpush1.msra.mxu0 0.0
    %1739 = vmatprep.subr.mxu0 0.0
    %1740 = vmatpush1.msra.mxu0 0.0
    %1741 = vmatprep.subr.mxu0 0.0
    %1742 = vmatpush1.msra.mxu0 0.0
    %1743 = vmatprep.subr.mxu0 0.0
    %1744 = vmatpush1.msra.mxu0 0.0
    %1745 = vmatprep.subr.mxu0 0.0
    %1746 = vmatpush1.msra.mxu0 0.0
    %1747 = vmatprep.subr.mxu0 0.0
    %1748 = vmatpush1.msra.mxu0 0.0
    %1749 = vmatprep.subr.mxu0 0.0
    %1750 = vmatpush1.msra.mxu0 0.0
    %1751 = vmatprep.subr.mxu0 0.0
    %1752 = vmatpush1.msra.mxu0 0.0
    %1753 = vmatprep.subr.mxu0 0.0
    %1754 = vmatpush1.msra.mxu0 0.0
    %1755 = vmatprep.subr.mxu0 0.0
    %1756 = vmatpush1.msra.mxu0 0.0
    %1757 = vmatprep.subr.mxu0 0.0
    %1758 = vmatpush1.msra.mxu0 0.0
    %1759 = vmatprep.subr.mxu0 0.0
    %1760 = vmatpush1.msra.mxu0 0.0
    %1761 = vmatprep.subr.mxu0 0.0
    %1762 = vmatpush1.msra.mxu0 %v562
    %1763 = vmatprep.subr.mxu0 0.0
    %1764 = vmatpush1.msra.mxu0 %v561
    %1765 = vmatprep.subr.mxu0 0.0
    %1766 = vmatpush1.msra.mxu0 %v560
    %1767 = vmatprep.subr.mxu0 0.0
    %1768 = vmatpush1.msra.mxu0 %v559
    %1769 = vmatprep.subr.mxu0 0.0
    %1770 = vmatpush2.msra.mxu0 0.0
    %1771 = vmatprep.subr.mxu0 0.0
    %1772 = vmatpush2.msra.mxu0 0.0
    %1773 = vmatprep.subr.mxu0 0.0
    %1774 = vmatpush2.msra.mxu0 0.0
    %1775 = vmatprep.subr.mxu0 0.0
    %1776 = vmatpush2.msra.mxu0 0.0
    %1777 = vmatprep.subr.mxu0 0.0
    %1778 = vmatpush2.msra.mxu0 0.0
    %1779 = vmatprep.subr.mxu0 0.0
    %1780 = vmatpush2.msra.mxu0 0.0
    %1781 = vmatprep.subr.mxu0 0.0
    %1782 = vmatpush2.msra.mxu0 0.0
    %1783 = vmatprep.subr.mxu0 0.0
    %1784 = vmatpush2.msra.mxu0 0.0
    %1785 = vmatprep.subr.mxu0 0.0
    %1786 = vmatpush2.msra.mxu0 0.0
    %1787 = vmatprep.subr.mxu0 0.0
    %1788 = vmatpush2.msra.mxu0 0.0
    %1789 = vmatprep.subr.mxu0 0.0
    %1790 = vmatpush2.msra.mxu0 0.0
    %1791 = vmatprep.subr.mxu0 0.0
    %1792 = vmatpush2.msra.mxu0 0.0
    %1793 = vmatprep.subr.mxu0 0.0
    %1794 = vmatpush2.msra.mxu0 0.0
    %1795 = vmatprep.subr.mxu0 0.0
    %1796 = vmatpush2.msra.mxu0 0.0
    %1797 = vmatprep.subr.mxu0 0.0
    %1798 = vmatpush2.msra.mxu0 0.0
    %1799 = vmatprep.subr.mxu0 0.0
    %1800 = vmatpush2.msra.mxu0 0.0
    %1801 = vmatprep.mubr.f32.mxu0 0.0
    %1802 = vmatmul.mubr.f32.gmra.mxu0 %v1735
    %v1803 = vpop.f32.mrf.mxu0
    %v1804 = vadd.f32 0.0, %v1803
    %v1805 = vpop.f32.mrf.mxu0
    %1806 = vdwg.mxu0
    %v1808 = vrot.slane %v984, 2
    %v1810 = vadd.f32 %v1808, %v1804
    %v1811 = vxor.u32 %v1724, 2147483648
    %v1812 = vmul.f32 %v1811, 1.442695
    %v1813 = vpow.pop %v1812
    %v1814 = vadd.f32 %v1813, 1.0
    %v1815 = vrcp.pop %v1814
    %v1816 = vmul.f32 1.0, %v1815
    %v1817 = vtanh.pop %v1724
    %v1818 = vmul.f32 %v1816, %v1611
    %1820 = vrot.lane.b32.xlu0 %v1817, 64
    %v1821 = vpop.permute.xlu0 %1820
    %v1823 = vmul.f32 %v1816, %v1821
    %1825 = vrot.lane.b32.xlu0 %v1823, 32
    %v1826 = vpop.permute.xlu0 %1825
    %v1828 = vadd.f32 %v1818, %v1826
    %v1829 = vtanh.pop %v1828
    %1831 = vrot.lane.b32.xlu0 %v1829, 64
    %v1832 = vpop.permute.xlu0 %1831
    %v1834 = vmul.f32 %v1816, %v1832
    %v1835 = vxor.u32 %v1810, 2147483648
    %v1836 = vmul.f32 %v1835, 1.442695
    %v1837 = vpow.pop %v1836
    %v1838 = vadd.f32 %v1837, 1.0
    %v1839 = vrcp.pop %v1838
    %v1840 = vmul.f32 1.0, %v1839
    %v1841 = vtanh.pop %v1810
    %v1842 = vmul.f32 %v1840, %v1635
    %1844 = vrot.lane.b32.xlu0 %v1841, 64
    %v1845 = vpop.permute.xlu0 %1844
    %v1847 = vmul.f32 %v1840, %v1845
    %1849 = vrot.lane.b32.xlu0 %v1847, 32
    %v1850 = vpop.permute.xlu0 %1849
    %v1852 = vadd.f32 %v1842, %v1850
    %v1853 = vtanh.pop %v1852
    %1855 = vrot.lane.b32.xlu0 %v1853, 64
    %v1856 = vpop.permute.xlu0 %1855
    %v1858 = vmul.f32 %v1840, %v1856
    %v1861 = vunpack.c.l.s4 1983009808
    %v1862 = vunpack.c.0.s8 %v1861
    %v1863 = vlaneseq
    %v1864 = vshrl.u32 %v1863, 7
    %v1865 = vsub.s32 %v1862, %v1864
    %v1866 = vrot.slane %v1834, %v1865
    %1867 = vrot.lane.b32.xlu0 %v1866, 32
    %v1868 = vpop.permute.xlu0 %1867
    %v1869 = vsel %vm154, %v1868, 0
    %1871 = vmatprep.subr.mxu0 0.0
    %1872 = vmatpush1.msra.mxu0 0.0
    %1873 = vmatprep.subr.mxu0 0.0
    %1874 = vmatpush1.msra.mxu0 0.0
    %1875 = vmatprep.subr.mxu0 0.0
    %1876 = vmatpush1.msra.mxu0 0.0
    %1877 = vmatprep.subr.mxu0 0.0
    %1878 = vmatpush1.msra.mxu0 0.0
    %1879 = vmatprep.subr.mxu0 0.0
    %1880 = vmatpush1.msra.mxu0 0.0
    %1881 = vmatprep.subr.mxu0 0.0
    %1882 = vmatpush1.msra.mxu0 0.0
    %1883 = vmatprep.subr.mxu0 0.0
    %1884 = vmatpush1.msra.mxu0 0.0
    %1885 = vmatprep.subr.mxu0 0.0
    %1886 = vmatpush1.msra.mxu0 0.0
    %1887 = vmatprep.subr.mxu0 0.0
    %1888 = vmatpush1.msra.mxu0 0.0
    %1889 = vmatprep.subr.mxu0 0.0
    %1890 = vmatpush1.msra.mxu0 0.0
    %1891 = vmatprep.subr.mxu0 0.0
    %1892 = vmatpush1.msra.mxu0 0.0
    %1893 = vmatprep.subr.mxu0 0.0
    %1894 = vmatpush1.msra.mxu0 0.0
    %1895 = vmatprep.subr.mxu0 0.0
    %1896 = vmatpush1.msra.mxu0 %v558
    %1897 = vmatprep.subr.mxu0 0.0
    %1898 = vmatpush1.msra.mxu0 %v557
    %1899 = vmatprep.subr.mxu0 0.0
    %1900 = vmatpush1.msra.mxu0 %v556
    %1901 = vmatprep.subr.mxu0 0.0
    %1902 = vmatpush1.msra.mxu0 %v555
    %1903 = vmatprep.subr.mxu0 0.0
    %1904 = vmatpush2.msra.mxu0 0.0
    %1905 = vmatprep.subr.mxu0 0.0
    %1906 = vmatpush2.msra.mxu0 0.0
    %1907 = vmatprep.subr.mxu0 0.0
    %1908 = vmatpush2.msra.mxu0 0.0
    %1909 = vmatprep.subr.mxu0 0.0
    %1910 = vmatpush2.msra.mxu0 0.0
    %1911 = vmatprep.subr.mxu0 0.0
    %1912 = vmatpush2.msra.mxu0 0.0
    %1913 = vmatprep.subr.mxu0 0.0
    %1914 = vmatpush2.msra.mxu0 0.0
    %1915 = vmatprep.subr.mxu0 0.0
    %1916 = vmatpush2.msra.mxu0 0.0
    %1917 = vmatprep.subr.mxu0 0.0
    %1918 = vmatpush2.msra.mxu0 0.0
    %1919 = vmatprep.subr.mxu0 0.0
    %1920 = vmatpush2.msra.mxu0 0.0
    %1921 = vmatprep.subr.mxu0 0.0
    %1922 = vmatpush2.msra.mxu0 0.0
    %1923 = vmatprep.subr.mxu0 0.0
    %1924 = vmatpush2.msra.mxu0 0.0
    %1925 = vmatprep.subr.mxu0 0.0
    %1926 = vmatpush2.msra.mxu0 0.0
    %1927 = vmatprep.subr.mxu0 0.0
    %1928 = vmatpush2.msra.mxu0 0.0
    %1929 = vmatprep.subr.mxu0 0.0
    %1930 = vmatpush2.msra.mxu0 0.0
    %1931 = vmatprep.subr.mxu0 0.0
    %1932 = vmatpush2.msra.mxu0 0.0
    %1933 = vmatprep.subr.mxu0 0.0
    %1934 = vmatpush2.msra.mxu0 0.0
    %1935 = vmatprep.mubr.f32.mxu0 0.0
    %1936 = vmatmul.mubr.f32.gmra.mxu0 %v1869
    %v1937 = vpop.f32.mrf.mxu0
    %v1938 = vadd.f32 0.0, %v1937
    %v1939 = vpop.f32.mrf.mxu0
    %1940 = vdwg.mxu0
    %v1941 = vadd.f32 %v765, %v1938
    %v1944 = vunpack.c.l.s4 1983009808
    %v1945 = vunpack.c.0.s8 %v1944
    %v1946 = vlaneseq
    %v1947 = vshrl.u32 %v1946, 7
    %v1948 = vsub.s32 %v1945, %v1947
    %v1949 = vrot.slane %v1858, %v1948
    %1950 = vrot.lane.b32.xlu0 %v1949, 32
    %v1951 = vpop.permute.xlu0 %1950
    %v1952 = vsel %vm154, %v1951, 0
    %1954 = vmatprep.subr.mxu0 0.0
    %1955 = vmatpush1.msra.mxu0 0.0
    %1956 = vmatprep.subr.mxu0 0.0
    %1957 = vmatpush1.msra.mxu0 0.0
    %1958 = vmatprep.subr.mxu0 0.0
    %1959 = vmatpush1.msra.mxu0 0.0
    %1960 = vmatprep.subr.mxu0 0.0
    %1961 = vmatpush1.msra.mxu0 0.0
    %1962 = vmatprep.subr.mxu0 0.0
    %1963 = vmatpush1.msra.mxu0 0.0
    %1964 = vmatprep.subr.mxu0 0.0
    %1965 = vmatpush1.msra.mxu0 0.0
    %1966 = vmatprep.subr.mxu0 0.0
    %1967 = vmatpush1.msra.mxu0 0.0
    %1968 = vmatprep.subr.mxu0 0.0
    %1969 = vmatpush1.msra.mxu0 0.0
    %1970 = vmatprep.subr.mxu0 0.0
    %1971 = vmatpush1.msra.mxu0 0.0
    %1972 = vmatprep.subr.mxu0 0.0
    %1973 = vmatpush1.msra.mxu0 0.0
    %1974 = vmatprep.subr.mxu0 0.0
    %1975 = vmatpush1.msra.mxu0 0.0
    %1976 = vmatprep.subr.mxu0 0.0
    %1977 = vmatpush1.msra.mxu0 0.0
    %1978 = vmatprep.subr.mxu0 0.0
    %1979 = vmatpush1.msra.mxu0 %v562
    %1980 = vmatprep.subr.mxu0 0.0
    %1981 = vmatpush1.msra.mxu0 %v561
    %1982 = vmatprep.subr.mxu0 0.0
    %1983 = vmatpush1.msra.mxu0 %v560
    %1984 = vmatprep.subr.mxu0 0.0
    %1985 = vmatpush1.msra.mxu0 %v559
    %1986 = vmatprep.subr.mxu0 0.0
    %1987 = vmatpush2.msra.mxu0 0.0
    %1988 = vmatprep.subr.mxu0 0.0
    %1989 = vmatpush2.msra.mxu0 0.0
    %1990 = vmatprep.subr.mxu0 0.0
    %1991 = vmatpush2.msra.mxu0 0.0
    %1992 = vmatprep.subr.mxu0 0.0
    %1993 = vmatpush2.msra.mxu0 0.0
    %1994 = vmatprep.subr.mxu0 0.0
    %1995 = vmatpush2.msra.mxu0 0.0
    %1996 = vmatprep.subr.mxu0 0.0
    %1997 = vmatpush2.msra.mxu0 0.0
    %1998 = vmatprep.subr.mxu0 0.0
    %1999 = vmatpush2.msra.mxu0 0.0
    %2000 = vmatprep.subr.mxu0 0.0
    %2001 = vmatpush2.msra.mxu0 0.0
    %2002 = vmatprep.subr.mxu0 0.0
    %2003 = vmatpush2.msra.mxu0 0.0
    %2004 = vmatprep.subr.mxu0 0.0
    %2005 = vmatpush2.msra.mxu0 0.0
    %2006 = vmatprep.subr.mxu0 0.0
    %2007 = vmatpush2.msra.mxu0 0.0
    %2008 = vmatprep.subr.mxu0 0.0
    %2009 = vmatpush2.msra.mxu0 0.0
    %2010 = vmatprep.subr.mxu0 0.0
    %2011 = vmatpush2.msra.mxu0 0.0
    %2012 = vmatprep.subr.mxu0 0.0
    %2013 = vmatpush2.msra.mxu0 0.0
    %2014 = vmatprep.subr.mxu0 0.0
    %2015 = vmatpush2.msra.mxu0 0.0
    %2016 = vmatprep.subr.mxu0 0.0
    %2017 = vmatpush2.msra.mxu0 0.0
    %2018 = vmatprep.mubr.f32.mxu0 0.0
    %2019 = vmatmul.mubr.f32.gmra.mxu0 %v1952
    %v2020 = vpop.f32.mrf.mxu0
    %v2021 = vadd.f32 0.0, %v2020
    %v2022 = vpop.f32.mrf.mxu0
    %2023 = vdwg.mxu0
    %v2025 = vrot.slane %v763, 2
    %v2027 = vadd.f32 %v2025, %v2021
    %v2028 = vxor.u32 %v1941, 2147483648
    %v2029 = vmul.f32 %v2028, 1.442695
    %v2030 = vpow.pop %v2029
    %v2031 = vadd.f32 %v2030, 1.0
    %v2032 = vrcp.pop %v2031
    %v2033 = vmul.f32 1.0, %v2032
    %v2034 = vtanh.pop %v1941
    %v2035 = vmul.f32 %v2033, %v1828
    %2037 = vrot.lane.b32.xlu0 %v2034, 64
    %v2038 = vpop.permute.xlu0 %2037
    %v2040 = vmul.f32 %v2033, %v2038
    %2042 = vrot.lane.b32.xlu0 %v2040, 32
    %v2043 = vpop.permute.xlu0 %2042
    %v2045 = vadd.f32 %v2035, %v2043
    %v2046 = vtanh.pop %v2045
    %2048 = vrot.lane.b32.xlu0 %v2046, 64
    %v2049 = vpop.permute.xlu0 %2048
    %v2051 = vmul.f32 %v2033, %v2049
    %v2052 = vxor.u32 %v2027, 2147483648
    %v2053 = vmul.f32 %v2052, 1.442695
    %v2054 = vpow.pop %v2053
    %v2055 = vadd.f32 %v2054, 1.0
    %v2056 = vrcp.pop %v2055
    %v2057 = vmul.f32 1.0, %v2056
    %v2058 = vtanh.pop %v2027
    %v2059 = vmul.f32 %v2057, %v1852
    %2061 = vrot.lane.b32.xlu0 %v2058, 64
    %v2062 = vpop.permute.xlu0 %2061
    %v2064 = vmul.f32 %v2057, %v2062
    %2066 = vrot.lane.b32.xlu0 %v2064, 32
    %v2067 = vpop.permute.xlu0 %2066
    %v2069 = vadd.f32 %v2059, %v2067
    %v2070 = vtanh.pop %v2069
    %2072 = vrot.lane.b32.xlu0 %v2070, 64
    %v2073 = vpop.permute.xlu0 %2072
    %v2075 = vmul.f32 %v2057, %v2073
    %v2078 = vunpack.c.l.s4 1983009808
    %v2079 = vunpack.c.0.s8 %v2078
    %v2080 = vlaneseq
    %v2081 = vshrl.u32 %v2080, 7
    %v2082 = vsub.s32 %v2079, %v2081
    %v2083 = vrot.slane %v2051, %v2082
    %2084 = vrot.lane.b32.xlu0 %v2083, 32
    %v2085 = vpop.permute.xlu0 %2084
    %v2086 = vsel %vm154, %v2085, 0
    %2088 = vmatprep.subr.mxu0 0.0
    %2089 = vmatpush1.msra.mxu0 0.0
    %2090 = vmatprep.subr.mxu0 0.0
    %2091 = vmatpush1.msra.mxu0 0.0
    %2092 = vmatprep.subr.mxu0 0.0
    %2093 = vmatpush1.msra.mxu0 0.0
    %2094 = vmatprep.subr.mxu0 0.0
    %2095 = vmatpush1.msra.mxu0 0.0
    %2096 = vmatprep.subr.mxu0 0.0
    %2097 = vmatpush1.msra.mxu0 0.0
    %2098 = vmatprep.subr.mxu0 0.0
    %2099 = vmatpush1.msra.mxu0 0.0
    %2100 = vmatprep.subr.mxu0 0.0
    %2101 = vmatpush1.msra.mxu0 0.0
    %2102 = vmatprep.subr.mxu0 0.0
    %2103 = vmatpush1.msra.mxu0 0.0
    %2104 = vmatprep.subr.mxu0 0.0
    %2105 = vmatpush1.msra.mxu0 0.0
    %2106 = vmatprep.subr.mxu0 0.0
    %2107 = vmatpush1.msra.mxu0 0.0
    %2108 = vmatprep.subr.mxu0 0.0
    %2109 = vmatpush1.msra.mxu0 0.0
    %2110 = vmatprep.subr.mxu0 0.0
    %2111 = vmatpush1.msra.mxu0 0.0
    %2112 = vmatprep.subr.mxu0 0.0
    %2113 = vmatpush1.msra.mxu0 %v558
    %2114 = vmatprep.subr.mxu0 0.0
    %2115 = vmatpush1.msra.mxu0 %v557
    %2116 = vmatprep.subr.mxu0 0.0
    %2117 = vmatpush1.msra.mxu0 %v556
    %2118 = vmatprep.subr.mxu0 0.0
    %2119 = vmatpush1.msra.mxu0 %v555
    %2120 = vmatprep.subr.mxu0 0.0
    %2121 = vmatpush2.msra.mxu0 0.0
    %2122 = vmatprep.subr.mxu0 0.0
    %2123 = vmatpush2.msra.mxu0 0.0
    %2124 = vmatprep.subr.mxu0 0.0
    %2125 = vmatpush2.msra.mxu0 0.0
    %2126 = vmatprep.subr.mxu0 0.0
    %2127 = vmatpush2.msra.mxu0 0.0
    %2128 = vmatprep.subr.mxu0 0.0
    %2129 = vmatpush2.msra.mxu0 0.0
    %2130 = vmatprep.subr.mxu0 0.0
    %2131 = vmatpush2.msra.mxu0 0.0
    %2132 = vmatprep.subr.mxu0 0.0
    %2133 = vmatpush2.msra.mxu0 0.0
    %2134 = vmatprep.subr.mxu0 0.0
    %2135 = vmatpush2.msra.mxu0 0.0
    %2136 = vmatprep.subr.mxu0 0.0
    %2137 = vmatpush2.msra.mxu0 0.0
    %2138 = vmatprep.subr.mxu0 0.0
    %2139 = vmatpush2.msra.mxu0 0.0
    %2140 = vmatprep.subr.mxu0 0.0
    %2141 = vmatpush2.msra.mxu0 0.0
    %2142 = vmatprep.subr.mxu0 0.0
    %2143 = vmatpush2.msra.mxu0 0.0
    %2144 = vmatprep.subr.mxu0 0.0
    %2145 = vmatpush2.msra.mxu0 0.0
    %2146 = vmatprep.subr.mxu0 0.0
    %2147 = vmatpush2.msra.mxu0 0.0
    %2148 = vmatprep.subr.mxu0 0.0
    %2149 = vmatpush2.msra.mxu0 0.0
    %2150 = vmatprep.subr.mxu0 0.0
    %2151 = vmatpush2.msra.mxu0 0.0
    %2152 = vmatprep.mubr.f32.mxu0 0.0
    %2153 = vmatmul.mubr.f32.gmra.mxu0 %v2086
    %v2154 = vpop.f32.mrf.mxu0
    %v2155 = vadd.f32 0.0, %v2154
    %v2156 = vpop.f32.mrf.mxu0
    %2157 = vdwg.mxu0
    %v2158 = vadd.f32 %v565, %v2155
    %v2161 = vunpack.c.l.s4 1983009808
    %v2162 = vunpack.c.0.s8 %v2161
    %v2163 = vlaneseq
    %v2164 = vshrl.u32 %v2163, 7
    %v2165 = vsub.s32 %v2162, %v2164
    %v2166 = vrot.slane %v2075, %v2165
    %2167 = vrot.lane.b32.xlu0 %v2166, 32
    %v2168 = vpop.permute.xlu0 %2167
    %v2169 = vsel %vm154, %v2168, 0
    %2171 = vmatprep.subr.mxu0 0.0
    %2172 = vmatpush1.msra.mxu0 0.0
    %2173 = vmatprep.subr.mxu0 0.0
    %2174 = vmatpush1.msra.mxu0 0.0
    %2175 = vmatprep.subr.mxu0 0.0
    %2176 = vmatpush1.msra.mxu0 0.0
    %2177 = vmatprep.subr.mxu0 0.0
    %2178 = vmatpush1.msra.mxu0 0.0
    %2179 = vmatprep.subr.mxu0 0.0
    %2180 = vmatpush1.msra.mxu0 0.0
    %2181 = vmatprep.subr.mxu0 0.0
    %2182 = vmatpush1.msra.mxu0 0.0
    %2183 = vmatprep.subr.mxu0 0.0
    %2184 = vmatpush1.msra.mxu0 0.0
    %2185 = vmatprep.subr.mxu0 0.0
    %2186 = vmatpush1.msra.mxu0 0.0
    %2187 = vmatprep.subr.mxu0 0.0
    %2188 = vmatpush1.msra.mxu0 0.0
    %2189 = vmatprep.subr.mxu0 0.0
    %2190 = vmatpush1.msra.mxu0 0.0
    %2191 = vmatprep.subr.mxu0 0.0
    %2192 = vmatpush1.msra.mxu0 0.0
    %2193 = vmatprep.subr.mxu0 0.0
    %2194 = vmatpush1.msra.mxu0 0.0
    %2195 = vmatprep.subr.mxu0 0.0
    %2196 = vmatpush1.msra.mxu0 %v562
    %2197 = vmatprep.subr.mxu0 0.0
    %2198 = vmatpush1.msra.mxu0 %v561
    %2199 = vmatprep.subr.mxu0 0.0
    %2200 = vmatpush1.msra.mxu0 %v560
    %2201 = vmatprep.subr.mxu0 0.0
    %2202 = vmatpush1.msra.mxu0 %v559
    %2203 = vmatprep.subr.mxu0 0.0
    %2204 = vmatpush2.msra.mxu0 0.0
    %2205 = vmatprep.subr.mxu0 0.0
    %2206 = vmatpush2.msra.mxu0 0.0
    %2207 = vmatprep.subr.mxu0 0.0
    %2208 = vmatpush2.msra.mxu0 0.0
    %2209 = vmatprep.subr.mxu0 0.0
    %2210 = vmatpush2.msra.mxu0 0.0
    %2211 = vmatprep.subr.mxu0 0.0
    %2212 = vmatpush2.msra.mxu0 0.0
    %2213 = vmatprep.subr.mxu0 0.0
    %2214 = vmatpush2.msra.mxu0 0.0
    %2215 = vmatprep.subr.mxu0 0.0
    %2216 = vmatpush2.msra.mxu0 0.0
    %2217 = vmatprep.subr.mxu0 0.0
    %2218 = vmatpush2.msra.mxu0 0.0
    %2219 = vmatprep.subr.mxu0 0.0
    %2220 = vmatpush2.msra.mxu0 0.0
    %2221 = vmatprep.subr.mxu0 0.0
    %2222 = vmatpush2.msra.mxu0 0.0
    %2223 = vmatprep.subr.mxu0 0.0
    %2224 = vmatpush2.msra.mxu0 0.0
    %2225 = vmatprep.subr.mxu0 0.0
    %2226 = vmatpush2.msra.mxu0 0.0
    %2227 = vmatprep.subr.mxu0 0.0
    %2228 = vmatpush2.msra.mxu0 0.0
    %2229 = vmatprep.subr.mxu0 0.0
    %2230 = vmatpush2.msra.mxu0 0.0
    %2231 = vmatprep.subr.mxu0 0.0
    %2232 = vmatpush2.msra.mxu0 0.0
    %2233 = vmatprep.subr.mxu0 0.0
    %2234 = vmatpush2.msra.mxu0 0.0
    %2235 = vmatprep.mubr.f32.mxu0 0.0
    %2236 = vmatmul.mubr.f32.gmra.mxu0 %v2169
    %v2237 = vpop.f32.mrf.mxu0
    %v2238 = vadd.f32 0.0, %v2237
    %v2239 = vpop.f32.mrf.mxu0
    %2240 = vdwg.mxu0
    %v2242 = vrot.slane %v563, 2
    %v2244 = vadd.f32 %v2242, %v2238
    %v2245 = vxor.u32 %v2158, 2147483648
    %v2246 = vmul.f32 %v2245, 1.442695
    %v2247 = vpow.pop %v2246
    %v2248 = vadd.f32 %v2247, 1.0
    %v2249 = vrcp.pop %v2248
    %v2250 = vmul.f32 1.0, %v2249
    %v2251 = vtanh.pop %v2158
    %v2252 = vmul.f32 %v2250, %v2045
    %2254 = vrot.lane.b32.xlu0 %v2251, 64
    %v2255 = vpop.permute.xlu0 %2254
    %v2257 = vmul.f32 %v2250, %v2255
    %2259 = vrot.lane.b32.xlu0 %v2257, 32
    %v2260 = vpop.permute.xlu0 %2259
    %v2262 = vadd.f32 %v2252, %v2260
    %v2263 = vxor.u32 %v2244, 2147483648
    %v2264 = vmul.f32 %v2263, 1.442695
    %v2265 = vpow.pop %v2264
    %v2266 = vadd.f32 %v2265, 1.0
    %v2267 = vrcp.pop %v2266
    %v2268 = vmul.f32 1.0, %v2267
    %v2269 = vtanh.pop %v2244
    %v2270 = vmul.f32 %v2268, %v2069
    %2272 = vrot.lane.b32.xlu0 %v2269, 64
    %v2273 = vpop.permute.xlu0 %2272
    %v2275 = vmul.f32 %v2268, %v2273
    %2277 = vrot.lane.b32.xlu0 %v2275, 32
    %v2278 = vpop.permute.xlu0 %2277
    %v2280 = vadd.f32 %v2270, %v2278
    %v2283 = vunpack.c.l.s4 1983009808
    %v2284 = vunpack.c.0.s8 %v2283
    %v2285 = vlaneseq
    %v2286 = vshrl.u32 %v2285, 7
    %v2287 = vsub.s32 %v2284, %v2286
    %v2288 = vrot.slane %v2262, %v2287
    %2289 = vrot.lane.b32.xlu0 %v2288, 96
    %v2290 = vpop.permute.xlu0 %2289
    %v2292 = vsel %vm154, %v2290, %v2280
    %s2293 = sld [smem:[#allocation15]]
    %v2294 = vstv %s2293
    %v2295 = vmul.f32 %v228, %v2294
    %s2296 = sld [smem:[#allocation15 + $0x1]]
    %v2297 = vstv %s2296
    %v2298 = vmul.f32 %v2292, %v2297
    %v2299 = vadd.f32 %v2295, %v2298
    %v2300 = vld [vmem:[#allocation16] sm:$0xff]
    %v2301 = vld [vmem:[#allocation16 + $0x8] sm:$0xff]
    %v2302 = vmul.f32 %v2299, %v2299
    %vm2303 = vcmask 254976
    %v2304 = vsel %vm2303, %v2302, 0.0
    %2305 = vadd.xlane.f32.xlu0 %v2304
    %v2306 = vpop.xlane.xlu0 %2305
    %v2307 = vrsqrt.pop %v2306
    %v2308 = vmul.f32 %v2306, %v2307
    %vm2309 = vcmp.eq.f32.partialorder %v2306, inf
    %v2310 = vsel %vm2309, %v2306, %v2308
    %vm2311 = vcmp.eq.f32.partialorder %v2306, 0.0
    %v2312 = vand.u32 %v2306, 2147483648
    %v2313 = vsel %vm2311, %v2312, %v2310
    %v2314 = vadd.f32 %v2313, 1e-08
    %v2315 = vrcp.pop %v2314
    %v2316 = vmul.f32 %v2299, %v2315
    %2318 = vrot.lane.b32.xlu0 %v2302, 96
    %v2319 = vpop.permute.xlu0 %2318
    %v2321 = vsel %vm2303, %v2319, 0.0
    %2322 = vadd.xlane.f32.xlu0 %v2321
    %v2323 = vpop.xlane.xlu0 %2322
    %v2324 = vrsqrt.pop %v2323
    %v2325 = vmul.f32 %v2323, %v2324
    %vm2326 = vcmp.eq.f32.partialorder %v2323, inf
    %v2327 = vsel %vm2326, %v2323, %v2325
    %vm2328 = vcmp.eq.f32.partialorder %v2323, 0.0
    %v2329 = vand.u32 %v2323, 2147483648
    %v2330 = vsel %vm2328, %v2329, %v2327
    %v2331 = vadd.f32 %v2330, 1e-08
    %v2332 = vrcp.pop %v2331
    %v2333 = vmul.f32 %v2299, %v2332
    %v2334 = vsel %vm154, %v2316, %v2333
    %v2335 = vmul.f32 %v2334, 8.0
    %v2336 = vmul.f32 %v2300, %v2300
    %v2337 = vmul.f32 %v2301, %v2301
    %v2338 = vsel %vm154, %v2336, 0.0
    %2339 = vadd.xlane.f32.xlu0 %v2338
    %v2340 = vpop.xlane.xlu0 %2339
    %v2341 = vsel %vm154, %v2337, 0.0
    %2342 = vadd.xlane.f32.xlu0 %v2341
    %v2343 = vpop.xlane.xlu0 %2342
    %v2344 = vrsqrt.pop %v2340
    %v2345 = vmul.f32 %v2340, %v2344
    %vm2346 = vcmp.eq.f32.partialorder %v2340, inf
    %v2347 = vsel %vm2346, %v2340, %v2345
    %vm2348 = vcmp.eq.f32.partialorder %v2340, 0.0
    %v2349 = vand.u32 %v2340, 2147483648
    %v2350 = vsel %vm2348, %v2349, %v2347
    %v2351 = vrsqrt.pop %v2343
    %v2352 = vmul.f32 %v2343, %v2351
    %vm2353 = vcmp.eq.f32.partialorder %v2343, inf
    %v2354 = vsel %vm2353, %v2343, %v2352
    %vm2355 = vcmp.eq.f32.partialorder %v2343, 0.0
    %v2356 = vand.u32 %v2343, 2147483648
    %v2357 = vsel %vm2355, %v2356, %v2354
    %v2358 = vadd.f32 %v2350, 0.03125
    %v2359 = vadd.f32 %v2357, 0.03125
    %v2360 = vrcp.pop %v2358
    %v2361 = vmul.f32 %v2300, %v2360
    %v2362 = vrcp.pop %v2359
    %v2363 = vmul.f32 %v2301, %v2362
    %2366 = vrot.lane.b32.xlu0 %v2336, 96
    %v2367 = vpop.permute.xlu0 %2366
    %2368 = vrot.lane.b32.xlu0 %v2337, 96
    %v2369 = vpop.permute.xlu0 %2368
    %v2372 = vsel %vm154, %v2367, 0.0
    %2373 = vadd.xlane.f32.xlu0 %v2372
    %v2374 = vpop.xlane.xlu0 %2373
    %v2375 = vsel %vm154, %v2369, 0.0
    %2376 = vadd.xlane.f32.xlu0 %v2375
    %v2377 = vpop.xlane.xlu0 %2376
    %v2378 = vrsqrt.pop %v2374
    %v2379 = vmul.f32 %v2374, %v2378
    %vm2380 = vcmp.eq.f32.partialorder %v2374, inf
    %v2381 = vsel %vm2380, %v2374, %v2379
    %vm2382 = vcmp.eq.f32.partialorder %v2374, 0.0
    %v2383 = vand.u32 %v2374, 2147483648
    %v2384 = vsel %vm2382, %v2383, %v2381
    %v2385 = vrsqrt.pop %v2377
    %v2386 = vmul.f32 %v2377, %v2385
    %vm2387 = vcmp.eq.f32.partialorder %v2377, inf
    %v2388 = vsel %vm2387, %v2377, %v2386
    %vm2389 = vcmp.eq.f32.partialorder %v2377, 0.0
    %v2390 = vand.u32 %v2377, 2147483648
    %v2391 = vsel %vm2389, %v2390, %v2388
    %v2392 = vadd.f32 %v2384, 0.03125
    %v2393 = vadd.f32 %v2391, 0.03125
    %v2394 = vrcp.pop %v2392
    %v2395 = vmul.f32 %v2300, %v2394
    %v2396 = vrcp.pop %v2393
    %v2397 = vmul.f32 %v2301, %v2396
    %v2398 = vsel %vm154, %v2361, %v2395
    %v2399 = vsel %vm154, %v2363, %v2397
    %vm2400 = vcmask 523264
    %v2402 = vsel %vm2400, %v2335, 0
    %v2405 = vsel %vm2400, %v2398, 0
    %v2408 = vsel %vm2400, %v2399, 0
    %2410 = vmatprep.subr.mxu0 0.0
    %2411 = vmatpush1.xpose.msra.mxu0 0.0
    %2412 = vmatprep.subr.mxu0 0.0
    %2413 = vmatpush1.xpose.msra.mxu0 0.0
    %2414 = vmatprep.subr.mxu0 0.0
    %2415 = vmatpush1.xpose.msra.mxu0 0.0
    %2416 = vmatprep.subr.mxu0 0.0
    %2417 = vmatpush1.xpose.msra.mxu0 0.0
    %2418 = vmatprep.subr.mxu0 0.0
    %2419 = vmatpush1.xpose.msra.mxu0 0.0
    %2420 = vmatprep.subr.mxu0 0.0
    %2421 = vmatpush1.xpose.msra.mxu0 0.0
    %2422 = vmatprep.subr.mxu0 0.0
    %2423 = vmatpush1.xpose.msra.mxu0 0.0
    %2424 = vmatprep.subr.mxu0 0.0
    %2425 = vmatpush1.xpose.msra.mxu0 0.0
    %2426 = vmatprep.subr.mxu0 0.0
    %2427 = vmatpush1.xpose.msra.mxu0 0.0
    %2428 = vmatprep.subr.mxu0 0.0
    %2429 = vmatpush1.xpose.msra.mxu0 0.0
    %2430 = vmatprep.subr.mxu0 0.0
    %2431 = vmatpush1.xpose.msra.mxu0 0.0
    %2432 = vmatprep.subr.mxu0 0.0
    %2433 = vmatpush1.xpose.msra.mxu0 0.0
    %2434 = vmatprep.subr.mxu0 0.0
    %2435 = vmatpush1.xpose.msra.mxu0 0.0
    %2436 = vmatprep.subr.mxu0 0.0
    %2437 = vmatpush1.xpose.msra.mxu0 0.0
    %2438 = vmatprep.subr.mxu0 0.0
    %2439 = vmatpush1.xpose.msra.mxu0 %v2408
    %2440 = vmatprep.subr.mxu0 0.0
    %2441 = vmatpush1.xpose.msra.mxu0 %v2405
    %2442 = vmatprep.subr.mxu0 0.0
    %2443 = vmatpush2.xpose.msra.mxu0 0.0
    %2444 = vmatprep.subr.mxu0 0.0
    %2445 = vmatpush2.xpose.msra.mxu0 0.0
    %2446 = vmatprep.subr.mxu0 0.0
    %2447 = vmatpush2.xpose.msra.mxu0 0.0
    %2448 = vmatprep.subr.mxu0 0.0
    %2449 = vmatpush2.xpose.msra.mxu0 0.0
    %2450 = vmatprep.subr.mxu0 0.0
    %2451 = vmatpush2.xpose.msra.mxu0 0.0
    %2452 = vmatprep.subr.mxu0 0.0
    %2453 = vmatpush2.xpose.msra.mxu0 0.0
    %2454 = vmatprep.subr.mxu0 0.0
    %2455 = vmatpush2.xpose.msra.mxu0 0.0
    %2456 = vmatprep.subr.mxu0 0.0
    %2457 = vmatpush2.xpose.msra.mxu0 0.0
    %2458 = vmatprep.subr.mxu0 0.0
    %2459 = vmatpush2.xpose.msra.mxu0 0.0
    %2460 = vmatprep.subr.mxu0 0.0
    %2461 = vmatpush2.xpose.msra.mxu0 0.0
    %2462 = vmatprep.subr.mxu0 0.0
    %2463 = vmatpush2.xpose.msra.mxu0 0.0
    %2464 = vmatprep.subr.mxu0 0.0
    %2465 = vmatpush2.xpose.msra.mxu0 0.0
    %2466 = vmatprep.subr.mxu0 0.0
    %2467 = vmatpush2.xpose.msra.mxu0 0.0
    %2468 = vmatprep.subr.mxu0 0.0
    %2469 = vmatpush2.xpose.msra.mxu0 0.0
    %2470 = vmatprep.subr.mxu0 0.0
    %2471 = vmatpush2.xpose.msra.mxu0 0.0
    %2472 = vmatprep.subr.mxu0 0.0
    %2473 = vmatpush2.xpose.msra.mxu0 0.0
    %2474 = vmatprep.mubr.f32.mxu0 0.0
    %2475 = vmatmul.mubr.f32.gmra.mxu0 %v2402
    %v2476 = vpop.f32.mrf.mxu0
    %v2477 = vadd.f32 0.0, %v2476
    %v2478 = vpop.f32.mrf.mxu0
    %2479 = vdwg.mxu0
    %vm2480 = vcmask 123904
    %2481 = vst.msk [vmem:[#allocation17] sm:$0x3] %vm2480, %v2477
    // Predicated region
    $region74: #{servenet_forward.1} parent=1 // pred_check
      _
    $region75: #{servenet_forward.1} parent=1 // pred_check_branch
      %2483 = sbr.rel (0) target = $region77
    $region76: #{servenet_forward.1} parent=1 // pred_region
      %s2485 = ssub.s32 32, 32
      %2486 = vsyncadd [#allocation5], %s2485
      %s2488 = sshll.u32 [#allocation17], 4
      %s2489 = int_to_ptr.vmem [resolvable:$true] %s2488
      %2491 = dma.vmem_to_hbm [thread:$0]  %s2489, 32, %s10, [#allocation5]
    $region77: #{servenet_forward.1} parent=1 // pred_fallthru
      _
    // Predicated region
    $region78: #{servenet_forward.1} parent=1 // pred_check
      _
    $region79: #{servenet_forward.1} parent=1 // pred_check_branch
      %2493 = sbr.rel (0) target = $region81
    $region80: #{servenet_forward.1} parent=1 // pred_region
      %2494 = dma.done [#allocation5], 32
    $region81: #{servenet_forward.1} parent=1 // pred_fallthru
      _
    %2495 = vsyncpa [#allocation4], 1
    %2496 = vsyncpa [#allocation8], 1
    %2497 = vsyncpa [#allocation11], 1
    %2498 = vsyncpa [#allocation14], 1
    %2499 = vsyncpa [#allocation5], 1
    %2500 = vsyncpa [#allocation6], 1

</llo_original>
